<compile_context>
chip_gen: v6e
topology: v6e:2x2x1
jax: 0.10.0
libtpu: 0.0.40
codegen_flags: <defaults>
</compile_context>

<pallas_src>
import functools

import jax
import jax.numpy as jnp
from jax.experimental import pallas as pl
from jax.experimental.pallas import tpu as pltpu


def _round_up(v, m):
    return (v + m - 1) // m * m


def _layernorm(v, gamma, beta, eps):
    mu = jnp.mean(v, axis=-1, keepdims=True)
    c = v - mu
    var = jnp.mean(c * c, axis=-1, keepdims=True)
    return c * jax.lax.rsqrt(var + eps) * gamma + beta


def _erf(z):
    # Abramowitz & Stegun 7.1.26, |abs err| <= 1.5e-7; uses only exp / mul /
    # add / div / where, all of which lower on Mosaic (lax.erf parity without
    # relying on an erf lowering rule).
    a1, a2, a3, a4, a5 = (0.254829592, -0.284496736, 1.421413741,
                          -1.453152027, 1.061405429)
    p = 0.3275911
    az = jnp.abs(z)
    t = 1.0 / (1.0 + p * az)
    poly = ((((a5 * t + a4) * t + a3) * t + a2) * t + a1) * t
    e = 1.0 - poly * jnp.exp(-az * az)
    return jnp.where(z < 0.0, -e, e)


def _gelu_exact(v):
    # Matches PyTorch nn.GELU() (exact erf form) to ~1e-7.
    return 0.5 * v * (1.0 + _erf(v * 0.7071067811865476))


def _ffn_multiln_kernel(x_ref, w1_ref, w2_ref, vp_ref, b2_ref, o_ref, pad_ref,
                        *, H, W, K, eps, P):
    """One batch image per grid step (channels-last everywhere).

    x_ref  : (1, H*W, Cin) f32   tokens for this image
    w1_ref : (Cin, C)      bf16  fc1 weight (math orientation)
    w2_ref : (C, Cin)      bf16  fc2 weight
    vp_ref : (K*K + 8, C)  f32   packed per-channel vectors:
             rows [0, K*K)      depthwise taps (row kh*K+kw)
             row  K*K+0 / +1    fc1 bias / conv bias
             rows K*K+2 .. +7   ln1 g,b  ln2 g,b  ln3 g,b
    b2_ref : (1, Cin)      f32   fc2 bias
    o_ref  : (1, H*W, Cin)       output tokens
    pad_ref: (2*P + H*W, C) f32  staging buffer holding h at 8-aligned offset
             P.  Halo rows are NEVER initialised: every tap read that can fall
             outside [P, P+N) is masked, so stale contents are never observed.
    """
    N = H * W
    KK = K * K
    half = K // 2

    def vrow(i):
        return vp_ref[KK + i:KK + i + 1, :]

    b1, cb = vrow(0), vrow(1)
    g1, be1, g2, be2, g3, be3 = (vrow(2), vrow(3), vrow(4), vrow(5),
                                 vrow(6), vrow(7))

    # ---- fc1 (MXU, bf16 inputs, f32 accumulate); h stays resident as the
    #      residual for the three LayerNorms ----
    h = jnp.dot(x_ref[0].astype(jnp.bfloat16), w1_ref[...],
                preferred_element_type=jnp.float32) + b1            # (N, C) f32

    # ---- depthwise KxK conv, NHWC; interior store is 8-aligned ----
    pad_ref[P:P + N, :] = h

    pos = jax.lax.broadcasted_iota(jnp.int32, (N, 1), 0)
    col = pos % W
    col_mask, row_mask = {}, {}
    for d in range(1, half + 1):
        col_mask[-d] = col >= d
        col_mask[d] = col < W - d
        row_mask[-d] = pos >= d * W
        row_mask[d] = pos < N - d * W

    # Centre tap reads the live value of h (no buffer load); conv bias seeds
    # the accumulator.
    c_idx = half * K + half
    acc = h * vp_ref[c_idx:c_idx + 1, :] + cb

    for kh in range(K):
        for kw in range(K):
            dh, dw = kh - half, kw - half
            if dh == 0 and dw == 0:
                continue
            start = P + dh * W + dw                                  # static
            t_idx = kh * K + kw
            contrib = pad_ref[start:start + N, :] * vp_ref[t_idx:t_idx + 1, :]
            m = row_mask[dh] if dh != 0 else None
            if dw != 0:
                m = col_mask[dw] if m is None else jnp.logical_and(m, col_mask[dw])
            acc = acc + jnp.where(m, contrib, 0.0)
    conv = acc

    # ---- residual + 3x LayerNorm + exact GELU (VPU/XLU/EUP) ----
    t = _layernorm(conv + h, g1, be1, eps)
    t = _layernorm(t + h, g2, be2, eps)
    t = _layernorm(t + h, g3, be3, eps)
    t = _gelu_exact(t)

    # ---- fc2 (MXU, bf16 inputs, f32 accumulate) ----
    out = jnp.dot(t.astype(jnp.bfloat16), w2_ref[...],
                  preferred_element_type=jnp.float32) + b2_ref[...]
    o_ref[0] = out.astype(o_ref.dtype)


def ffn_multiln(x, fc1_w, fc1_b, dw_w, dw_b,
                ln1_g, ln1_b, ln2_g, ln2_b, ln3_g, ln3_b,
                fc2_w, fc2_b, *, img_size, eps=1e-6, stride=1, padding=None):
    """x: (B, N, Cin) tokens with N == img_size**2.  Params in PyTorch layouts."""
    B, N, Cin = x.shape
    H = W = img_size
    assert N == H * W
    Ce = fc1_w.shape[0]
    K = dw_w.shape[-1]
    assert dw_w.shape == (Ce, 1, K, K), "depthwise conv expects groups == channels"
    if padding is None:
        padding = K // 2
    # Only the module's defaults are implemented; fail loudly otherwise.
    assert stride == 1 and padding == K // 2, "only stride=1 / padding=K//2 supported"

    f32, bf16 = jnp.float32, jnp.bfloat16
    w1 = fc1_w.T.astype(bf16)                               # (Cin, Ce)
    w2 = fc2_w.T.astype(bf16)                               # (Ce, Cin)
    vecs = jnp.concatenate(
        [dw_w.reshape(Ce, K * K).T.astype(f32)] +           # (K*K, Ce) taps
        [v.reshape(1, Ce).astype(f32) for v in
         (fc1_b, dw_b, ln1_g, ln1_b, ln2_g, ln2_b, ln3_g, ln3_b)],
        axis=0)                                             # (K*K + 8, Ce)
    b2 = fc2_b.reshape(1, Cin).astype(f32)

    P = _round_up((K // 2) * (W + 1), 8)                    # 8-aligned interior offset
    pad_rows = 2 * P + N

    kernel = functools.partial(_ffn_multiln_kernel, H=H, W=W, K=K, eps=eps, P=P)

    def full_block(p):
        return pl.BlockSpec(p.shape, lambda b: (0, 0))

    return pl.pallas_call(
        kernel,
        out_shape=jax.ShapeDtypeStruct((B, N, Cin), x.dtype),
        grid=(B,),
        in_specs=[pl.BlockSpec((1, N, Cin), lambda b: (b, 0, 0)),
                  full_block(w1), full_block(w2), full_block(vecs),
                  full_block(b2)],
        out_specs=pl.BlockSpec((1, N, Cin), lambda b: (b, 0, 0)),
        scratch_shapes=[pltpu.VMEM((pad_rows, Ce), jnp.float32)],
        compiler_params=pltpu.CompilerParams(
            dimension_semantics=("parallel",)),
    )(x, w1, w2, vecs, b2)


if __name__ == "__main__":
    # Small shapes consistent with FFN_MultiLN(in_channels=4, img_size=16, R=4).
    B, Cin, img_size, R, K = 2, 4, 16, 4, 3
    Ce = Cin * R
    N = img_size * img_size

    key = jax.random.PRNGKey(0)
    ks = jax.random.split(key, 7)

    x = jax.random.normal(ks[0], (B, N, Cin), dtype=jnp.float32)

    def uinit(k, shape, fan_in):
        bound = 1.0 / (fan_in ** 0.5)
        return jax.random.uniform(k, shape, jnp.float32, -bound, bound)

    fc1_w = uinit(ks[1], (Ce, Cin), Cin)
    fc1_b = uinit(ks[2], (Ce,), Cin)
    dw_w = uinit(ks[3], (Ce, 1, K, K), K * K)
    dw_b = uinit(ks[4], (Ce,), K * K)
    ln1_g = jnp.ones((Ce,), jnp.float32); ln1_b = jnp.zeros((Ce,), jnp.float32)
    ln2_g = jnp.ones((Ce,), jnp.float32); ln2_b = jnp.zeros((Ce,), jnp.float32)
    ln3_g = jnp.ones((Ce,), jnp.float32); ln3_b = jnp.zeros((Ce,), jnp.float32)
    fc2_w = uinit(ks[5], (Cin, Ce), Ce)
    fc2_b = uinit(ks[6], (Cin,), Ce)

    out = ffn_multiln(x, fc1_w, fc1_b, dw_w, dw_b,
                      ln1_g, ln1_b, ln2_g, ln2_b, ln3_g, ln3_b,
                      fc2_w, fc2_b, img_size=img_size)
    out = jax.block_until_ready(out)
    assert out.shape == (B, N, Cin)

    # Pure-JAX reference.  Matmul inputs are rounded to bf16 to mirror the
    # kernel's MXU feeding (accumulation stays f32); LN / conv / GELU are f32
    # with the exact-erf GELU (PyTorch nn.GELU default).
    def reference():
        rb = lambda a: a.astype(jnp.bfloat16).astype(jnp.float32)
        h = rb(x) @ rb(fc1_w.T) + fc1_b
        img = h.reshape(B, img_size, img_size, Ce).transpose(0, 3, 1, 2)
        conv = jax.lax.conv_general_dilated(
            img, dw_w, (1, 1), ((1, 1), (1, 1)),
            dimension_numbers=("NCHW", "OIHW", "NCHW"),
            feature_group_count=Ce) + dw_b[None, :, None, None]
        conv = conv.reshape(B, Ce, N).transpose(0, 2, 1)

        def ln(v, g, b):
            mu = v.mean(-1, keepdims=True)
            var = ((v - mu) ** 2).mean(-1, keepdims=True)
            return (v - mu) / jnp.sqrt(var + 1e-6) * g + b

        t = ln(conv + h, ln1_g, ln1_b)
        t = ln(t + h, ln2_g, ln2_b)
        t = ln(t + h, ln3_g, ln3_b)
        t = jax.nn.gelu(t, approximate=False)
        return rb(t) @ rb(fc2_w.T) + fc2_b

    ref = jax.block_until_ready(reference())
    assert jnp.allclose(out, ref, atol=2e-2, rtol=2e-2), "mismatch vs reference"

    print("KERNEL_OK")
</pallas_src>

<mosaic_0001>
module attributes {stable_mosaic.version = 11 : i64} {
  func.func @_ffn_multiln_kernel(%arg0: i32, %arg1: memref<1x256x4xf32, #tpu.memory_space<vmem>>, %arg2: memref<4x16xbf16, #tpu.memory_space<vmem>>, %arg3: memref<16x4xbf16, #tpu.memory_space<vmem>>, %arg4: memref<17x16xf32, #tpu.memory_space<vmem>>, %arg5: memref<1x4xf32, #tpu.memory_space<vmem>>, %arg6: memref<1x256x4xf32, #tpu.memory_space<vmem>>, %arg7: memref<304x16xf32, #tpu.memory_space<vmem>>) attributes {dimension_semantics = [#tpu.dimension_semantics<parallel>], iteration_bounds = array<i64: 2>, scalar_prefetch = 0 : i64, scratch_operands = 1 : i64, tpu.core_type = #tpu.core_type<tc>, window_params = [{transform_indices = @transform_0, window_bounds = array<i64: 1, 256, 4>}, {pipeline_mode = #tpu.pipeline_mode<synchronous>, transform_indices = @transform_1, window_bounds = array<i64: 4, 16>}, {pipeline_mode = #tpu.pipeline_mode<synchronous>, transform_indices = @transform_2, window_bounds = array<i64: 16, 4>}, {pipeline_mode = #tpu.pipeline_mode<synchronous>, transform_indices = @transform_3, window_bounds = array<i64: 17, 16>}, {pipeline_mode = #tpu.pipeline_mode<synchronous>, transform_indices = @transform_4, window_bounds = array<i64: 1, 4>}, {transform_indices = @transform_5, window_bounds = array<i64: 1, 256, 4>}]} {
    %c9 = arith.constant 9 : index
    %c0 = arith.constant 0 : index
    %0 = vector.load %arg4[%c9, %c0] : memref<17x16xf32, #tpu.memory_space<vmem>>, vector<1x16xf32>
    %c10 = arith.constant 10 : index
    %c0_0 = arith.constant 0 : index
    %1 = vector.load %arg4[%c10, %c0_0] : memref<17x16xf32, #tpu.memory_space<vmem>>, vector<1x16xf32>
    %c11 = arith.constant 11 : index
    %c0_1 = arith.constant 0 : index
    %2 = vector.load %arg4[%c11, %c0_1] : memref<17x16xf32, #tpu.memory_space<vmem>>, vector<1x16xf32>
    %c12 = arith.constant 12 : index
    %c0_2 = arith.constant 0 : index
    %3 = vector.load %arg4[%c12, %c0_2] : memref<17x16xf32, #tpu.memory_space<vmem>>, vector<1x16xf32>
    %c13 = arith.constant 13 : index
    %c0_3 = arith.constant 0 : index
    %4 = vector.load %arg4[%c13, %c0_3] : memref<17x16xf32, #tpu.memory_space<vmem>>, vector<1x16xf32>
    %c14 = arith.constant 14 : index
    %c0_4 = arith.constant 0 : index
    %5 = vector.load %arg4[%c14, %c0_4] : memref<17x16xf32, #tpu.memory_space<vmem>>, vector<1x16xf32>
    %c15 = arith.constant 15 : index
    %c0_5 = arith.constant 0 : index
    %6 = vector.load %arg4[%c15, %c0_5] : memref<17x16xf32, #tpu.memory_space<vmem>>, vector<1x16xf32>
    %c16 = arith.constant 16 : index
    %c0_6 = arith.constant 0 : index
    %7 = vector.load %arg4[%c16, %c0_6] : memref<17x16xf32, #tpu.memory_space<vmem>>, vector<1x16xf32>
    %c0_7 = arith.constant 0 : index
    %c0_8 = arith.constant 0 : index
    %c0_9 = arith.constant 0 : index
    %8 = vector.load %arg1[%c0_7, %c0_8, %c0_9] : memref<1x256x4xf32, #tpu.memory_space<vmem>>, vector<1x256x4xf32>
    %9 = vector.shape_cast %8 : vector<1x256x4xf32> to vector<256x4xf32>
    %10 = arith.truncf %9 : vector<256x4xf32> to vector<256x4xbf16>
    %c0_10 = arith.constant 0 : index
    %c0_11 = arith.constant 0 : index
    %11 = vector.load %arg2[%c0_10, %c0_11] : memref<4x16xbf16, #tpu.memory_space<vmem>>, vector<4x16xbf16>
    %cst = arith.constant dense<0.000000e+00> : vector<256x16xf32>
    %12 = tpu.matmul %10, %11, %cst {dimension_numbers = #tpu.dot_dimension_numbers<[1], [0], [0], [1], [0, 0, 1, 1], [], []>} : vector<256x4xbf16>, vector<4x16xbf16>, vector<256x16xf32> -> vector<256x16xf32>
    %13 = vector.broadcast %0 : vector<1x16xf32> to vector<256x16xf32>
    %14 = arith.addf %12, %13 : vector<256x16xf32>
    %c24 = arith.constant 24 : index
    %c0_12 = arith.constant 0 : index
    %15 = vector.load %arg7[%c24, %c0_12] : memref<304x16xf32, #tpu.memory_space<vmem>>, vector<256x16xf32>
    tpu.vector_store %arg7[%c24, %c0_12], %14 {strides = array<i32>} : memref<304x16xf32, #tpu.memory_space<vmem>>, vector<256x16xf32>,
    %16 = tpu.iota {dimensions = array<i32: 0>} : vector<256x1xi32>
    %c16_i32 = arith.constant 16 : i32
    %c0_i32 = arith.constant 0 : i32
    %17 = arith.cmpi eq, %c16_i32, %c0_i32 : i32
    %c1_i32 = arith.constant 1 : i32
    %18 = arith.select %17, %c1_i32, %c16_i32 : i32
    %19 = vector.broadcast %18 : i32 to vector<256x1xi32>
    %20 = arith.remsi %16, %19 : vector<256x1xi32>
    %c0_i32_13 = arith.constant 0 : i32
    %21 = vector.broadcast %c0_i32_13 : i32 to vector<256x1xi32>
    %22 = arith.cmpi ne, %20, %21 : vector<256x1xi32>
    %c0_i32_14 = arith.constant 0 : i32
    %23 = vector.broadcast %c0_i32_14 : i32 to vector<256x1xi32>
    %24 = arith.cmpi slt, %20, %23 : vector<256x1xi32>
    %c0_i32_15 = arith.constant 0 : i32
    %25 = arith.cmpi slt, %18, %c0_i32_15 : i32
    %26 = vector.broadcast %25 : i1 to vector<256x1xi1>
    %27 = vector.broadcast %26 : vector<256x1xi1> to vector<256x1xi1>
    %28 = arith.xori %24, %27 : vector<256x1xi1>
    %29 = arith.andi %28, %22 : vector<256x1xi1>
    %30 = vector.broadcast %18 : i32 to vector<256x1xi32>
    %31 = arith.addi %20, %30 : vector<256x1xi32>
    %32 = arith.select %29, %31, %20 : vector<256x1xi1>, vector<256x1xi32>
    %c1_i32_16 = arith.constant 1 : i32
    %33 = vector.broadcast %c1_i32_16 : i32 to vector<256x1xi32>
    %34 = arith.cmpi sge, %32, %33 : vector<256x1xi32>
    %c15_i32 = arith.constant 15 : i32
    %35 = vector.broadcast %c15_i32 : i32 to vector<256x1xi32>
    %36 = arith.cmpi slt, %32, %35 : vector<256x1xi32>
    %c16_i32_17 = arith.constant 16 : i32
    %37 = vector.broadcast %c16_i32_17 : i32 to vector<256x1xi32>
    %38 = arith.cmpi sge, %16, %37 : vector<256x1xi32>
    %c240_i32 = arith.constant 240 : i32
    %39 = vector.broadcast %c240_i32 : i32 to vector<256x1xi32>
    %40 = arith.cmpi slt, %16, %39 : vector<256x1xi32>
    %c4 = arith.constant 4 : index
    %c0_18 = arith.constant 0 : index
    %41 = vector.load %arg4[%c4, %c0_18] : memref<17x16xf32, #tpu.memory_space<vmem>>, vector<1x16xf32>
    %42 = vector.broadcast %41 : vector<1x16xf32> to vector<256x16xf32>
    %43 = arith.mulf %14, %42 : vector<256x16xf32>
    %44 = vector.broadcast %1 : vector<1x16xf32> to vector<256x16xf32>
    %45 = arith.addf %43, %44 : vector<256x16xf32>
    %c7 = arith.constant 7 : index
    %c0_19 = arith.constant 0 : index
    %46 = vector.load %arg7[%c7, %c0_19] : memref<304x16xf32, #tpu.memory_space<vmem>>, vector<256x16xf32>
    %c0_20 = arith.constant 0 : index
    %c0_21 = arith.constant 0 : index
    %47 = vector.load %arg4[%c0_20, %c0_21] : memref<17x16xf32, #tpu.memory_space<vmem>>, vector<1x16xf32>
    %48 = vector.broadcast %47 : vector<1x16xf32> to vector<256x16xf32>
    %49 = arith.mulf %46, %48 : vector<256x16xf32>
    %50 = arith.andi %38, %34 : vector<256x1xi1>
    %cst_22 = arith.constant 0.000000e+00 : f32
    %51 = vector.shape_cast %50 : vector<256x1xi1> to vector<256x1xi1>
    %52 = vector.broadcast %51 : vector<256x1xi1> to vector<256x16xi1>
    %53 = vector.broadcast %cst_22 : f32 to vector<256x16xf32>
    %54 = arith.select %52, %49, %53 : vector<256x16xi1>, vector<256x16xf32>
    %55 = arith.addf %45, %54 : vector<256x16xf32>
    %c8 = arith.constant 8 : index
    %c0_23 = arith.constant 0 : index
    %56 = vector.load %arg7[%c8, %c0_23] : memref<304x16xf32, #tpu.memory_space<vmem>>, vector<256x16xf32>
    %c1 = arith.constant 1 : index
    %c0_24 = arith.constant 0 : index
    %57 = vector.load %arg4[%c1, %c0_24] : memref<17x16xf32, #tpu.memory_space<vmem>>, vector<1x16xf32>
    %58 = vector.broadcast %57 : vector<1x16xf32> to vector<256x16xf32>
    %59 = arith.mulf %56, %58 : vector<256x16xf32>
    %cst_25 = arith.constant 0.000000e+00 : f32
    %60 = vector.shape_cast %38 : vector<256x1xi1> to vector<256x1xi1>
    %61 = vector.broadcast %60 : vector<256x1xi1> to vector<256x16xi1>
    %62 = vector.broadcast %cst_25 : f32 to vector<256x16xf32>
    %63 = arith.select %61, %59, %62 : vector<256x16xi1>, vector<256x16xf32>
    %64 = arith.addf %55, %63 : vector<256x16xf32>
    %c9_26 = arith.constant 9 : index
    %c0_27 = arith.constant 0 : index
    %65 = vector.load %arg7[%c9_26, %c0_27] : memref<304x16xf32, #tpu.memory_space<vmem>>, vector<256x16xf32>
    %c2 = arith.constant 2 : index
    %c0_28 = arith.constant 0 : index
    %66 = vector.load %arg4[%c2, %c0_28] : memref<17x16xf32, #tpu.memory_space<vmem>>, vector<1x16xf32>
    %67 = vector.broadcast %66 : vector<1x16xf32> to vector<256x16xf32>
    %68 = arith.mulf %65, %67 : vector<256x16xf32>
    %69 = arith.andi %38, %36 : vector<256x1xi1>
    %cst_29 = arith.constant 0.000000e+00 : f32
    %70 = vector.shape_cast %69 : vector<256x1xi1> to vector<256x1xi1>
    %71 = vector.broadcast %70 : vector<256x1xi1> to vector<256x16xi1>
    %72 = vector.broadcast %cst_29 : f32 to vector<256x16xf32>
    %73 = arith.select %71, %68, %72 : vector<256x16xi1>, vector<256x16xf32>
    %74 = arith.addf %64, %73 : vector<256x16xf32>
    %c23 = arith.constant 23 : index
    %c0_30 = arith.constant 0 : index
    %75 = vector.load %arg7[%c23, %c0_30] : memref<304x16xf32, #tpu.memory_space<vmem>>, vector<256x16xf32>
    %c3 = arith.constant 3 : index
    %c0_31 = arith.constant 0 : index
    %76 = vector.load %arg4[%c3, %c0_31] : memref<17x16xf32, #tpu.memory_space<vmem>>, vector<1x16xf32>
    %77 = vector.broadcast %76 : vector<1x16xf32> to vector<256x16xf32>
    %78 = arith.mulf %75, %77 : vector<256x16xf32>
    %cst_32 = arith.constant 0.000000e+00 : f32
    %79 = vector.shape_cast %34 : vector<256x1xi1> to vector<256x1xi1>
    %80 = vector.broadcast %79 : vector<256x1xi1> to vector<256x16xi1>
    %81 = vector.broadcast %cst_32 : f32 to vector<256x16xf32>
    %82 = arith.select %80, %78, %81 : vector<256x16xi1>, vector<256x16xf32>
    %83 = arith.addf %74, %82 : vector<256x16xf32>
    %c25 = arith.constant 25 : index
    %c0_33 = arith.constant 0 : index
    %84 = vector.load %arg7[%c25, %c0_33] : memref<304x16xf32, #tpu.memory_space<vmem>>, vector<256x16xf32>
    %c5 = arith.constant 5 : index
    %c0_34 = arith.constant 0 : index
    %85 = vector.load %arg4[%c5, %c0_34] : memref<17x16xf32, #tpu.memory_space<vmem>>, vector<1x16xf32>
    %86 = vector.broadcast %85 : vector<1x16xf32> to vector<256x16xf32>
    %87 = arith.mulf %84, %86 : vector<256x16xf32>
    %cst_35 = arith.constant 0.000000e+00 : f32
    %88 = vector.shape_cast %36 : vector<256x1xi1> to vector<256x1xi1>
    %89 = vector.broadcast %88 : vector<256x1xi1> to vector<256x16xi1>
    %90 = vector.broadcast %cst_35 : f32 to vector<256x16xf32>
    %91 = arith.select %89, %87, %90 : vector<256x16xi1>, vector<256x16xf32>
    %92 = arith.addf %83, %91 : vector<256x16xf32>
    %c39 = arith.constant 39 : index
    %c0_36 = arith.constant 0 : index
    %93 = vector.load %arg7[%c39, %c0_36] : memref<304x16xf32, #tpu.memory_space<vmem>>, vector<256x16xf32>
    %c6 = arith.constant 6 : index
    %c0_37 = arith.constant 0 : index
    %94 = vector.load %arg4[%c6, %c0_37] : memref<17x16xf32, #tpu.memory_space<vmem>>, vector<1x16xf32>
    %95 = vector.broadcast %94 : vector<1x16xf32> to vector<256x16xf32>
    %96 = arith.mulf %93, %95 : vector<256x16xf32>
    %97 = arith.andi %40, %34 : vector<256x1xi1>
    %cst_38 = arith.constant 0.000000e+00 : f32
    %98 = vector.shape_cast %97 : vector<256x1xi1> to vector<256x1xi1>
    %99 = vector.broadcast %98 : vector<256x1xi1> to vector<256x16xi1>
    %100 = vector.broadcast %cst_38 : f32 to vector<256x16xf32>
    %101 = arith.select %99, %96, %100 : vector<256x16xi1>, vector<256x16xf32>
    %102 = arith.addf %92, %101 : vector<256x16xf32>
    %c40 = arith.constant 40 : index
    %c0_39 = arith.constant 0 : index
    %103 = vector.load %arg7[%c40, %c0_39] : memref<304x16xf32, #tpu.memory_space<vmem>>, vector<256x16xf32>
    %c7_40 = arith.constant 7 : index
    %c0_41 = arith.constant 0 : index
    %104 = vector.load %arg4[%c7_40, %c0_41] : memref<17x16xf32, #tpu.memory_space<vmem>>, vector<1x16xf32>
    %105 = vector.broadcast %104 : vector<1x16xf32> to vector<256x16xf32>
    %106 = arith.mulf %103, %105 : vector<256x16xf32>
    %cst_42 = arith.constant 0.000000e+00 : f32
    %107 = vector.shape_cast %40 : vector<256x1xi1> to vector<256x1xi1>
    %108 = vector.broadcast %107 : vector<256x1xi1> to vector<256x16xi1>
    %109 = vector.broadcast %cst_42 : f32 to vector<256x16xf32>
    %110 = arith.select %108, %106, %109 : vector<256x16xi1>, vector<256x16xf32>
    %111 = arith.addf %102, %110 : vector<256x16xf32>
    %c41 = arith.constant 41 : index
    %c0_43 = arith.constant 0 : index
    %112 = vector.load %arg7[%c41, %c0_43] : memref<304x16xf32, #tpu.memory_space<vmem>>, vector<256x16xf32>
    %c8_44 = arith.constant 8 : index
    %c0_45 = arith.constant 0 : index
    %113 = vector.load %arg4[%c8_44, %c0_45] : memref<17x16xf32, #tpu.memory_space<vmem>>, vector<1x16xf32>
    %114 = vector.broadcast %113 : vector<1x16xf32> to vector<256x16xf32>
    %115 = arith.mulf %112, %114 : vector<256x16xf32>
    %116 = arith.andi %40, %36 : vector<256x1xi1>
    %cst_46 = arith.constant 0.000000e+00 : f32
    %117 = vector.shape_cast %116 : vector<256x1xi1> to vector<256x1xi1>
    %118 = vector.broadcast %117 : vector<256x1xi1> to vector<256x16xi1>
    %119 = vector.broadcast %cst_46 : f32 to vector<256x16xf32>
    %120 = arith.select %118, %115, %119 : vector<256x16xi1>, vector<256x16xf32>
    %121 = arith.addf %111, %120 : vector<256x16xf32>
    %122 = arith.addf %121, %14 : vector<256x16xf32>
    %cst_47 = arith.constant dense<0.000000e+00> : vector<256xf32>
    %123 = vector.multi_reduction <add>, %122, %cst_47 [1] : vector<256x16xf32> to vector<256xf32>
    %124 = vector.shape_cast %123 : vector<256xf32> to vector<256x1xf32>
    %cst_48 = arith.constant 1.600000e+01 : f32
    %125 = vector.broadcast %cst_48 : f32 to vector<256x1xf32>
    %126 = arith.divf %124, %125 : vector<256x1xf32>
    %127 = vector.broadcast %126 : vector<256x1xf32> to vector<256x16xf32>
    %128 = arith.subf %122, %127 : vector<256x16xf32>
    %129 = arith.mulf %128, %128 : vector<256x16xf32>
    %cst_49 = arith.constant dense<0.000000e+00> : vector<256xf32>
    %130 = vector.multi_reduction <add>, %129, %cst_49 [1] : vector<256x16xf32> to vector<256xf32>
    %131 = vector.shape_cast %130 : vector<256xf32> to vector<256x1xf32>
    %cst_50 = arith.constant 1.600000e+01 : f32
    %132 = vector.broadcast %cst_50 : f32 to vector<256x1xf32>
    %133 = arith.divf %131, %132 : vector<256x1xf32>
    %cst_51 = arith.constant 9.99999997E-7 : f32
    %134 = vector.broadcast %cst_51 : f32 to vector<256x1xf32>
    %135 = arith.addf %133, %134 : vector<256x1xf32>
    %136 = math.rsqrt %135 : vector<256x1xf32>
    %137 = vector.broadcast %136 : vector<256x1xf32> to vector<256x16xf32>
    %138 = arith.mulf %128, %137 : vector<256x16xf32>
    %139 = vector.broadcast %2 : vector<1x16xf32> to vector<256x16xf32>
    %140 = arith.mulf %138, %139 : vector<256x16xf32>
    %141 = vector.broadcast %3 : vector<1x16xf32> to vector<256x16xf32>
    %142 = arith.addf %140, %141 : vector<256x16xf32>
    %143 = arith.addf %142, %14 : vector<256x16xf32>
    %cst_52 = arith.constant dense<0.000000e+00> : vector<256xf32>
    %144 = vector.multi_reduction <add>, %143, %cst_52 [1] : vector<256x16xf32> to vector<256xf32>
    %145 = vector.shape_cast %144 : vector<256xf32> to vector<256x1xf32>
    %cst_53 = arith.constant 1.600000e+01 : f32
    %146 = vector.broadcast %cst_53 : f32 to vector<256x1xf32>
    %147 = arith.divf %145, %146 : vector<256x1xf32>
    %148 = vector.broadcast %147 : vector<256x1xf32> to vector<256x16xf32>
    %149 = arith.subf %143, %148 : vector<256x16xf32>
    %150 = arith.mulf %149, %149 : vector<256x16xf32>
    %cst_54 = arith.constant dense<0.000000e+00> : vector<256xf32>
    %151 = vector.multi_reduction <add>, %150, %cst_54 [1] : vector<256x16xf32> to vector<256xf32>
    %152 = vector.shape_cast %151 : vector<256xf32> to vector<256x1xf32>
    %cst_55 = arith.constant 1.600000e+01 : f32
    %153 = vector.broadcast %cst_55 : f32 to vector<256x1xf32>
    %154 = arith.divf %152, %153 : vector<256x1xf32>
    %cst_56 = arith.constant 9.99999997E-7 : f32
    %155 = vector.broadcast %cst_56 : f32 to vector<256x1xf32>
    %156 = arith.addf %154, %155 : vector<256x1xf32>
    %157 = math.rsqrt %156 : vector<256x1xf32>
    %158 = vector.broadcast %157 : vector<256x1xf32> to vector<256x16xf32>
    %159 = arith.mulf %149, %158 : vector<256x16xf32>
    %160 = vector.broadcast %4 : vector<1x16xf32> to vector<256x16xf32>
    %161 = arith.mulf %159, %160 : vector<256x16xf32>
    %162 = vector.broadcast %5 : vector<1x16xf32> to vector<256x16xf32>
    %163 = arith.addf %161, %162 : vector<256x16xf32>
    %164 = arith.addf %163, %14 : vector<256x16xf32>
    %cst_57 = arith.constant dense<0.000000e+00> : vector<256xf32>
    %165 = vector.multi_reduction <add>, %164, %cst_57 [1] : vector<256x16xf32> to vector<256xf32>
    %166 = vector.shape_cast %165 : vector<256xf32> to vector<256x1xf32>
    %cst_58 = arith.constant 1.600000e+01 : f32
    %167 = vector.broadcast %cst_58 : f32 to vector<256x1xf32>
    %168 = arith.divf %166, %167 : vector<256x1xf32>
    %169 = vector.broadcast %168 : vector<256x1xf32> to vector<256x16xf32>
    %170 = arith.subf %164, %169 : vector<256x16xf32>
    %171 = arith.mulf %170, %170 : vector<256x16xf32>
    %cst_59 = arith.constant dense<0.000000e+00> : vector<256xf32>
    %172 = vector.multi_reduction <add>, %171, %cst_59 [1] : vector<256x16xf32> to vector<256xf32>
    %173 = vector.shape_cast %172 : vector<256xf32> to vector<256x1xf32>
    %cst_60 = arith.constant 1.600000e+01 : f32
    %174 = vector.broadcast %cst_60 : f32 to vector<256x1xf32>
    %175 = arith.divf %173, %174 : vector<256x1xf32>
    %cst_61 = arith.constant 9.99999997E-7 : f32
    %176 = vector.broadcast %cst_61 : f32 to vector<256x1xf32>
    %177 = arith.addf %175, %176 : vector<256x1xf32>
    %178 = math.rsqrt %177 : vector<256x1xf32>
    %179 = vector.broadcast %178 : vector<256x1xf32> to vector<256x16xf32>
    %180 = arith.mulf %170, %179 : vector<256x16xf32>
    %181 = vector.broadcast %6 : vector<1x16xf32> to vector<256x16xf32>
    %182 = arith.mulf %180, %181 : vector<256x16xf32>
    %183 = vector.broadcast %7 : vector<1x16xf32> to vector<256x16xf32>
    %184 = arith.addf %182, %183 : vector<256x16xf32>
    %cst_62 = arith.constant 5.000000e-01 : f32
    %185 = vector.broadcast %cst_62 : f32 to vector<256x16xf32>
    %186 = arith.mulf %185, %184 : vector<256x16xf32>
    %cst_63 = arith.constant 0.707106769 : f32
    %187 = vector.broadcast %cst_63 : f32 to vector<256x16xf32>
    %188 = arith.mulf %184, %187 : vector<256x16xf32>
    %189 = math.absf %188 : vector<256x16xf32>
    %cst_64 = arith.constant 0.327591091 : f32
    %190 = vector.broadcast %cst_64 : f32 to vector<256x16xf32>
    %191 = arith.mulf %190, %189 : vector<256x16xf32>
    %cst_65 = arith.constant 1.000000e+00 : f32
    %192 = vector.broadcast %cst_65 : f32 to vector<256x16xf32>
    %193 = arith.addf %192, %191 : vector<256x16xf32>
    %cst_66 = arith.constant 1.000000e+00 : f32
    %194 = vector.broadcast %cst_66 : f32 to vector<256x16xf32>
    %195 = arith.divf %194, %193 : vector<256x16xf32>
    %cst_67 = arith.constant 1.06140542 : f32
    %196 = vector.broadcast %cst_67 : f32 to vector<256x16xf32>
    %197 = arith.mulf %196, %195 : vector<256x16xf32>
    %cst_68 = arith.constant -1.45315206 : f32
    %198 = vector.broadcast %cst_68 : f32 to vector<256x16xf32>
    %199 = arith.addf %197, %198 : vector<256x16xf32>
    %200 = arith.mulf %199, %195 : vector<256x16xf32>
    %cst_69 = arith.constant 1.42141378 : f32
    %201 = vector.broadcast %cst_69 : f32 to vector<256x16xf32>
    %202 = arith.addf %200, %201 : vector<256x16xf32>
    %203 = arith.mulf %202, %195 : vector<256x16xf32>
    %cst_70 = arith.constant -0.284496725 : f32
    %204 = vector.broadcast %cst_70 : f32 to vector<256x16xf32>
    %205 = arith.addf %203, %204 : vector<256x16xf32>
    %206 = arith.mulf %205, %195 : vector<256x16xf32>
    %cst_71 = arith.constant 0.254829586 : f32
    %207 = vector.broadcast %cst_71 : f32 to vector<256x16xf32>
    %208 = arith.addf %206, %207 : vector<256x16xf32>
    %209 = arith.mulf %208, %195 : vector<256x16xf32>
    %cst_72 = arith.constant 0.000000e+00 : f32
    %210 = vector.broadcast %cst_72 : f32 to vector<256x16xf32>
    %211 = arith.subf %210, %189 : vector<256x16xf32>
    %212 = arith.mulf %211, %189 : vector<256x16xf32>
    %213 = math.exp %212 : vector<256x16xf32>
    %214 = arith.mulf %209, %213 : vector<256x16xf32>
    %cst_73 = arith.constant 1.000000e+00 : f32
    %215 = vector.broadcast %cst_73 : f32 to vector<256x16xf32>
    %216 = arith.subf %215, %214 : vector<256x16xf32>
    %cst_74 = arith.constant 0.000000e+00 : f32
    %217 = vector.broadcast %cst_74 : f32 to vector<256x16xf32>
    %218 = arith.cmpf olt, %188, %217 : vector<256x16xf32>
    %cst_75 = arith.constant 0.000000e+00 : f32
    %219 = vector.broadcast %cst_75 : f32 to vector<256x16xf32>
    %220 = arith.subf %219, %216 : vector<256x16xf32>
    %221 = arith.select %218, %220, %216 : vector<256x16xi1>, vector<256x16xf32>
    %cst_76 = arith.constant 1.000000e+00 : f32
    %222 = vector.broadcast %cst_76 : f32 to vector<256x16xf32>
    %223 = arith.addf %222, %221 : vector<256x16xf32>
    %224 = arith.mulf %186, %223 : vector<256x16xf32>
    %225 = arith.truncf %224 : vector<256x16xf32> to vector<256x16xbf16>
    %c0_77 = arith.constant 0 : index
    %c0_78 = arith.constant 0 : index
    %226 = vector.load %arg3[%c0_77, %c0_78] : memref<16x4xbf16, #tpu.memory_space<vmem>>, vector<16x4xbf16>
    %cst_79 = arith.constant dense<0.000000e+00> : vector<256x4xf32>
    %227 = tpu.matmul %225, %226, %cst_79 {dimension_numbers = #tpu.dot_dimension_numbers<[1], [0], [0], [1], [0, 0, 1, 1], [], []>} : vector<256x16xbf16>, vector<16x4xbf16>, vector<256x4xf32> -> vector<256x4xf32>
    %c0_80 = arith.constant 0 : index
    %c0_81 = arith.constant 0 : index
    %228 = vector.load %arg5[%c0_80, %c0_81] : memref<1x4xf32, #tpu.memory_space<vmem>>, vector<1x4xf32>
    %229 = vector.broadcast %228 : vector<1x4xf32> to vector<256x4xf32>
    %230 = arith.addf %227, %229 : vector<256x4xf32>
    %c0_82 = arith.constant 0 : index
    %c0_83 = arith.constant 0 : index
    %c0_84 = arith.constant 0 : index
    %231 = vector.load %arg6[%c0_82, %c0_83, %c0_84] : memref<1x256x4xf32, #tpu.memory_space<vmem>>, vector<1x256x4xf32>
    %232 = vector.shape_cast %231 : vector<1x256x4xf32> to vector<256x4xf32>
    %233 = vector.shape_cast %230 : vector<256x4xf32> to vector<1x256x4xf32>
    tpu.vector_store %arg6[%c0_82, %c0_83, %c0_84], %233 {strides = array<i32>} : memref<1x256x4xf32, #tpu.memory_space<vmem>>, vector<1x256x4xf32>,
    return
  }
  func.func @transform_0(%arg0: i32) -> (i32, i32, i32) {
    %c0_i32 = arith.constant 0 : i32
    %c0_i32_0 = arith.constant 0 : i32
    %c0_i32_1 = arith.constant 0 : i32
    return %arg0, %c0_i32, %c0_i32_0 : i32, i32, i32
  }
  func.func @transform_1(%arg0: i32) -> (i32, i32) {
    %c0_i32 = arith.constant 0 : i32
    %c0_i32_0 = arith.constant 0 : i32
    %c0_i32_1 = arith.constant 0 : i32
    return %c0_i32, %c0_i32_0 : i32, i32
  }
  func.func @transform_2(%arg0: i32) -> (i32, i32) {
    %c0_i32 = arith.constant 0 : i32
    %c0_i32_0 = arith.constant 0 : i32
    %c0_i32_1 = arith.constant 0 : i32
    return %c0_i32, %c0_i32_0 : i32, i32
  }
  func.func @transform_3(%arg0: i32) -> (i32, i32) {
    %c0_i32 = arith.constant 0 : i32
    %c0_i32_0 = arith.constant 0 : i32
    %c0_i32_1 = arith.constant 0 : i32
    return %c0_i32, %c0_i32_0 : i32, i32
  }
  func.func @transform_4(%arg0: i32) -> (i32, i32) {
    %c0_i32 = arith.constant 0 : i32
    %c0_i32_0 = arith.constant 0 : i32
    %c0_i32_1 = arith.constant 0 : i32
    return %c0_i32, %c0_i32_0 : i32, i32
  }
  func.func @transform_5(%arg0: i32) -> (i32, i32, i32) {
    %c0_i32 = arith.constant 0 : i32
    %c0_i32_0 = arith.constant 0 : i32
    %c0_i32_1 = arith.constant 0 : i32
    return %arg0, %c0_i32, %c0_i32_0 : i32, i32, i32
  }
}

</mosaic_0001>

<llo_original>
// kernel: tpu_custom_call.1
$region0: #{tpu_custom_call.1}
  #allocation0 [shape = 'u32[]', space=smem, size = 0x4, offset = 0x4, fixed_abs, tag = 'smem constant byte address 0x4 - core index']
  #allocation1 [shape = 'u32[144,128]{1,0:T(1,128)}', space=vmem, size = 0x12000, scoped, tag = 'internal scratch']
  #allocation2 [shape = 'f32[304,16]{1,0:T(8,128)}', space=vmem, size = 0x26000, scoped, tag = 'scratch operand']
  %s0 = inlined_call_operand.vmem [shape: f32[2,256,4], index: 0, kind: input, shape index: {}]
  %s1 = inlined_call_operand.vmem [shape: bf16[4,16], index: 1, kind: input, shape index: {}]
  %s2 = inlined_call_operand.vmem [shape: bf16[16,4], index: 2, kind: input, shape index: {}]
  %s3 = inlined_call_operand.vmem [shape: f32[17,16], index: 3, kind: input, shape index: {}]
  %s4 = inlined_call_operand.vmem [shape: f32[1,4], index: 4, kind: input, shape index: {}]
  %s5 = inlined_call_operand.vmem [shape: f32[2,256,4], index: 5, kind: output, shape index: {}]
  %s6 = sld [smem:[#allocation0]]
  $region53: #{tpu_custom_call.1} parent=0
    _
  %s8 = ssub.s32 1, %s6
  %s9 = scalar_select 0, %s8, %s6
  loop: start=0, step=1, limit=4
  $region2: #{tpu_custom_call.1} parent=0 // loop_pre_header
    _
  $region3: #{tpu_custom_call.1} parent=0 // loop_header
    %s11 = sphi 0, %s15
    %p12 = scmp.ge.s32.totalorder %s11, 4
    %s21 = sphi 0, %s23
    %s24 = sphi 0, %s21
    %s25 = sphi 0, %s24
    %s41 = sphi 0, %s25
    %s45 = sphi 0, %s45
    %s47 = sphi 0, %s45
    %s48 = sphi 0, %s47
    %s62 = sphi 0, %s48
    %s66 = sphi 0, %s66
    %s68 = sphi 0, %s66
    %s69 = sphi 0, %s68
    %s83 = sphi 0, %s69
    %s87 = sphi 0, %s87
    %s89 = sphi 0, %s87
    %s90 = sphi 0, %s89
    %s104 = sphi 0, %s90
    %s108 = sphi 0, %s108
    %s110 = sphi 0, %s108
    %s111 = sphi 0, %s110
    %s125 = sphi 0, %s111
    %s131 = sphi 0, %s133
    %s134 = sphi 0, %s131
    %s135 = sphi 0, %s134
    %s151 = sphi 0, %s135
  $region4: #{tpu_custom_call.1} parent=0 // loop_header_branch
    %14 = sbr.rel (%p12) target = $region8
  $region5: #{tpu_custom_call.1} parent=0 // loop_body
    %s16 = ssub.s32 %s11, 1
    %s17 = ssub.s32 %s11, 2
    %s18 = sadd.s32 %s11, 1
    %s19 = ssub.s32 %s11, %s18
    %p20 = scmp.eq.s32.totalorder %s19, 0
    %s22 = sadd.s32 %s21, 1
    %s23 = scalar_select %p20, %s21, %s22
    %p26 = pneg %p20
    %p27 = scmp.eq.s32.totalorder %s11, 1
    %p28 = por %p26, %p27
    %p29 = scmp.ne.s32.totalorder %s21, %s24
    %p30 = scmp.eq.s32.totalorder %s11, 0
    %p31 = por %p29, %p30
    %p32 = scmp.ne.s32.totalorder %s21, %s24
    %p33 = scmp.eq.s32.totalorder %s16, 1
    %p34 = por %p32, %p33
    %p35 = scmp.ne.s32.totalorder %s24, %s25
    %p36 = scmp.eq.s32.totalorder %s16, 0
    %p37 = por %p35, %p36
    %p38 = scmp.ne.s32.totalorder %s24, %s25
    %p39 = scmp.eq.s32.totalorder %s17, 1
    %p40 = por %p38, %p39
    %p42 = scmp.ne.s32.totalorder %s25, %s41
    %p43 = scmp.eq.s32.totalorder %s17, 0
    %p44 = por %p42, %p43
    %s46 = sadd.s32 %s45, 1
    %p49 = scmp.eq.s32.totalorder %s11, 1
    %p50 = scmp.ne.s32.totalorder %s45, %s47
    %p51 = scmp.eq.s32.totalorder %s11, 0
    %p52 = por %p50, %p51
    %p53 = scmp.ne.s32.totalorder %s45, %s47
    %p54 = scmp.eq.s32.totalorder %s16, 1
    %p55 = por %p53, %p54
    %p56 = scmp.ne.s32.totalorder %s47, %s48
    %p57 = scmp.eq.s32.totalorder %s16, 0
    %p58 = por %p56, %p57
    %p59 = scmp.ne.s32.totalorder %s47, %s48
    %p60 = scmp.eq.s32.totalorder %s17, 1
    %p61 = por %p59, %p60
    %p63 = scmp.ne.s32.totalorder %s48, %s62
    %p64 = scmp.eq.s32.totalorder %s17, 0
    %p65 = por %p63, %p64
    %s67 = sadd.s32 %s66, 1
    %p70 = scmp.eq.s32.totalorder %s11, 1
    %p71 = scmp.ne.s32.totalorder %s66, %s68
    %p72 = scmp.eq.s32.totalorder %s11, 0
    %p73 = por %p71, %p72
    %p74 = scmp.ne.s32.totalorder %s66, %s68
    %p75 = scmp.eq.s32.totalorder %s16, 1
    %p76 = por %p74, %p75
    %p77 = scmp.ne.s32.totalorder %s68, %s69
    %p78 = scmp.eq.s32.totalorder %s16, 0
    %p79 = por %p77, %p78
    %p80 = scmp.ne.s32.totalorder %s68, %s69
    %p81 = scmp.eq.s32.totalorder %s17, 1
    %p82 = por %p80, %p81
    %p84 = scmp.ne.s32.totalorder %s69, %s83
    %p85 = scmp.eq.s32.totalorder %s17, 0
    %p86 = por %p84, %p85
    %s88 = sadd.s32 %s87, 1
    %p91 = scmp.eq.s32.totalorder %s11, 1
    %p92 = scmp.ne.s32.totalorder %s87, %s89
    %p93 = scmp.eq.s32.totalorder %s11, 0
    %p94 = por %p92, %p93
    %p95 = scmp.ne.s32.totalorder %s87, %s89
    %p96 = scmp.eq.s32.totalorder %s16, 1
    %p97 = por %p95, %p96
    %p98 = scmp.ne.s32.totalorder %s89, %s90
    %p99 = scmp.eq.s32.totalorder %s16, 0
    %p100 = por %p98, %p99
    %p101 = scmp.ne.s32.totalorder %s89, %s90
    %p102 = scmp.eq.s32.totalorder %s17, 1
    %p103 = por %p101, %p102
    %p105 = scmp.ne.s32.totalorder %s90, %s104
    %p106 = scmp.eq.s32.totalorder %s17, 0
    %p107 = por %p105, %p106
    %s109 = sadd.s32 %s108, 1
    %p112 = scmp.eq.s32.totalorder %s11, 1
    %p113 = scmp.ne.s32.totalorder %s108, %s110
    %p114 = scmp.eq.s32.totalorder %s11, 0
    %p115 = por %p113, %p114
    %p116 = scmp.ne.s32.totalorder %s108, %s110
    %p117 = scmp.eq.s32.totalorder %s16, 1
    %p118 = por %p116, %p117
    %p119 = scmp.ne.s32.totalorder %s110, %s111
    %p120 = scmp.eq.s32.totalorder %s16, 0
    %p121 = por %p119, %p120
    %p122 = scmp.ne.s32.totalorder %s110, %s111
    %p123 = scmp.eq.s32.totalorder %s17, 1
    %p124 = por %p122, %p123
    %p126 = scmp.ne.s32.totalorder %s111, %s125
    %p127 = scmp.eq.s32.totalorder %s17, 0
    %p128 = por %p126, %p127
    %s129 = ssub.s32 %s11, %s18
    %p130 = scmp.eq.s32.totalorder %s129, 0
    %s132 = sadd.s32 %s131, 1
    %s133 = scalar_select %p130, %s131, %s132
    %p136 = pneg %p130
    %p137 = scmp.eq.s32.totalorder %s11, 1
    %p138 = por %p136, %p137
    %p139 = scmp.ne.s32.totalorder %s131, %s134
    %p140 = scmp.eq.s32.totalorder %s11, 0
    %p141 = por %p139, %p140
    %p142 = scmp.ne.s32.totalorder %s131, %s134
    %p143 = scmp.eq.s32.totalorder %s16, 1
    %p144 = por %p142, %p143
    %p145 = scmp.ne.s32.totalorder %s134, %s135
    %p146 = scmp.eq.s32.totalorder %s16, 0
    %p147 = por %p145, %p146
    %p148 = scmp.ne.s32.totalorder %s134, %s135
    %p149 = scmp.eq.s32.totalorder %s17, 1
    %p150 = por %p148, %p149
    %p152 = scmp.ne.s32.totalorder %s135, %s151
    %p153 = scmp.eq.s32.totalorder %s17, 0
    %p154 = por %p152, %p153
    %p155 = scmp.le.s32.totalorder 1, %s11
    %p156 = scmp.lt.s32.totalorder %s11, 3
    %p157 = pnand %p155, %p156
    %p158 = pneg %p157
    // Predicated region
    $region9: #{tpu_custom_call.1} parent=5 // pred_check
      _
    $region10: #{tpu_custom_call.1} parent=5 // pred_check_branch
      %160 = sbr.rel (%p157) target = $region12
    $region11: #{tpu_custom_call.1} parent=5 // pred_region
      %s161 = ssub.s32 %s11, 1
      // Predicated region
      $region13: #{tpu_custom_call.1} parent=11 // pred_check
        %p162 = pneg %p58
      $region14: #{tpu_custom_call.1} parent=11 // pred_check_branch
        %164 = sbr.rel (%p162) target = $region16
      $region15: #{tpu_custom_call.1} parent=11 // pred_region
        _
      $region16: #{tpu_custom_call.1} parent=11 // pred_fallthru
        _
      // Predicated region
      $region17: #{tpu_custom_call.1} parent=11 // pred_check
        %p165 = pneg %p79
      $region18: #{tpu_custom_call.1} parent=11 // pred_check_branch
        %167 = sbr.rel (%p165) target = $region20
      $region19: #{tpu_custom_call.1} parent=11 // pred_region
        _
      $region20: #{tpu_custom_call.1} parent=11 // pred_fallthru
        _
      // Predicated region
      $region21: #{tpu_custom_call.1} parent=11 // pred_check
        %p168 = pneg %p100
      $region22: #{tpu_custom_call.1} parent=11 // pred_check_branch
        %170 = sbr.rel (%p168) target = $region24
      $region23: #{tpu_custom_call.1} parent=11 // pred_region
        _
      $region24: #{tpu_custom_call.1} parent=11 // pred_fallthru
        _
      // Predicated region
      $region25: #{tpu_custom_call.1} parent=11 // pred_check
        %p171 = pneg %p121
      $region26: #{tpu_custom_call.1} parent=11 // pred_check_branch
        %173 = sbr.rel (%p171) target = $region28
      $region27: #{tpu_custom_call.1} parent=11 // pred_region
        _
      $region28: #{tpu_custom_call.1} parent=11 // pred_fallthru
        _
    $region12: #{tpu_custom_call.1} parent=5 // pred_fallthru
      _
    %p174 = scmp.lt.s32.totalorder %s11, 2
    // Predicated region
    $region29: #{tpu_custom_call.1} parent=5 // pred_check
      %p175 = pneg %p174
    $region30: #{tpu_custom_call.1} parent=5 // pred_check_branch
      %177 = sbr.rel (%p175) target = $region32
    $region31: #{tpu_custom_call.1} parent=5 // pred_region
      // Predicated region
      $region33: #{tpu_custom_call.1} parent=31 // pred_check
        %p178 = pneg %p31
      $region34: #{tpu_custom_call.1} parent=31 // pred_check_branch
        %180 = sbr.rel (%p178) target = $region36
      $region35: #{tpu_custom_call.1} parent=31 // pred_region
        %p181 = scmp.lt.s32.totalorder %s11, 1
        %s182 = scalar_select %p181, %s11, 1
        %s183 = smul.addr %s182, 32
        %s184 = smul.addr %s183, 8
        %s185 = scalar_lea.vmem %s0, %s184
      $region36: #{tpu_custom_call.1} parent=31 // pred_fallthru
        _
    $region32: #{tpu_custom_call.1} parent=5 // pred_fallthru
      _
    %p186 = scmp.le.s32.totalorder 1, %s11
    %p187 = scmp.lt.s32.totalorder %s11, 3
    %p188 = pnand %p186, %p187
    %p189 = pneg %p188
    // Predicated region
    $region37: #{tpu_custom_call.1} parent=5 // pred_check
      _
    $region38: #{tpu_custom_call.1} parent=5 // pred_check_branch
      %191 = sbr.rel (%p188) target = $region40
    $region39: #{tpu_custom_call.1} parent=5 // pred_region
      %s192 = ssub.s32 %s11, 1
      %p193 = scmp.lt.s32.totalorder %s16, 1
      %s194 = scalar_select %p193, %s16, 1
      %s195 = smul.addr %s194, 32
      %s196 = smul.addr %s195, 8
      %s197 = scalar_lea.vmem %s0, %s196
      %p198 = pneg %p37
      %p199 = pneg %p34
      %p200 = pneg %p58
      %p201 = pneg %p55
      %p202 = pneg %p79
      %p203 = pneg %p76
      %p204 = pneg %p100
      %p205 = pneg %p97
      %p206 = pneg %p121
      %p207 = pneg %p118
      %p208 = pneg %p147
      %p209 = pneg %p144
      %p210 = scmp.lt.s32.totalorder %s16, 1
      %s211 = scalar_select %p210, %s16, 1
      %s212 = smul.addr %s211, 32
      %s213 = smul.addr %s212, 8
      %s214 = scalar_lea.vmem %s5, %s213
      %p215 = scmp.lt.s32.totalorder %s16, 1
      %s216 = scalar_select %p215, %s16, 1
      %s217 = smul.addr %s216, 32
      %s218 = smul.addr %s217, 8
      %s219 = scalar_lea.vmem %s0, %s218
      %p220 = scmp.lt.s32.totalorder %s16, 1
      %s221 = scalar_select %p220, %s16, 1
      %s222 = smul.addr %s221, 32
      %s223 = smul.addr %s222, 8
      %s224 = scalar_lea.vmem %s5, %s223
      %v226 = vld [vmem:[%s3 + $0x9] sm:$0x1]
      %v227 = vld [vmem:[%s3 + $0xa] sm:$0x1]
      %v228 = vld [vmem:[%s3 + $0xb] sm:$0x1]
      %v229 = vld [vmem:[%s3 + $0xc] sm:$0x1]
      %v230 = vld [vmem:[%s3 + $0xd] sm:$0x1]
      %v231 = vld [vmem:[%s3 + $0xe] sm:$0x1]
      %v232 = vld [vmem:[%s3 + $0xf] sm:$0x1]
      %v233 = vld [vmem:[%s3 + $0x10] sm:$0x1]
      %v234 = vld [vmem:[%s219] sm:$0xff]
      %v235 = vld [vmem:[%s219 + $0x8] sm:$0xff]
      %v236 = vld [vmem:[%s219 + $0x10] sm:$0xff]
      %v237 = vld [vmem:[%s219 + $0x18] sm:$0xff]
      %v238 = vld [vmem:[%s219 + $0x20] sm:$0xff]
      %v239 = vld [vmem:[%s219 + $0x28] sm:$0xff]
      %v240 = vld [vmem:[%s219 + $0x30] sm:$0xff]
      %v241 = vld [vmem:[%s219 + $0x38] sm:$0xff]
      %v242 = vld [vmem:[%s219 + $0x40] sm:$0xff]
      %v243 = vld [vmem:[%s219 + $0x48] sm:$0xff]
      %v244 = vld [vmem:[%s219 + $0x50] sm:$0xff]
      %v245 = vld [vmem:[%s219 + $0x58] sm:$0xff]
      %v246 = vld [vmem:[%s219 + $0x60] sm:$0xff]
      %v247 = vld [vmem:[%s219 + $0x68] sm:$0xff]
      %v248 = vld [vmem:[%s219 + $0x70] sm:$0xff]
      %v249 = vld [vmem:[%s219 + $0x78] sm:$0xff]
      %v250 = vld [vmem:[%s219 + $0x80] sm:$0xff]
      %v251 = vld [vmem:[%s219 + $0x88] sm:$0xff]
      %v252 = vld [vmem:[%s219 + $0x90] sm:$0xff]
      %v253 = vld [vmem:[%s219 + $0x98] sm:$0xff]
      %v254 = vld [vmem:[%s219 + $0xa0] sm:$0xff]
      %v255 = vld [vmem:[%s219 + $0xa8] sm:$0xff]
      %v256 = vld [vmem:[%s219 + $0xb0] sm:$0xff]
      %v257 = vld [vmem:[%s219 + $0xb8] sm:$0xff]
      %v258 = vld [vmem:[%s219 + $0xc0] sm:$0xff]
      %v259 = vld [vmem:[%s219 + $0xc8] sm:$0xff]
      %v260 = vld [vmem:[%s219 + $0xd0] sm:$0xff]
      %v261 = vld [vmem:[%s219 + $0xd8] sm:$0xff]
      %v262 = vld [vmem:[%s219 + $0xe0] sm:$0xff]
      %v263 = vld [vmem:[%s219 + $0xe8] sm:$0xff]
      %v264 = vld [vmem:[%s219 + $0xf0] sm:$0xff]
      %v265 = vld [vmem:[%s219 + $0xf8] sm:$0xff]
      %v266 = vpack.c.bf16 %v235, %v234
      %v267 = vpack.c.bf16 %v237, %v236
      %v268 = vpack.c.bf16 %v239, %v238
      %v269 = vpack.c.bf16 %v241, %v240
      %v270 = vpack.c.bf16 %v243, %v242
      %v271 = vpack.c.bf16 %v245, %v244
      %v272 = vpack.c.bf16 %v247, %v246
      %v273 = vpack.c.bf16 %v249, %v248
      %v274 = vpack.c.bf16 %v251, %v250
      %v275 = vpack.c.bf16 %v253, %v252
      %v276 = vpack.c.bf16 %v255, %v254
      %v277 = vpack.c.bf16 %v257, %v256
      %v278 = vpack.c.bf16 %v259, %v258
      %v279 = vpack.c.bf16 %v261, %v260
      %v280 = vpack.c.bf16 %v263, %v262
      %v281 = vpack.c.bf16 %v265, %v264
      %v282 = vld [vmem:[%s1] sm:$0x3]
      %v283 = vlaneseq
      %v284 = vshrl.u32 %v283, 7
      %v285 = vsub.s32 0, %v284
      %v286 = vrot.slane %v226, %v285
      %vm287 = vcmask 31744
      %v289 = vsel %vm287, %v266, 0
      %v292 = vsel %vm287, %v267, 0
      %v295 = vsel %vm287, %v268, 0
      %v298 = vsel %vm287, %v269, 0
      %v301 = vsel %vm287, %v270, 0
      %v304 = vsel %vm287, %v271, 0
      %v307 = vsel %vm287, %v272, 0
      %v310 = vsel %vm287, %v273, 0
      %v313 = vsel %vm287, %v274, 0
      %v316 = vsel %vm287, %v275, 0
      %v319 = vsel %vm287, %v276, 0
      %v322 = vsel %vm287, %v277, 0
      %v325 = vsel %vm287, %v278, 0
      %v328 = vsel %vm287, %v279, 0
      %v331 = vsel %vm287, %v280, 0
      %v334 = vsel %vm287, %v281, 0
      %vm336 = vcmask 1041408
      %v338 = vsel %vm336, %v282, 0
      %340 = vmatprep.subr.bf16.mxu0 0
      %341 = vmatpush1.bf16.msra.mxu0 0
      %342 = vmatprep.subr.bf16.mxu0 0
      %343 = vmatpush1.bf16.msra.mxu0 0
      %344 = vmatprep.subr.bf16.mxu0 0
      %345 = vmatpush1.bf16.msra.mxu0 0
      %346 = vmatprep.subr.bf16.mxu0 0
      %347 = vmatpush1.bf16.msra.mxu0 0
      %348 = vmatprep.subr.bf16.mxu0 0
      %349 = vmatpush1.bf16.msra.mxu0 0
      %350 = vmatprep.subr.bf16.mxu0 0
      %351 = vmatpush1.bf16.msra.mxu0 0
      %352 = vmatprep.subr.bf16.mxu0 0
      %353 = vmatpush1.bf16.msra.mxu0 0
      %354 = vmatprep.subr.bf16.mxu0 0
      %355 = vmatpush1.bf16.msra.mxu0 %v338
      %356 = vmatprep.subr.bf16.mxu0 0
      %357 = vmatpush2.bf16.msra.mxu0 0
      %358 = vmatprep.subr.bf16.mxu0 0
      %359 = vmatpush2.bf16.msra.mxu0 0
      %360 = vmatprep.subr.bf16.mxu0 0
      %361 = vmatpush2.bf16.msra.mxu0 0
      %362 = vmatprep.subr.bf16.mxu0 0
      %363 = vmatpush2.bf16.msra.mxu0 0
      %364 = vmatprep.subr.bf16.mxu0 0
      %365 = vmatpush2.bf16.msra.mxu0 0
      %366 = vmatprep.subr.bf16.mxu0 0
      %367 = vmatpush2.bf16.msra.mxu0 0
      %368 = vmatprep.subr.bf16.mxu0 0
      %369 = vmatpush2.bf16.msra.mxu0 0
      %370 = vmatprep.subr.bf16.mxu0 0
      %371 = vmatpush2.bf16.msra.mxu0 0
      %372 = vmatprep.mubr.bf16.mxu0 0
      %373 = vmatmul.mubr.bf16.gmra.mxu0 %v289
      %v374 = vpop.f32.mrf.mxu0
      %v375 = vadd.f32 %v286, %v374
      %v376 = vpop.f32.mrf.mxu0
      %v377 = vpop.f32.mrf.mxu0
      %v378 = vadd.f32 %v286, %v377
      %v379 = vpop.f32.mrf.mxu0
      %380 = vmatprep.mubr.bf16.mxu0 0
      %381 = vmatmul.mubr.bf16.gmra.mxu0 %v292
      %v382 = vpop.f32.mrf.mxu0
      %v383 = vadd.f32 %v286, %v382
      %v384 = vpop.f32.mrf.mxu0
      %v385 = vpop.f32.mrf.mxu0
      %v386 = vadd.f32 %v286, %v385
      %v387 = vpop.f32.mrf.mxu0
      %388 = vmatprep.mubr.bf16.mxu0 0
      %389 = vmatmul.mubr.bf16.gmra.mxu0 %v295
      %v390 = vpop.f32.mrf.mxu0
      %v391 = vadd.f32 %v286, %v390
      %v392 = vpop.f32.mrf.mxu0
      %v393 = vpop.f32.mrf.mxu0
      %v394 = vadd.f32 %v286, %v393
      %v395 = vpop.f32.mrf.mxu0
      %396 = vmatprep.mubr.bf16.mxu0 0
      %397 = vmatmul.mubr.bf16.gmra.mxu0 %v298
      %v398 = vpop.f32.mrf.mxu0
      %v399 = vadd.f32 %v286, %v398
      %v400 = vpop.f32.mrf.mxu0
      %v401 = vpop.f32.mrf.mxu0
      %v402 = vadd.f32 %v286, %v401
      %v403 = vpop.f32.mrf.mxu0
      %404 = vmatprep.mubr.bf16.mxu0 0
      %405 = vmatmul.mubr.bf16.gmra.mxu0 %v301
      %v406 = vpop.f32.mrf.mxu0
      %v407 = vadd.f32 %v286, %v406
      %v408 = vpop.f32.mrf.mxu0
      %v409 = vpop.f32.mrf.mxu0
      %v410 = vadd.f32 %v286, %v409
      %v411 = vpop.f32.mrf.mxu0
      %412 = vmatprep.mubr.bf16.mxu0 0
      %413 = vmatmul.mubr.bf16.gmra.mxu0 %v304
      %v414 = vpop.f32.mrf.mxu0
      %v415 = vadd.f32 %v286, %v414
      %v416 = vpop.f32.mrf.mxu0
      %v417 = vpop.f32.mrf.mxu0
      %v418 = vadd.f32 %v286, %v417
      %v419 = vpop.f32.mrf.mxu0
      %420 = vmatprep.mubr.bf16.mxu0 0
      %421 = vmatmul.mubr.bf16.gmra.mxu0 %v307
      %v422 = vpop.f32.mrf.mxu0
      %v423 = vadd.f32 %v286, %v422
      %v424 = vpop.f32.mrf.mxu0
      %v425 = vpop.f32.mrf.mxu0
      %v426 = vadd.f32 %v286, %v425
      %v427 = vpop.f32.mrf.mxu0
      %428 = vmatprep.mubr.bf16.mxu0 0
      %429 = vmatmul.mubr.bf16.gmra.mxu0 %v310
      %v430 = vpop.f32.mrf.mxu0
      %v431 = vadd.f32 %v286, %v430
      %v432 = vpop.f32.mrf.mxu0
      %v433 = vpop.f32.mrf.mxu0
      %v434 = vadd.f32 %v286, %v433
      %v435 = vpop.f32.mrf.mxu0
      %436 = vmatprep.mubr.bf16.mxu0 0
      %437 = vmatmul.mubr.bf16.gmra.mxu0 %v313
      %v438 = vpop.f32.mrf.mxu0
      %v439 = vadd.f32 %v286, %v438
      %v440 = vpop.f32.mrf.mxu0
      %v441 = vpop.f32.mrf.mxu0
      %v442 = vadd.f32 %v286, %v441
      %v443 = vpop.f32.mrf.mxu0
      %444 = vmatprep.mubr.bf16.mxu0 0
      %445 = vmatmul.mubr.bf16.gmra.mxu0 %v316
      %v446 = vpop.f32.mrf.mxu0
      %v447 = vadd.f32 %v286, %v446
      %v448 = vpop.f32.mrf.mxu0
      %v449 = vpop.f32.mrf.mxu0
      %v450 = vadd.f32 %v286, %v449
      %v451 = vpop.f32.mrf.mxu0
      %452 = vmatprep.mubr.bf16.mxu0 0
      %453 = vmatmul.mubr.bf16.gmra.mxu0 %v319
      %v454 = vpop.f32.mrf.mxu0
      %v455 = vadd.f32 %v286, %v454
      %v456 = vpop.f32.mrf.mxu0
      %v457 = vpop.f32.mrf.mxu0
      %v458 = vadd.f32 %v286, %v457
      %v459 = vpop.f32.mrf.mxu0
      %460 = vmatprep.mubr.bf16.mxu0 0
      %461 = vmatmul.mubr.bf16.gmra.mxu0 %v322
      %v462 = vpop.f32.mrf.mxu0
      %v463 = vadd.f32 %v286, %v462
      %v464 = vpop.f32.mrf.mxu0
      %v465 = vpop.f32.mrf.mxu0
      %v466 = vadd.f32 %v286, %v465
      %v467 = vpop.f32.mrf.mxu0
      %468 = vmatprep.mubr.bf16.mxu0 0
      %469 = vmatmul.mubr.bf16.gmra.mxu0 %v325
      %v470 = vpop.f32.mrf.mxu0
      %v471 = vadd.f32 %v286, %v470
      %v472 = vpop.f32.mrf.mxu0
      %v473 = vpop.f32.mrf.mxu0
      %v474 = vadd.f32 %v286, %v473
      %v475 = vpop.f32.mrf.mxu0
      %476 = vmatprep.mubr.bf16.mxu0 0
      %477 = vmatmul.mubr.bf16.gmra.mxu0 %v328
      %v478 = vpop.f32.mrf.mxu0
      %v479 = vadd.f32 %v286, %v478
      %v480 = vpop.f32.mrf.mxu0
      %v481 = vpop.f32.mrf.mxu0
      %v482 = vadd.f32 %v286, %v481
      %v483 = vpop.f32.mrf.mxu0
      %484 = vmatprep.mubr.bf16.mxu0 0
      %485 = vmatmul.mubr.bf16.gmra.mxu0 %v331
      %v486 = vpop.f32.mrf.mxu0
      %v487 = vadd.f32 %v286, %v486
      %v488 = vpop.f32.mrf.mxu0
      %v489 = vpop.f32.mrf.mxu0
      %v490 = vadd.f32 %v286, %v489
      %v491 = vpop.f32.mrf.mxu0
      %492 = vmatprep.mubr.bf16.mxu0 0
      %493 = vmatmul.mubr.bf16.gmra.mxu0 %v334
      %v494 = vpop.f32.mrf.mxu0
      %v495 = vadd.f32 %v286, %v494
      %v496 = vpop.f32.mrf.mxu0
      %v497 = vpop.f32.mrf.mxu0
      %v498 = vadd.f32 %v286, %v497
      %v499 = vpop.f32.mrf.mxu0
      %500 = vdwg.mxu0
      %vm501 = vcmask 130048
      %502 = vst.msk [vmem:[#allocation2 + $0x18] sm:$0xff] %vm501, %v375
      %503 = vst.msk [vmem:[#allocation2 + $0x20] sm:$0xff] %vm501, %v378
      %504 = vst.msk [vmem:[#allocation2 + $0x28] sm:$0xff] %vm501, %v383
      %505 = vst.msk [vmem:[#allocation2 + $0x30] sm:$0xff] %vm501, %v386
      %506 = vst.msk [vmem:[#allocation2 + $0x38] sm:$0xff] %vm501, %v391
      %507 = vst.msk [vmem:[#allocation2 + $0x40] sm:$0xff] %vm501, %v394
      %508 = vst.msk [vmem:[#allocation2 + $0x48] sm:$0xff] %vm501, %v399
      %509 = vst.msk [vmem:[#allocation2 + $0x50] sm:$0xff] %vm501, %v402
      %510 = vst.msk [vmem:[#allocation2 + $0x58] sm:$0xff] %vm501, %v407
      %511 = vst.msk [vmem:[#allocation2 + $0x60] sm:$0xff] %vm501, %v410
      %512 = vst.msk [vmem:[#allocation2 + $0x68] sm:$0xff] %vm501, %v415
      %513 = vst.msk [vmem:[#allocation2 + $0x70] sm:$0xff] %vm501, %v418
      %514 = vst.msk [vmem:[#allocation2 + $0x78] sm:$0xff] %vm501, %v423
      %515 = vst.msk [vmem:[#allocation2 + $0x80] sm:$0xff] %vm501, %v426
      %516 = vst.msk [vmem:[#allocation2 + $0x88] sm:$0xff] %vm501, %v431
      %517 = vst.msk [vmem:[#allocation2 + $0x90] sm:$0xff] %vm501, %v434
      %518 = vst.msk [vmem:[#allocation2 + $0x98] sm:$0xff] %vm501, %v439
      %519 = vst.msk [vmem:[#allocation2 + $0xa0] sm:$0xff] %vm501, %v442
      %520 = vst.msk [vmem:[#allocation2 + $0xa8] sm:$0xff] %vm501, %v447
      %521 = vst.msk [vmem:[#allocation2 + $0xb0] sm:$0xff] %vm501, %v450
      %522 = vst.msk [vmem:[#allocation2 + $0xb8] sm:$0xff] %vm501, %v455
      %523 = vst.msk [vmem:[#allocation2 + $0xc0] sm:$0xff] %vm501, %v458
      %524 = vst.msk [vmem:[#allocation2 + $0xc8] sm:$0xff] %vm501, %v463
      %525 = vst.msk [vmem:[#allocation2 + $0xd0] sm:$0xff] %vm501, %v466
      %526 = vst.msk [vmem:[#allocation2 + $0xd8] sm:$0xff] %vm501, %v471
      %527 = vst.msk [vmem:[#allocation2 + $0xe0] sm:$0xff] %vm501, %v474
      %528 = vst.msk [vmem:[#allocation2 + $0xe8] sm:$0xff] %vm501, %v479
      %529 = vst.msk [vmem:[#allocation2 + $0xf0] sm:$0xff] %vm501, %v482
      %530 = vst.msk [vmem:[#allocation2 + $0xf8] sm:$0xff] %vm501, %v487
      %531 = vst.msk [vmem:[#allocation2 + $0x100] sm:$0xff] %vm501, %v490
      %532 = vst.msk [vmem:[#allocation2 + $0x108] sm:$0xff] %vm501, %v495
      %533 = vst.msk [vmem:[#allocation2 + $0x110] sm:$0xff] %vm501, %v498
      %v534 = vlaneseq
      %v535 = vshrl.u32 %v534, 7
      %v536 = vadd.s32 %v535, 8
      %v537 = vadd.s32 %v535, 16
      %v538 = vadd.s32 %v535, 24
      %v539 = vadd.s32 %v535, 32
      %v540 = vadd.s32 %v535, 40
      %v541 = vadd.s32 %v535, 48
      %v542 = vadd.s32 %v535, 56
      %v543 = vadd.s32 %v535, 64
      %v544 = vadd.s32 %v535, 72
      %v545 = vadd.s32 %v535, 80
      %v546 = vadd.s32 %v535, 88
      %v547 = vadd.s32 %v535, 96
      %v548 = vadd.s32 %v535, 104
      %v549 = vadd.s32 %v535, 112
      %v550 = vadd.s32 %v535, 120
      %v551 = vadd.s32 %v535, 128
      %v552 = vadd.s32 %v535, 136
      %v553 = vadd.s32 %v535, 144
      %v554 = vadd.s32 %v535, 152
      %v555 = vadd.s32 %v535, 160
      %v556 = vadd.s32 %v535, 168
      %v557 = vadd.s32 %v535, 176
      %v558 = vadd.s32 %v535, 184
      %v559 = vadd.s32 %v535, 192
      %v560 = vadd.s32 %v535, 200
      %v561 = vadd.s32 %v535, 208
      %v562 = vadd.s32 %v535, 216
      %v563 = vadd.s32 %v535, 224
      %v564 = vadd.s32 %v535, 232
      %v565 = vadd.s32 %v535, 240
      %v566 = vadd.s32 %v535, 248
      %vm567 = vcmp.lt.s32.totalorder %v535, 0
      %v568 = vsub.s32 0, %v535
      %v569 = vsel %vm567, %v568, %v535
      %v570 = vshrl.u32 %v569, 4
      %v571 = vand.u32 %v569, 15
      %v572 = vsub.s32 0, %v571
      %v573 = vsel %vm567, %v572, %v571
      %vm574 = vcmp.lt.s32.totalorder %v536, 0
      %v575 = vsub.s32 0, %v536
      %v576 = vsel %vm574, %v575, %v536
      %v577 = vshrl.u32 %v576, 4
      %v578 = vand.u32 %v576, 15
      %v579 = vsub.s32 0, %v578
      %v580 = vsel %vm574, %v579, %v578
      %vm581 = vcmp.lt.s32.totalorder %v537, 0
      %v582 = vsub.s32 0, %v537
      %v583 = vsel %vm581, %v582, %v537
      %v584 = vshrl.u32 %v583, 4
      %v585 = vand.u32 %v583, 15
      %v586 = vsub.s32 0, %v585
      %v587 = vsel %vm581, %v586, %v585
      %vm588 = vcmp.lt.s32.totalorder %v538, 0
      %v589 = vsub.s32 0, %v538
      %v590 = vsel %vm588, %v589, %v538
      %v591 = vshrl.u32 %v590, 4
      %v592 = vand.u32 %v590, 15
      %v593 = vsub.s32 0, %v592
      %v594 = vsel %vm588, %v593, %v592
      %vm595 = vcmp.lt.s32.totalorder %v539, 0
      %v596 = vsub.s32 0, %v539
      %v597 = vsel %vm595, %v596, %v539
      %v598 = vshrl.u32 %v597, 4
      %v599 = vand.u32 %v597, 15
      %v600 = vsub.s32 0, %v599
      %v601 = vsel %vm595, %v600, %v599
      %vm602 = vcmp.lt.s32.totalorder %v540, 0
      %v603 = vsub.s32 0, %v540
      %v604 = vsel %vm602, %v603, %v540
      %v605 = vshrl.u32 %v604, 4
      %v606 = vand.u32 %v604, 15
      %v607 = vsub.s32 0, %v606
      %v608 = vsel %vm602, %v607, %v606
      %vm609 = vcmp.lt.s32.totalorder %v541, 0
      %v610 = vsub.s32 0, %v541
      %v611 = vsel %vm609, %v610, %v541
      %v612 = vshrl.u32 %v611, 4
      %v613 = vand.u32 %v611, 15
      %v614 = vsub.s32 0, %v613
      %v615 = vsel %vm609, %v614, %v613
      %vm616 = vcmp.lt.s32.totalorder %v542, 0
      %v617 = vsub.s32 0, %v542
      %v618 = vsel %vm616, %v617, %v542
      %v619 = vshrl.u32 %v618, 4
      %v620 = vand.u32 %v618, 15
      %v621 = vsub.s32 0, %v620
      %v622 = vsel %vm616, %v621, %v620
      %vm623 = vcmp.lt.s32.totalorder %v543, 0
      %v624 = vsub.s32 0, %v543
      %v625 = vsel %vm623, %v624, %v543
      %v626 = vshrl.u32 %v625, 4
      %v627 = vand.u32 %v625, 15
      %v628 = vsub.s32 0, %v627
      %v629 = vsel %vm623, %v628, %v627
      %vm630 = vcmp.lt.s32.totalorder %v544, 0
      %v631 = vsub.s32 0, %v544
      %v632 = vsel %vm630, %v631, %v544
      %v633 = vshrl.u32 %v632, 4
      %v634 = vand.u32 %v632, 15
      %v635 = vsub.s32 0, %v634
      %v636 = vsel %vm630, %v635, %v634
      %vm637 = vcmp.lt.s32.totalorder %v545, 0
      %v638 = vsub.s32 0, %v545
      %v639 = vsel %vm637, %v638, %v545
      %v640 = vshrl.u32 %v639, 4
      %v641 = vand.u32 %v639, 15
      %v642 = vsub.s32 0, %v641
      %v643 = vsel %vm637, %v642, %v641
      %vm644 = vcmp.lt.s32.totalorder %v546, 0
      %v645 = vsub.s32 0, %v546
      %v646 = vsel %vm644, %v645, %v546
      %v647 = vshrl.u32 %v646, 4
      %v648 = vand.u32 %v646, 15
      %v649 = vsub.s32 0, %v648
      %v650 = vsel %vm644, %v649, %v648
      %vm651 = vcmp.lt.s32.totalorder %v547, 0
      %v652 = vsub.s32 0, %v547
      %v653 = vsel %vm651, %v652, %v547
      %v654 = vshrl.u32 %v653, 4
      %v655 = vand.u32 %v653, 15
      %v656 = vsub.s32 0, %v655
      %v657 = vsel %vm651, %v656, %v655
      %vm658 = vcmp.lt.s32.totalorder %v548, 0
      %v659 = vsub.s32 0, %v548
      %v660 = vsel %vm658, %v659, %v548
      %v661 = vshrl.u32 %v660, 4
      %v662 = vand.u32 %v660, 15
      %v663 = vsub.s32 0, %v662
      %v664 = vsel %vm658, %v663, %v662
      %vm665 = vcmp.lt.s32.totalorder %v549, 0
      %v666 = vsub.s32 0, %v549
      %v667 = vsel %vm665, %v666, %v549
      %v668 = vshrl.u32 %v667, 4
      %v669 = vand.u32 %v667, 15
      %v670 = vsub.s32 0, %v669
      %v671 = vsel %vm665, %v670, %v669
      %vm672 = vcmp.lt.s32.totalorder %v550, 0
      %v673 = vsub.s32 0, %v550
      %v674 = vsel %vm672, %v673, %v550
      %v675 = vshrl.u32 %v674, 4
      %v676 = vand.u32 %v674, 15
      %v677 = vsub.s32 0, %v676
      %v678 = vsel %vm672, %v677, %v676
      %vm679 = vcmp.lt.s32.totalorder %v551, 0
      %v680 = vsub.s32 0, %v551
      %v681 = vsel %vm679, %v680, %v551
      %v682 = vshrl.u32 %v681, 4
      %v683 = vand.u32 %v681, 15
      %v684 = vsub.s32 0, %v683
      %v685 = vsel %vm679, %v684, %v683
      %vm686 = vcmp.lt.s32.totalorder %v552, 0
      %v687 = vsub.s32 0, %v552
      %v688 = vsel %vm686, %v687, %v552
      %v689 = vshrl.u32 %v688, 4
      %v690 = vand.u32 %v688, 15
      %v691 = vsub.s32 0, %v690
      %v692 = vsel %vm686, %v691, %v690
      %vm693 = vcmp.lt.s32.totalorder %v553, 0
      %v694 = vsub.s32 0, %v553
      %v695 = vsel %vm693, %v694, %v553
      %v696 = vshrl.u32 %v695, 4
      %v697 = vand.u32 %v695, 15
      %v698 = vsub.s32 0, %v697
      %v699 = vsel %vm693, %v698, %v697
      %vm700 = vcmp.lt.s32.totalorder %v554, 0
      %v701 = vsub.s32 0, %v554
      %v702 = vsel %vm700, %v701, %v554
      %v703 = vshrl.u32 %v702, 4
      %v704 = vand.u32 %v702, 15
      %v705 = vsub.s32 0, %v704
      %v706 = vsel %vm700, %v705, %v704
      %vm707 = vcmp.lt.s32.totalorder %v555, 0
      %v708 = vsub.s32 0, %v555
      %v709 = vsel %vm707, %v708, %v555
      %v710 = vshrl.u32 %v709, 4
      %v711 = vand.u32 %v709, 15
      %v712 = vsub.s32 0, %v711
      %v713 = vsel %vm707, %v712, %v711
      %vm714 = vcmp.lt.s32.totalorder %v556, 0
      %v715 = vsub.s32 0, %v556
      %v716 = vsel %vm714, %v715, %v556
      %v717 = vshrl.u32 %v716, 4
      %v718 = vand.u32 %v716, 15
      %v719 = vsub.s32 0, %v718
      %v720 = vsel %vm714, %v719, %v718
      %vm721 = vcmp.lt.s32.totalorder %v557, 0
      %v722 = vsub.s32 0, %v557
      %v723 = vsel %vm721, %v722, %v557
      %v724 = vshrl.u32 %v723, 4
      %v725 = vand.u32 %v723, 15
      %v726 = vsub.s32 0, %v725
      %v727 = vsel %vm721, %v726, %v725
      %vm728 = vcmp.lt.s32.totalorder %v558, 0
      %v729 = vsub.s32 0, %v558
      %v730 = vsel %vm728, %v729, %v558
      %v731 = vshrl.u32 %v730, 4
      %v732 = vand.u32 %v730, 15
      %v733 = vsub.s32 0, %v732
      %v734 = vsel %vm728, %v733, %v732
      %vm735 = vcmp.lt.s32.totalorder %v559, 0
      %v736 = vsub.s32 0, %v559
      %v737 = vsel %vm735, %v736, %v559
      %v738 = vshrl.u32 %v737, 4
      %v739 = vand.u32 %v737, 15
      %v740 = vsub.s32 0, %v739
      %v741 = vsel %vm735, %v740, %v739
      %vm742 = vcmp.lt.s32.totalorder %v560, 0
      %v743 = vsub.s32 0, %v560
      %v744 = vsel %vm742, %v743, %v560
      %v745 = vshrl.u32 %v744, 4
      %v746 = vand.u32 %v744, 15
      %v747 = vsub.s32 0, %v746
      %v748 = vsel %vm742, %v747, %v746
      %vm749 = vcmp.lt.s32.totalorder %v561, 0
      %v750 = vsub.s32 0, %v561
      %v751 = vsel %vm749, %v750, %v561
      %v752 = vshrl.u32 %v751, 4
      %v753 = vand.u32 %v751, 15
      %v754 = vsub.s32 0, %v753
      %v755 = vsel %vm749, %v754, %v753
      %vm756 = vcmp.lt.s32.totalorder %v562, 0
      %v757 = vsub.s32 0, %v562
      %v758 = vsel %vm756, %v757, %v562
      %v759 = vshrl.u32 %v758, 4
      %v760 = vand.u32 %v758, 15
      %v761 = vsub.s32 0, %v760
      %v762 = vsel %vm756, %v761, %v760
      %vm763 = vcmp.lt.s32.totalorder %v563, 0
      %v764 = vsub.s32 0, %v563
      %v765 = vsel %vm763, %v764, %v563
      %v766 = vshrl.u32 %v765, 4
      %v767 = vand.u32 %v765, 15
      %v768 = vsub.s32 0, %v767
      %v769 = vsel %vm763, %v768, %v767
      %vm770 = vcmp.lt.s32.totalorder %v564, 0
      %v771 = vsub.s32 0, %v564
      %v772 = vsel %vm770, %v771, %v564
      %v773 = vshrl.u32 %v772, 4
      %v774 = vand.u32 %v772, 15
      %v775 = vsub.s32 0, %v774
      %v776 = vsel %vm770, %v775, %v774
      %vm777 = vcmp.lt.s32.totalorder %v565, 0
      %v778 = vsub.s32 0, %v565
      %v779 = vsel %vm777, %v778, %v565
      %v780 = vshrl.u32 %v779, 4
      %v781 = vand.u32 %v779, 15
      %v782 = vsub.s32 0, %v781
      %v783 = vsel %vm777, %v782, %v781
      %vm784 = vcmp.lt.s32.totalorder %v566, 0
      %v785 = vsub.s32 0, %v566
      %v786 = vsel %vm784, %v785, %v566
      %v787 = vshrl.u32 %v786, 4
      %v788 = vand.u32 %v786, 15
      %v789 = vsub.s32 0, %v788
      %v790 = vsel %vm784, %v789, %v788
      %vm791 = vcmp.ne.s32.totalorder %v573, 0
      %vm792 = vcmp.ne.s32.totalorder %v580, 0
      %vm793 = vcmp.ne.s32.totalorder %v587, 0
      %vm794 = vcmp.ne.s32.totalorder %v594, 0
      %vm795 = vcmp.ne.s32.totalorder %v601, 0
      %vm796 = vcmp.ne.s32.totalorder %v608, 0
      %vm797 = vcmp.ne.s32.totalorder %v615, 0
      %vm798 = vcmp.ne.s32.totalorder %v622, 0
      %vm799 = vcmp.ne.s32.totalorder %v629, 0
      %vm800 = vcmp.ne.s32.totalorder %v636, 0
      %vm801 = vcmp.ne.s32.totalorder %v643, 0
      %vm802 = vcmp.ne.s32.totalorder %v650, 0
      %vm803 = vcmp.ne.s32.totalorder %v657, 0
      %vm804 = vcmp.ne.s32.totalorder %v664, 0
      %vm805 = vcmp.ne.s32.totalorder %v671, 0
      %vm806 = vcmp.ne.s32.totalorder %v678, 0
      %vm807 = vcmp.ne.s32.totalorder %v685, 0
      %vm808 = vcmp.ne.s32.totalorder %v692, 0
      %vm809 = vcmp.ne.s32.totalorder %v699, 0
      %vm810 = vcmp.ne.s32.totalorder %v706, 0
      %vm811 = vcmp.ne.s32.totalorder %v713, 0
      %vm812 = vcmp.ne.s32.totalorder %v720, 0
      %vm813 = vcmp.ne.s32.totalorder %v727, 0
      %vm814 = vcmp.ne.s32.totalorder %v734, 0
      %vm815 = vcmp.ne.s32.totalorder %v741, 0
      %vm816 = vcmp.ne.s32.totalorder %v748, 0
      %vm817 = vcmp.ne.s32.totalorder %v755, 0
      %vm818 = vcmp.ne.s32.totalorder %v762, 0
      %vm819 = vcmp.ne.s32.totalorder %v769, 0
      %vm820 = vcmp.ne.s32.totalorder %v776, 0
      %vm821 = vcmp.ne.s32.totalorder %v783, 0
      %vm822 = vcmp.ne.s32.totalorder %v790, 0
      %vm823 = vcmp.lt.s32.totalorder %v573, 0
      %vm824 = vcmp.lt.s32.totalorder %v580, 0
      %vm825 = vcmp.lt.s32.totalorder %v587, 0
      %vm826 = vcmp.lt.s32.totalorder %v594, 0
      %vm827 = vcmp.lt.s32.totalorder %v601, 0
      %vm828 = vcmp.lt.s32.totalorder %v608, 0
      %vm829 = vcmp.lt.s32.totalorder %v615, 0
      %vm830 = vcmp.lt.s32.totalorder %v622, 0
      %vm831 = vcmp.lt.s32.totalorder %v629, 0
      %vm832 = vcmp.lt.s32.totalorder %v636, 0
      %vm833 = vcmp.lt.s32.totalorder %v643, 0
      %vm834 = vcmp.lt.s32.totalorder %v650, 0
      %vm835 = vcmp.lt.s32.totalorder %v657, 0
      %vm836 = vcmp.lt.s32.totalorder %v664, 0
      %vm837 = vcmp.lt.s32.totalorder %v671, 0
      %vm838 = vcmp.lt.s32.totalorder %v678, 0
      %vm839 = vcmp.lt.s32.totalorder %v685, 0
      %vm840 = vcmp.lt.s32.totalorder %v692, 0
      %vm841 = vcmp.lt.s32.totalorder %v699, 0
      %vm842 = vcmp.lt.s32.totalorder %v706, 0
      %vm843 = vcmp.lt.s32.totalorder %v713, 0
      %vm844 = vcmp.lt.s32.totalorder %v720, 0
      %vm845 = vcmp.lt.s32.totalorder %v727, 0
      %vm846 = vcmp.lt.s32.totalorder %v734, 0
      %vm847 = vcmp.lt.s32.totalorder %v741, 0
      %vm848 = vcmp.lt.s32.totalorder %v748, 0
      %vm849 = vcmp.lt.s32.totalorder %v755, 0
      %vm850 = vcmp.lt.s32.totalorder %v762, 0
      %vm851 = vcmp.lt.s32.totalorder %v769, 0
      %vm852 = vcmp.lt.s32.totalorder %v776, 0
      %vm853 = vcmp.lt.s32.totalorder %v783, 0
      %vm854 = vcmp.lt.s32.totalorder %v790, 0
      %vm855 = vmand %vm823, %vm791
      %vm856 = vmand %vm824, %vm792
      %vm857 = vmand %vm825, %vm793
      %vm858 = vmand %vm826, %vm794
      %vm859 = vmand %vm827, %vm795
      %vm860 = vmand %vm828, %vm796
      %vm861 = vmand %vm829, %vm797
      %vm862 = vmand %vm830, %vm798
      %vm863 = vmand %vm831, %vm799
      %vm864 = vmand %vm832, %vm800
      %vm865 = vmand %vm833, %vm801
      %vm866 = vmand %vm834, %vm802
      %vm867 = vmand %vm835, %vm803
      %vm868 = vmand %vm836, %vm804
      %vm869 = vmand %vm837, %vm805
      %vm870 = vmand %vm838, %vm806
      %vm871 = vmand %vm839, %vm807
      %vm872 = vmand %vm840, %vm808
      %vm873 = vmand %vm841, %vm809
      %vm874 = vmand %vm842, %vm810
      %vm875 = vmand %vm843, %vm811
      %vm876 = vmand %vm844, %vm812
      %vm877 = vmand %vm845, %vm813
      %vm878 = vmand %vm846, %vm814
      %vm879 = vmand %vm847, %vm815
      %vm880 = vmand %vm848, %vm816
      %vm881 = vmand %vm849, %vm817
      %vm882 = vmand %vm850, %vm818
      %vm883 = vmand %vm851, %vm819
      %vm884 = vmand %vm852, %vm820
      %vm885 = vmand %vm853, %vm821
      %vm886 = vmand %vm854, %vm822
      %v887 = vadd.s32 %v573, 16
      %v888 = vadd.s32 %v580, 16
      %v889 = vadd.s32 %v587, 16
      %v890 = vadd.s32 %v594, 16
      %v891 = vadd.s32 %v601, 16
      %v892 = vadd.s32 %v608, 16
      %v893 = vadd.s32 %v615, 16
      %v894 = vadd.s32 %v622, 16
      %v895 = vadd.s32 %v629, 16
      %v896 = vadd.s32 %v636, 16
      %v897 = vadd.s32 %v643, 16
      %v898 = vadd.s32 %v650, 16
      %v899 = vadd.s32 %v657, 16
      %v900 = vadd.s32 %v664, 16
      %v901 = vadd.s32 %v671, 16
      %v902 = vadd.s32 %v678, 16
      %v903 = vadd.s32 %v685, 16
      %v904 = vadd.s32 %v692, 16
      %v905 = vadd.s32 %v699, 16
      %v906 = vadd.s32 %v706, 16
      %v907 = vadd.s32 %v713, 16
      %v908 = vadd.s32 %v720, 16
      %v909 = vadd.s32 %v727, 16
      %v910 = vadd.s32 %v734, 16
      %v911 = vadd.s32 %v741, 16
      %v912 = vadd.s32 %v748, 16
      %v913 = vadd.s32 %v755, 16
      %v914 = vadd.s32 %v762, 16
      %v915 = vadd.s32 %v769, 16
      %v916 = vadd.s32 %v776, 16
      %v917 = vadd.s32 %v783, 16
      %v918 = vadd.s32 %v790, 16
      %v919 = vsel %vm855, %v887, %v573
      %v920 = vsel %vm856, %v888, %v580
      %v921 = vsel %vm857, %v889, %v587
      %v922 = vsel %vm858, %v890, %v594
      %v923 = vsel %vm859, %v891, %v601
      %v924 = vsel %vm860, %v892, %v608
      %v925 = vsel %vm861, %v893, %v615
      %v926 = vsel %vm862, %v894, %v622
      %v927 = vsel %vm863, %v895, %v629
      %v928 = vsel %vm864, %v896, %v636
      %v929 = vsel %vm865, %v897, %v643
      %v930 = vsel %vm866, %v898, %v650
      %v931 = vsel %vm867, %v899, %v657
      %v932 = vsel %vm868, %v900, %v664
      %v933 = vsel %vm869, %v901, %v671
      %v934 = vsel %vm870, %v902, %v678
      %v935 = vsel %vm871, %v903, %v685
      %v936 = vsel %vm872, %v904, %v692
      %v937 = vsel %vm873, %v905, %v699
      %v938 = vsel %vm874, %v906, %v706
      %v939 = vsel %vm875, %v907, %v713
      %v940 = vsel %vm876, %v908, %v720
      %v941 = vsel %vm877, %v909, %v727
      %v942 = vsel %vm878, %v910, %v734
      %v943 = vsel %vm879, %v911, %v741
      %v944 = vsel %vm880, %v912, %v748
      %v945 = vsel %vm881, %v913, %v755
      %v946 = vsel %vm882, %v914, %v762
      %v947 = vsel %vm883, %v915, %v769
      %v948 = vsel %vm884, %v916, %v776
      %v949 = vsel %vm885, %v917, %v783
      %v950 = vsel %vm886, %v918, %v790
      %vm951 = vcmp.ge.s32.totalorder %v919, 1
      %vm952 = vcmp.ge.s32.totalorder %v920, 1
      %vm953 = vcmp.ge.s32.totalorder %v921, 1
      %vm954 = vcmp.ge.s32.totalorder %v922, 1
      %vm955 = vcmp.ge.s32.totalorder %v923, 1
      %vm956 = vcmp.ge.s32.totalorder %v924, 1
      %vm957 = vcmp.ge.s32.totalorder %v925, 1
      %vm958 = vcmp.ge.s32.totalorder %v926, 1
      %vm959 = vcmp.ge.s32.totalorder %v927, 1
      %vm960 = vcmp.ge.s32.totalorder %v928, 1
      %vm961 = vcmp.ge.s32.totalorder %v929, 1
      %vm962 = vcmp.ge.s32.totalorder %v930, 1
      %vm963 = vcmp.ge.s32.totalorder %v931, 1
      %vm964 = vcmp.ge.s32.totalorder %v932, 1
      %vm965 = vcmp.ge.s32.totalorder %v933, 1
      %vm966 = vcmp.ge.s32.totalorder %v934, 1
      %vm967 = vcmp.ge.s32.totalorder %v935, 1
      %vm968 = vcmp.ge.s32.totalorder %v936, 1
      %vm969 = vcmp.ge.s32.totalorder %v937, 1
      %vm970 = vcmp.ge.s32.totalorder %v938, 1
      %vm971 = vcmp.ge.s32.totalorder %v939, 1
      %vm972 = vcmp.ge.s32.totalorder %v940, 1
      %vm973 = vcmp.ge.s32.totalorder %v941, 1
      %vm974 = vcmp.ge.s32.totalorder %v942, 1
      %vm975 = vcmp.ge.s32.totalorder %v943, 1
      %vm976 = vcmp.ge.s32.totalorder %v944, 1
      %vm977 = vcmp.ge.s32.totalorder %v945, 1
      %vm978 = vcmp.ge.s32.totalorder %v946, 1
      %vm979 = vcmp.ge.s32.totalorder %v947, 1
      %vm980 = vcmp.ge.s32.totalorder %v948, 1
      %vm981 = vcmp.ge.s32.totalorder %v949, 1
      %vm982 = vcmp.ge.s32.totalorder %v950, 1
      %vm983 = vcmp.lt.s32.totalorder %v919, 15
      %vm984 = vcmp.lt.s32.totalorder %v920, 15
      %vm985 = vcmp.lt.s32.totalorder %v921, 15
      %vm986 = vcmp.lt.s32.totalorder %v922, 15
      %vm987 = vcmp.lt.s32.totalorder %v923, 15
      %vm988 = vcmp.lt.s32.totalorder %v924, 15
      %vm989 = vcmp.lt.s32.totalorder %v925, 15
      %vm990 = vcmp.lt.s32.totalorder %v926, 15
      %vm991 = vcmp.lt.s32.totalorder %v927, 15
      %vm992 = vcmp.lt.s32.totalorder %v928, 15
      %vm993 = vcmp.lt.s32.totalorder %v929, 15
      %vm994 = vcmp.lt.s32.totalorder %v930, 15
      %vm995 = vcmp.lt.s32.totalorder %v931, 15
      %vm996 = vcmp.lt.s32.totalorder %v932, 15
      %vm997 = vcmp.lt.s32.totalorder %v933, 15
      %vm998 = vcmp.lt.s32.totalorder %v934, 15
      %vm999 = vcmp.lt.s32.totalorder %v935, 15
      %vm1000 = vcmp.lt.s32.totalorder %v936, 15
      %vm1001 = vcmp.lt.s32.totalorder %v937, 15
      %vm1002 = vcmp.lt.s32.totalorder %v938, 15
      %vm1003 = vcmp.lt.s32.totalorder %v939, 15
      %vm1004 = vcmp.lt.s32.totalorder %v940, 15
      %vm1005 = vcmp.lt.s32.totalorder %v941, 15
      %vm1006 = vcmp.lt.s32.totalorder %v942, 15
      %vm1007 = vcmp.lt.s32.totalorder %v943, 15
      %vm1008 = vcmp.lt.s32.totalorder %v944, 15
      %vm1009 = vcmp.lt.s32.totalorder %v945, 15
      %vm1010 = vcmp.lt.s32.totalorder %v946, 15
      %vm1011 = vcmp.lt.s32.totalorder %v947, 15
      %vm1012 = vcmp.lt.s32.totalorder %v948, 15
      %vm1013 = vcmp.lt.s32.totalorder %v949, 15
      %vm1014 = vcmp.lt.s32.totalorder %v950, 15
      %vm1015 = vcmp.ge.s32.totalorder %v535, 16
      %vm1016 = vcmp.ge.s32.totalorder %v536, 16
      %vm1017 = vcmp.ge.s32.totalorder %v537, 16
      %vm1018 = vcmp.ge.s32.totalorder %v538, 16
      %vm1019 = vcmp.ge.s32.totalorder %v539, 16
      %vm1020 = vcmp.ge.s32.totalorder %v540, 16
      %vm1021 = vcmp.ge.s32.totalorder %v541, 16
      %vm1022 = vcmp.ge.s32.totalorder %v542, 16
      %vm1023 = vcmp.ge.s32.totalorder %v543, 16
      %vm1024 = vcmp.ge.s32.totalorder %v544, 16
      %vm1025 = vcmp.ge.s32.totalorder %v545, 16
      %vm1026 = vcmp.ge.s32.totalorder %v546, 16
      %vm1027 = vcmp.ge.s32.totalorder %v547, 16
      %vm1028 = vcmp.ge.s32.totalorder %v548, 16
      %vm1029 = vcmp.ge.s32.totalorder %v549, 16
      %vm1030 = vcmp.ge.s32.totalorder %v550, 16
      %vm1031 = vcmp.ge.s32.totalorder %v551, 16
      %vm1032 = vcmp.ge.s32.totalorder %v552, 16
      %vm1033 = vcmp.ge.s32.totalorder %v553, 16
      %vm1034 = vcmp.ge.s32.totalorder %v554, 16
      %vm1035 = vcmp.ge.s32.totalorder %v555, 16
      %vm1036 = vcmp.ge.s32.totalorder %v556, 16
      %vm1037 = vcmp.ge.s32.totalorder %v557, 16
      %vm1038 = vcmp.ge.s32.totalorder %v558, 16
      %vm1039 = vcmp.ge.s32.totalorder %v559, 16
      %vm1040 = vcmp.ge.s32.totalorder %v560, 16
      %vm1041 = vcmp.ge.s32.totalorder %v561, 16
      %vm1042 = vcmp.ge.s32.totalorder %v562, 16
      %vm1043 = vcmp.ge.s32.totalorder %v563, 16
      %vm1044 = vcmp.ge.s32.totalorder %v564, 16
      %vm1045 = vcmp.ge.s32.totalorder %v565, 16
      %vm1046 = vcmp.ge.s32.totalorder %v566, 16
      %vm1047 = vcmp.lt.s32.totalorder %v535, 240
      %vm1048 = vcmp.lt.s32.totalorder %v536, 240
      %vm1049 = vcmp.lt.s32.totalorder %v537, 240
      %vm1050 = vcmp.lt.s32.totalorder %v538, 240
      %vm1051 = vcmp.lt.s32.totalorder %v539, 240
      %vm1052 = vcmp.lt.s32.totalorder %v540, 240
      %vm1053 = vcmp.lt.s32.totalorder %v541, 240
      %vm1054 = vcmp.lt.s32.totalorder %v542, 240
      %vm1055 = vcmp.lt.s32.totalorder %v543, 240
      %vm1056 = vcmp.lt.s32.totalorder %v544, 240
      %vm1057 = vcmp.lt.s32.totalorder %v545, 240
      %vm1058 = vcmp.lt.s32.totalorder %v546, 240
      %vm1059 = vcmp.lt.s32.totalorder %v547, 240
      %vm1060 = vcmp.lt.s32.totalorder %v548, 240
      %vm1061 = vcmp.lt.s32.totalorder %v549, 240
      %vm1062 = vcmp.lt.s32.totalorder %v550, 240
      %vm1063 = vcmp.lt.s32.totalorder %v551, 240
      %vm1064 = vcmp.lt.s32.totalorder %v552, 240
      %vm1065 = vcmp.lt.s32.totalorder %v553, 240
      %vm1066 = vcmp.lt.s32.totalorder %v554, 240
      %vm1067 = vcmp.lt.s32.totalorder %v555, 240
      %vm1068 = vcmp.lt.s32.totalorder %v556, 240
      %vm1069 = vcmp.lt.s32.totalorder %v557, 240
      %vm1070 = vcmp.lt.s32.totalorder %v558, 240
      %vm1071 = vcmp.lt.s32.totalorder %v559, 240
      %vm1072 = vcmp.lt.s32.totalorder %v560, 240
      %vm1073 = vcmp.lt.s32.totalorder %v561, 240
      %vm1074 = vcmp.lt.s32.totalorder %v562, 240
      %vm1075 = vcmp.lt.s32.totalorder %v563, 240
      %vm1076 = vcmp.lt.s32.totalorder %v564, 240
      %vm1077 = vcmp.lt.s32.totalorder %v565, 240
      %vm1078 = vcmp.lt.s32.totalorder %v566, 240
      %v1079 = vld [vmem:[%s3 + $0x4] sm:$0x1]
      %v1080 = vlaneseq
      %v1081 = vshrl.u32 %v1080, 7
      %v1082 = vsub.s32 0, %v1081
      %v1083 = vrot.slane %v1079, %v1082
      %v1084 = vmul.f32 %v375, %v1083
      %v1085 = vmul.f32 %v378, %v1083
      %v1086 = vmul.f32 %v383, %v1083
      %v1087 = vmul.f32 %v386, %v1083
      %v1088 = vmul.f32 %v391, %v1083
      %v1089 = vmul.f32 %v394, %v1083
      %v1090 = vmul.f32 %v399, %v1083
      %v1091 = vmul.f32 %v402, %v1083
      %v1092 = vmul.f32 %v407, %v1083
      %v1093 = vmul.f32 %v410, %v1083
      %v1094 = vmul.f32 %v415, %v1083
      %v1095 = vmul.f32 %v418, %v1083
      %v1096 = vmul.f32 %v423, %v1083
      %v1097 = vmul.f32 %v426, %v1083
      %v1098 = vmul.f32 %v431, %v1083
      %v1099 = vmul.f32 %v434, %v1083
      %v1100 = vmul.f32 %v439, %v1083
      %v1101 = vmul.f32 %v442, %v1083
      %v1102 = vmul.f32 %v447, %v1083
      %v1103 = vmul.f32 %v450, %v1083
      %v1104 = vmul.f32 %v455, %v1083
      %v1105 = vmul.f32 %v458, %v1083
      %v1106 = vmul.f32 %v463, %v1083
      %v1107 = vmul.f32 %v466, %v1083
      %v1108 = vmul.f32 %v471, %v1083
      %v1109 = vmul.f32 %v474, %v1083
      %v1110 = vmul.f32 %v479, %v1083
      %v1111 = vmul.f32 %v482, %v1083
      %v1112 = vmul.f32 %v487, %v1083
      %v1113 = vmul.f32 %v490, %v1083
      %v1114 = vmul.f32 %v495, %v1083
      %v1115 = vmul.f32 %v498, %v1083
      %v1116 = vlaneseq
      %v1117 = vshrl.u32 %v1116, 7
      %v1118 = vsub.s32 0, %v1117
      %v1119 = vrot.slane %v227, %v1118
      %v1120 = vadd.f32 %v1084, %v1119
      %v1121 = vadd.f32 %v1085, %v1119
      %v1122 = vadd.f32 %v1086, %v1119
      %v1123 = vadd.f32 %v1087, %v1119
      %v1124 = vadd.f32 %v1088, %v1119
      %v1125 = vadd.f32 %v1089, %v1119
      %v1126 = vadd.f32 %v1090, %v1119
      %v1127 = vadd.f32 %v1091, %v1119
      %v1128 = vadd.f32 %v1092, %v1119
      %v1129 = vadd.f32 %v1093, %v1119
      %v1130 = vadd.f32 %v1094, %v1119
      %v1131 = vadd.f32 %v1095, %v1119
      %v1132 = vadd.f32 %v1096, %v1119
      %v1133 = vadd.f32 %v1097, %v1119
      %v1134 = vadd.f32 %v1098, %v1119
      %v1135 = vadd.f32 %v1099, %v1119
      %v1136 = vadd.f32 %v1100, %v1119
      %v1137 = vadd.f32 %v1101, %v1119
      %v1138 = vadd.f32 %v1102, %v1119
      %v1139 = vadd.f32 %v1103, %v1119
      %v1140 = vadd.f32 %v1104, %v1119
      %v1141 = vadd.f32 %v1105, %v1119
      %v1142 = vadd.f32 %v1106, %v1119
      %v1143 = vadd.f32 %v1107, %v1119
      %v1144 = vadd.f32 %v1108, %v1119
      %v1145 = vadd.f32 %v1109, %v1119
      %v1146 = vadd.f32 %v1110, %v1119
      %v1147 = vadd.f32 %v1111, %v1119
      %v1148 = vadd.f32 %v1112, %v1119
      %v1149 = vadd.f32 %v1113, %v1119
      %v1150 = vadd.f32 %v1114, %v1119
      %v1151 = vadd.f32 %v1115, %v1119
      %v1152 = vld [vmem:[#allocation2 + $0x7] sm:$0xff]
      %v1153 = vld [vmem:[#allocation2 + $0xf] sm:$0xff]
      %v1154 = vld [vmem:[#allocation2 + $0x17] sm:$0xff]
      %v1155 = vld [vmem:[#allocation2 + $0x1f] sm:$0xff]
      %v1156 = vld [vmem:[#allocation2 + $0x27] sm:$0xff]
      %v1157 = vld [vmem:[#allocation2 + $0x2f] sm:$0xff]
      %v1158 = vld [vmem:[#allocation2 + $0x37] sm:$0xff]
      %v1159 = vld [vmem:[#allocation2 + $0x3f] sm:$0xff]
      %v1160 = vld [vmem:[#allocation2 + $0x47] sm:$0xff]
      %v1161 = vld [vmem:[#allocation2 + $0x4f] sm:$0xff]
      %v1162 = vld [vmem:[#allocation2 + $0x57] sm:$0xff]
      %v1163 = vld [vmem:[#allocation2 + $0x5f] sm:$0xff]
      %v1164 = vld [vmem:[#allocation2 + $0x67] sm:$0xff]
      %v1165 = vld [vmem:[#allocation2 + $0x6f] sm:$0xff]
      %v1166 = vld [vmem:[#allocation2 + $0x77] sm:$0xff]
      %v1167 = vld [vmem:[#allocation2 + $0x7f] sm:$0xff]
      %v1168 = vld [vmem:[#allocation2 + $0x87] sm:$0xff]
      %v1169 = vld [vmem:[#allocation2 + $0x8f] sm:$0xff]
      %v1170 = vld [vmem:[#allocation2 + $0x97] sm:$0xff]
      %v1171 = vld [vmem:[#allocation2 + $0x9f] sm:$0xff]
      %v1172 = vld [vmem:[#allocation2 + $0xa7] sm:$0xff]
      %v1173 = vld [vmem:[#allocation2 + $0xaf] sm:$0xff]
      %v1174 = vld [vmem:[#allocation2 + $0xb7] sm:$0xff]
      %v1175 = vld [vmem:[#allocation2 + $0xbf] sm:$0xff]
      %v1176 = vld [vmem:[#allocation2 + $0xc7] sm:$0xff]
      %v1177 = vld [vmem:[#allocation2 + $0xcf] sm:$0xff]
      %v1178 = vld [vmem:[#allocation2 + $0xd7] sm:$0xff]
      %v1179 = vld [vmem:[#allocation2 + $0xdf] sm:$0xff]
      %v1180 = vld [vmem:[#allocation2 + $0xe7] sm:$0xff]
      %v1181 = vld [vmem:[#allocation2 + $0xef] sm:$0xff]
      %v1182 = vld [vmem:[#allocation2 + $0xf7] sm:$0xff]
      %v1183 = vld [vmem:[#allocation2 + $0xff] sm:$0xff]
      %v1184 = vld [vmem:[%s3] sm:$0x1]
      %v1185 = vlaneseq
      %v1186 = vshrl.u32 %v1185, 7
      %v1187 = vsub.s32 0, %v1186
      %v1188 = vrot.slane %v1184, %v1187
      %v1189 = vmul.f32 %v1152, %v1188
      %v1190 = vmul.f32 %v1153, %v1188
      %v1191 = vmul.f32 %v1154, %v1188
      %v1192 = vmul.f32 %v1155, %v1188
      %v1193 = vmul.f32 %v1156, %v1188
      %v1194 = vmul.f32 %v1157, %v1188
      %v1195 = vmul.f32 %v1158, %v1188
      %v1196 = vmul.f32 %v1159, %v1188
      %v1197 = vmul.f32 %v1160, %v1188
      %v1198 = vmul.f32 %v1161, %v1188
      %v1199 = vmul.f32 %v1162, %v1188
      %v1200 = vmul.f32 %v1163, %v1188
      %v1201 = vmul.f32 %v1164, %v1188
      %v1202 = vmul.f32 %v1165, %v1188
      %v1203 = vmul.f32 %v1166, %v1188
      %v1204 = vmul.f32 %v1167, %v1188
      %v1205 = vmul.f32 %v1168, %v1188
      %v1206 = vmul.f32 %v1169, %v1188
      %v1207 = vmul.f32 %v1170, %v1188
      %v1208 = vmul.f32 %v1171, %v1188
      %v1209 = vmul.f32 %v1172, %v1188
      %v1210 = vmul.f32 %v1173, %v1188
      %v1211 = vmul.f32 %v1174, %v1188
      %v1212 = vmul.f32 %v1175, %v1188
      %v1213 = vmul.f32 %v1176, %v1188
      %v1214 = vmul.f32 %v1177, %v1188
      %v1215 = vmul.f32 %v1178, %v1188
      %v1216 = vmul.f32 %v1179, %v1188
      %v1217 = vmul.f32 %v1180, %v1188
      %v1218 = vmul.f32 %v1181, %v1188
      %v1219 = vmul.f32 %v1182, %v1188
      %v1220 = vmul.f32 %v1183, %v1188
      %vm1221 = vmand %vm1015, %vm951
      %vm1222 = vmand %vm1016, %vm952
      %vm1223 = vmand %vm1017, %vm953
      %vm1224 = vmand %vm1018, %vm954
      %vm1225 = vmand %vm1019, %vm955
      %vm1226 = vmand %vm1020, %vm956
      %vm1227 = vmand %vm1021, %vm957
      %vm1228 = vmand %vm1022, %vm958
      %vm1229 = vmand %vm1023, %vm959
      %vm1230 = vmand %vm1024, %vm960
      %vm1231 = vmand %vm1025, %vm961
      %vm1232 = vmand %vm1026, %vm962
      %vm1233 = vmand %vm1027, %vm963
      %vm1234 = vmand %vm1028, %vm964
      %vm1235 = vmand %vm1029, %vm965
      %vm1236 = vmand %vm1030, %vm966
      %vm1237 = vmand %vm1031, %vm967
      %vm1238 = vmand %vm1032, %vm968
      %vm1239 = vmand %vm1033, %vm969
      %vm1240 = vmand %vm1034, %vm970
      %vm1241 = vmand %vm1035, %vm971
      %vm1242 = vmand %vm1036, %vm972
      %vm1243 = vmand %vm1037, %vm973
      %vm1244 = vmand %vm1038, %vm974
      %vm1245 = vmand %vm1039, %vm975
      %vm1246 = vmand %vm1040, %vm976
      %vm1247 = vmand %vm1041, %vm977
      %vm1248 = vmand %vm1042, %vm978
      %vm1249 = vmand %vm1043, %vm979
      %vm1250 = vmand %vm1044, %vm980
      %vm1251 = vmand %vm1045, %vm981
      %vm1252 = vmand %vm1046, %vm982
      %v1253 = vsel %vm1221, 1, 0
      %v1254 = vsel %vm1222, 1, 0
      %v1255 = vsel %vm1223, 1, 0
      %v1256 = vsel %vm1224, 1, 0
      %v1257 = vsel %vm1225, 1, 0
      %v1258 = vsel %vm1226, 1, 0
      %v1259 = vsel %vm1227, 1, 0
      %v1260 = vsel %vm1228, 1, 0
      %v1261 = vsel %vm1229, 1, 0
      %v1262 = vsel %vm1230, 1, 0
      %v1263 = vsel %vm1231, 1, 0
      %v1264 = vsel %vm1232, 1, 0
      %v1265 = vsel %vm1233, 1, 0
      %v1266 = vsel %vm1234, 1, 0
      %v1267 = vsel %vm1235, 1, 0
      %v1268 = vsel %vm1236, 1, 0
      %v1269 = vsel %vm1237, 1, 0
      %v1270 = vsel %vm1238, 1, 0
      %v1271 = vsel %vm1239, 1, 0
      %v1272 = vsel %vm1240, 1, 0
      %v1273 = vsel %vm1241, 1, 0
      %v1274 = vsel %vm1242, 1, 0
      %v1275 = vsel %vm1243, 1, 0
      %v1276 = vsel %vm1244, 1, 0
      %v1277 = vsel %vm1245, 1, 0
      %v1278 = vsel %vm1246, 1, 0
      %v1279 = vsel %vm1247, 1, 0
      %v1280 = vsel %vm1248, 1, 0
      %v1281 = vsel %vm1249, 1, 0
      %v1282 = vsel %vm1250, 1, 0
      %v1283 = vsel %vm1251, 1, 0
      %v1284 = vsel %vm1252, 1, 0
      %vm1285 = vcmp.eq.s32.totalorder %v1253, 1
      %vm1286 = vcmp.eq.s32.totalorder %v1254, 1
      %vm1287 = vcmp.eq.s32.totalorder %v1255, 1
      %vm1288 = vcmp.eq.s32.totalorder %v1256, 1
      %vm1289 = vcmp.eq.s32.totalorder %v1257, 1
      %vm1290 = vcmp.eq.s32.totalorder %v1258, 1
      %vm1291 = vcmp.eq.s32.totalorder %v1259, 1
      %vm1292 = vcmp.eq.s32.totalorder %v1260, 1
      %vm1293 = vcmp.eq.s32.totalorder %v1261, 1
      %vm1294 = vcmp.eq.s32.totalorder %v1262, 1
      %vm1295 = vcmp.eq.s32.totalorder %v1263, 1
      %vm1296 = vcmp.eq.s32.totalorder %v1264, 1
      %vm1297 = vcmp.eq.s32.totalorder %v1265, 1
      %vm1298 = vcmp.eq.s32.totalorder %v1266, 1
      %vm1299 = vcmp.eq.s32.totalorder %v1267, 1
      %vm1300 = vcmp.eq.s32.totalorder %v1268, 1
      %vm1301 = vcmp.eq.s32.totalorder %v1269, 1
      %vm1302 = vcmp.eq.s32.totalorder %v1270, 1
      %vm1303 = vcmp.eq.s32.totalorder %v1271, 1
      %vm1304 = vcmp.eq.s32.totalorder %v1272, 1
      %vm1305 = vcmp.eq.s32.totalorder %v1273, 1
      %vm1306 = vcmp.eq.s32.totalorder %v1274, 1
      %vm1307 = vcmp.eq.s32.totalorder %v1275, 1
      %vm1308 = vcmp.eq.s32.totalorder %v1276, 1
      %vm1309 = vcmp.eq.s32.totalorder %v1277, 1
      %vm1310 = vcmp.eq.s32.totalorder %v1278, 1
      %vm1311 = vcmp.eq.s32.totalorder %v1279, 1
      %vm1312 = vcmp.eq.s32.totalorder %v1280, 1
      %vm1313 = vcmp.eq.s32.totalorder %v1281, 1
      %vm1314 = vcmp.eq.s32.totalorder %v1282, 1
      %vm1315 = vcmp.eq.s32.totalorder %v1283, 1
      %vm1316 = vcmp.eq.s32.totalorder %v1284, 1
      %v1317 = vsel %vm1285, %v1189, 0.0
      %v1318 = vsel %vm1286, %v1190, 0.0
      %v1319 = vsel %vm1287, %v1191, 0.0
      %v1320 = vsel %vm1288, %v1192, 0.0
      %v1321 = vsel %vm1289, %v1193, 0.0
      %v1322 = vsel %vm1290, %v1194, 0.0
      %v1323 = vsel %vm1291, %v1195, 0.0
      %v1324 = vsel %vm1292, %v1196, 0.0
      %v1325 = vsel %vm1293, %v1197, 0.0
      %v1326 = vsel %vm1294, %v1198, 0.0
      %v1327 = vsel %vm1295, %v1199, 0.0
      %v1328 = vsel %vm1296, %v1200, 0.0
      %v1329 = vsel %vm1297, %v1201, 0.0
      %v1330 = vsel %vm1298, %v1202, 0.0
      %v1331 = vsel %vm1299, %v1203, 0.0
      %v1332 = vsel %vm1300, %v1204, 0.0
      %v1333 = vsel %vm1301, %v1205, 0.0
      %v1334 = vsel %vm1302, %v1206, 0.0
      %v1335 = vsel %vm1303, %v1207, 0.0
      %v1336 = vsel %vm1304, %v1208, 0.0
      %v1337 = vsel %vm1305, %v1209, 0.0
      %v1338 = vsel %vm1306, %v1210, 0.0
      %v1339 = vsel %vm1307, %v1211, 0.0
      %v1340 = vsel %vm1308, %v1212, 0.0
      %v1341 = vsel %vm1309, %v1213, 0.0
      %v1342 = vsel %vm1310, %v1214, 0.0
      %v1343 = vsel %vm1311, %v1215, 0.0
      %v1344 = vsel %vm1312, %v1216, 0.0
      %v1345 = vsel %vm1313, %v1217, 0.0
      %v1346 = vsel %vm1314, %v1218, 0.0
      %v1347 = vsel %vm1315, %v1219, 0.0
      %v1348 = vsel %vm1316, %v1220, 0.0
      %v1349 = vadd.f32 %v1120, %v1317
      %v1350 = vadd.f32 %v1121, %v1318
      %v1351 = vadd.f32 %v1122, %v1319
      %v1352 = vadd.f32 %v1123, %v1320
      %v1353 = vadd.f32 %v1124, %v1321
      %v1354 = vadd.f32 %v1125, %v1322
      %v1355 = vadd.f32 %v1126, %v1323
      %v1356 = vadd.f32 %v1127, %v1324
      %v1357 = vadd.f32 %v1128, %v1325
      %v1358 = vadd.f32 %v1129, %v1326
      %v1359 = vadd.f32 %v1130, %v1327
      %v1360 = vadd.f32 %v1131, %v1328
      %v1361 = vadd.f32 %v1132, %v1329
      %v1362 = vadd.f32 %v1133, %v1330
      %v1363 = vadd.f32 %v1134, %v1331
      %v1364 = vadd.f32 %v1135, %v1332
      %v1365 = vadd.f32 %v1136, %v1333
      %v1366 = vadd.f32 %v1137, %v1334
      %v1367 = vadd.f32 %v1138, %v1335
      %v1368 = vadd.f32 %v1139, %v1336
      %v1369 = vadd.f32 %v1140, %v1337
      %v1370 = vadd.f32 %v1141, %v1338
      %v1371 = vadd.f32 %v1142, %v1339
      %v1372 = vadd.f32 %v1143, %v1340
      %v1373 = vadd.f32 %v1144, %v1341
      %v1374 = vadd.f32 %v1145, %v1342
      %v1375 = vadd.f32 %v1146, %v1343
      %v1376 = vadd.f32 %v1147, %v1344
      %v1377 = vadd.f32 %v1148, %v1345
      %v1378 = vadd.f32 %v1149, %v1346
      %v1379 = vadd.f32 %v1150, %v1347
      %v1380 = vadd.f32 %v1151, %v1348
      %v1381 = vld [vmem:[#allocation2 + $0x8] sm:$0xff]
      %v1382 = vld [vmem:[#allocation2 + $0x10] sm:$0xff]
      %v1383 = vld [vmem:[#allocation2 + $0x18] sm:$0xff]
      %v1384 = vld [vmem:[#allocation2 + $0x20] sm:$0xff]
      %v1385 = vld [vmem:[#allocation2 + $0x28] sm:$0xff]
      %v1386 = vld [vmem:[#allocation2 + $0x30] sm:$0xff]
      %v1387 = vld [vmem:[#allocation2 + $0x38] sm:$0xff]
      %v1388 = vld [vmem:[#allocation2 + $0x40] sm:$0xff]
      %v1389 = vld [vmem:[#allocation2 + $0x48] sm:$0xff]
      %v1390 = vld [vmem:[#allocation2 + $0x50] sm:$0xff]
      %v1391 = vld [vmem:[#allocation2 + $0x58] sm:$0xff]
      %v1392 = vld [vmem:[#allocation2 + $0x60] sm:$0xff]
      %v1393 = vld [vmem:[#allocation2 + $0x68] sm:$0xff]
      %v1394 = vld [vmem:[#allocation2 + $0x70] sm:$0xff]
      %v1395 = vld [vmem:[#allocation2 + $0x78] sm:$0xff]
      %v1396 = vld [vmem:[#allocation2 + $0x80] sm:$0xff]
      %v1397 = vld [vmem:[#allocation2 + $0x88] sm:$0xff]
      %v1398 = vld [vmem:[#allocation2 + $0x90] sm:$0xff]
      %v1399 = vld [vmem:[#allocation2 + $0x98] sm:$0xff]
      %v1400 = vld [vmem:[#allocation2 + $0xa0] sm:$0xff]
      %v1401 = vld [vmem:[#allocation2 + $0xa8] sm:$0xff]
      %v1402 = vld [vmem:[#allocation2 + $0xb0] sm:$0xff]
      %v1403 = vld [vmem:[#allocation2 + $0xb8] sm:$0xff]
      %v1404 = vld [vmem:[#allocation2 + $0xc0] sm:$0xff]
      %v1405 = vld [vmem:[#allocation2 + $0xc8] sm:$0xff]
      %v1406 = vld [vmem:[#allocation2 + $0xd0] sm:$0xff]
      %v1407 = vld [vmem:[#allocation2 + $0xd8] sm:$0xff]
      %v1408 = vld [vmem:[#allocation2 + $0xe0] sm:$0xff]
      %v1409 = vld [vmem:[#allocation2 + $0xe8] sm:$0xff]
      %v1410 = vld [vmem:[#allocation2 + $0xf0] sm:$0xff]
      %v1411 = vld [vmem:[#allocation2 + $0xf8] sm:$0xff]
      %v1412 = vld [vmem:[#allocation2 + $0x100] sm:$0xff]
      %v1413 = vld [vmem:[%s3 + $0x1] sm:$0x1]
      %v1414 = vlaneseq
      %v1415 = vshrl.u32 %v1414, 7
      %v1416 = vsub.s32 0, %v1415
      %v1417 = vrot.slane %v1413, %v1416
      %v1418 = vmul.f32 %v1381, %v1417
      %v1419 = vmul.f32 %v1382, %v1417
      %v1420 = vmul.f32 %v1383, %v1417
      %v1421 = vmul.f32 %v1384, %v1417
      %v1422 = vmul.f32 %v1385, %v1417
      %v1423 = vmul.f32 %v1386, %v1417
      %v1424 = vmul.f32 %v1387, %v1417
      %v1425 = vmul.f32 %v1388, %v1417
      %v1426 = vmul.f32 %v1389, %v1417
      %v1427 = vmul.f32 %v1390, %v1417
      %v1428 = vmul.f32 %v1391, %v1417
      %v1429 = vmul.f32 %v1392, %v1417
      %v1430 = vmul.f32 %v1393, %v1417
      %v1431 = vmul.f32 %v1394, %v1417
      %v1432 = vmul.f32 %v1395, %v1417
      %v1433 = vmul.f32 %v1396, %v1417
      %v1434 = vmul.f32 %v1397, %v1417
      %v1435 = vmul.f32 %v1398, %v1417
      %v1436 = vmul.f32 %v1399, %v1417
      %v1437 = vmul.f32 %v1400, %v1417
      %v1438 = vmul.f32 %v1401, %v1417
      %v1439 = vmul.f32 %v1402, %v1417
      %v1440 = vmul.f32 %v1403, %v1417
      %v1441 = vmul.f32 %v1404, %v1417
      %v1442 = vmul.f32 %v1405, %v1417
      %v1443 = vmul.f32 %v1406, %v1417
      %v1444 = vmul.f32 %v1407, %v1417
      %v1445 = vmul.f32 %v1408, %v1417
      %v1446 = vmul.f32 %v1409, %v1417
      %v1447 = vmul.f32 %v1410, %v1417
      %v1448 = vmul.f32 %v1411, %v1417
      %v1449 = vmul.f32 %v1412, %v1417
      %v1450 = vsel %vm1015, 1, 0
      %v1451 = vsel %vm1016, 1, 0
      %v1452 = vsel %vm1017, 1, 0
      %v1453 = vsel %vm1018, 1, 0
      %v1454 = vsel %vm1019, 1, 0
      %v1455 = vsel %vm1020, 1, 0
      %v1456 = vsel %vm1021, 1, 0
      %v1457 = vsel %vm1022, 1, 0
      %v1458 = vsel %vm1023, 1, 0
      %v1459 = vsel %vm1024, 1, 0
      %v1460 = vsel %vm1025, 1, 0
      %v1461 = vsel %vm1026, 1, 0
      %v1462 = vsel %vm1027, 1, 0
      %v1463 = vsel %vm1028, 1, 0
      %v1464 = vsel %vm1029, 1, 0
      %v1465 = vsel %vm1030, 1, 0
      %v1466 = vsel %vm1031, 1, 0
      %v1467 = vsel %vm1032, 1, 0
      %v1468 = vsel %vm1033, 1, 0
      %v1469 = vsel %vm1034, 1, 0
      %v1470 = vsel %vm1035, 1, 0
      %v1471 = vsel %vm1036, 1, 0
      %v1472 = vsel %vm1037, 1, 0
      %v1473 = vsel %vm1038, 1, 0
      %v1474 = vsel %vm1039, 1, 0
      %v1475 = vsel %vm1040, 1, 0
      %v1476 = vsel %vm1041, 1, 0
      %v1477 = vsel %vm1042, 1, 0
      %v1478 = vsel %vm1043, 1, 0
      %v1479 = vsel %vm1044, 1, 0
      %v1480 = vsel %vm1045, 1, 0
      %v1481 = vsel %vm1046, 1, 0
      %vm1482 = vcmp.eq.s32.totalorder %v1450, 1
      %vm1483 = vcmp.eq.s32.totalorder %v1451, 1
      %vm1484 = vcmp.eq.s32.totalorder %v1452, 1
      %vm1485 = vcmp.eq.s32.totalorder %v1453, 1
      %vm1486 = vcmp.eq.s32.totalorder %v1454, 1
      %vm1487 = vcmp.eq.s32.totalorder %v1455, 1
      %vm1488 = vcmp.eq.s32.totalorder %v1456, 1
      %vm1489 = vcmp.eq.s32.totalorder %v1457, 1
      %vm1490 = vcmp.eq.s32.totalorder %v1458, 1
      %vm1491 = vcmp.eq.s32.totalorder %v1459, 1
      %vm1492 = vcmp.eq.s32.totalorder %v1460, 1
      %vm1493 = vcmp.eq.s32.totalorder %v1461, 1
      %vm1494 = vcmp.eq.s32.totalorder %v1462, 1
      %vm1495 = vcmp.eq.s32.totalorder %v1463, 1
      %vm1496 = vcmp.eq.s32.totalorder %v1464, 1
      %vm1497 = vcmp.eq.s32.totalorder %v1465, 1
      %vm1498 = vcmp.eq.s32.totalorder %v1466, 1
      %vm1499 = vcmp.eq.s32.totalorder %v1467, 1
      %vm1500 = vcmp.eq.s32.totalorder %v1468, 1
      %vm1501 = vcmp.eq.s32.totalorder %v1469, 1
      %vm1502 = vcmp.eq.s32.totalorder %v1470, 1
      %vm1503 = vcmp.eq.s32.totalorder %v1471, 1
      %vm1504 = vcmp.eq.s32.totalorder %v1472, 1
      %vm1505 = vcmp.eq.s32.totalorder %v1473, 1
      %vm1506 = vcmp.eq.s32.totalorder %v1474, 1
      %vm1507 = vcmp.eq.s32.totalorder %v1475, 1
      %vm1508 = vcmp.eq.s32.totalorder %v1476, 1
      %vm1509 = vcmp.eq.s32.totalorder %v1477, 1
      %vm1510 = vcmp.eq.s32.totalorder %v1478, 1
      %vm1511 = vcmp.eq.s32.totalorder %v1479, 1
      %vm1512 = vcmp.eq.s32.totalorder %v1480, 1
      %vm1513 = vcmp.eq.s32.totalorder %v1481, 1
      %v1514 = vsel %vm1482, %v1418, 0.0
      %v1515 = vsel %vm1483, %v1419, 0.0
      %v1516 = vsel %vm1484, %v1420, 0.0
      %v1517 = vsel %vm1485, %v1421, 0.0
      %v1518 = vsel %vm1486, %v1422, 0.0
      %v1519 = vsel %vm1487, %v1423, 0.0
      %v1520 = vsel %vm1488, %v1424, 0.0
      %v1521 = vsel %vm1489, %v1425, 0.0
      %v1522 = vsel %vm1490, %v1426, 0.0
      %v1523 = vsel %vm1491, %v1427, 0.0
      %v1524 = vsel %vm1492, %v1428, 0.0
      %v1525 = vsel %vm1493, %v1429, 0.0
      %v1526 = vsel %vm1494, %v1430, 0.0
      %v1527 = vsel %vm1495, %v1431, 0.0
      %v1528 = vsel %vm1496, %v1432, 0.0
      %v1529 = vsel %vm1497, %v1433, 0.0
      %v1530 = vsel %vm1498, %v1434, 0.0
      %v1531 = vsel %vm1499, %v1435, 0.0
      %v1532 = vsel %vm1500, %v1436, 0.0
      %v1533 = vsel %vm1501, %v1437, 0.0
      %v1534 = vsel %vm1502, %v1438, 0.0
      %v1535 = vsel %vm1503, %v1439, 0.0
      %v1536 = vsel %vm1504, %v1440, 0.0
      %v1537 = vsel %vm1505, %v1441, 0.0
      %v1538 = vsel %vm1506, %v1442, 0.0
      %v1539 = vsel %vm1507, %v1443, 0.0
      %v1540 = vsel %vm1508, %v1444, 0.0
      %v1541 = vsel %vm1509, %v1445, 0.0
      %v1542 = vsel %vm1510, %v1446, 0.0
      %v1543 = vsel %vm1511, %v1447, 0.0
      %v1544 = vsel %vm1512, %v1448, 0.0
      %v1545 = vsel %vm1513, %v1449, 0.0
      %v1546 = vadd.f32 %v1349, %v1514
      %v1547 = vadd.f32 %v1350, %v1515
      %v1548 = vadd.f32 %v1351, %v1516
      %v1549 = vadd.f32 %v1352, %v1517
      %v1550 = vadd.f32 %v1353, %v1518
      %v1551 = vadd.f32 %v1354, %v1519
      %v1552 = vadd.f32 %v1355, %v1520
      %v1553 = vadd.f32 %v1356, %v1521
      %v1554 = vadd.f32 %v1357, %v1522
      %v1555 = vadd.f32 %v1358, %v1523
      %v1556 = vadd.f32 %v1359, %v1524
      %v1557 = vadd.f32 %v1360, %v1525
      %v1558 = vadd.f32 %v1361, %v1526
      %v1559 = vadd.f32 %v1362, %v1527
      %v1560 = vadd.f32 %v1363, %v1528
      %v1561 = vadd.f32 %v1364, %v1529
      %v1562 = vadd.f32 %v1365, %v1530
      %v1563 = vadd.f32 %v1366, %v1531
      %v1564 = vadd.f32 %v1367, %v1532
      %v1565 = vadd.f32 %v1368, %v1533
      %v1566 = vadd.f32 %v1369, %v1534
      %v1567 = vadd.f32 %v1370, %v1535
      %v1568 = vadd.f32 %v1371, %v1536
      %v1569 = vadd.f32 %v1372, %v1537
      %v1570 = vadd.f32 %v1373, %v1538
      %v1571 = vadd.f32 %v1374, %v1539
      %v1572 = vadd.f32 %v1375, %v1540
      %v1573 = vadd.f32 %v1376, %v1541
      %v1574 = vadd.f32 %v1377, %v1542
      %v1575 = vadd.f32 %v1378, %v1543
      %v1576 = vadd.f32 %v1379, %v1544
      %v1577 = vadd.f32 %v1380, %v1545
      %v1578 = vld [vmem:[#allocation2 + $0x9] sm:$0xff]
      %v1579 = vld [vmem:[#allocation2 + $0x11] sm:$0xff]
      %v1580 = vld [vmem:[#allocation2 + $0x19] sm:$0xff]
      %v1581 = vld [vmem:[#allocation2 + $0x21] sm:$0xff]
      %v1582 = vld [vmem:[#allocation2 + $0x29] sm:$0xff]
      %v1583 = vld [vmem:[#allocation2 + $0x31] sm:$0xff]
      %v1584 = vld [vmem:[#allocation2 + $0x39] sm:$0xff]
      %v1585 = vld [vmem:[#allocation2 + $0x41] sm:$0xff]
      %v1586 = vld [vmem:[#allocation2 + $0x49] sm:$0xff]
      %v1587 = vld [vmem:[#allocation2 + $0x51] sm:$0xff]
      %v1588 = vld [vmem:[#allocation2 + $0x59] sm:$0xff]
      %v1589 = vld [vmem:[#allocation2 + $0x61] sm:$0xff]
      %v1590 = vld [vmem:[#allocation2 + $0x69] sm:$0xff]
      %v1591 = vld [vmem:[#allocation2 + $0x71] sm:$0xff]
      %v1592 = vld [vmem:[#allocation2 + $0x79] sm:$0xff]
      %v1593 = vld [vmem:[#allocation2 + $0x81] sm:$0xff]
      %v1594 = vld [vmem:[#allocation2 + $0x89] sm:$0xff]
      %v1595 = vld [vmem:[#allocation2 + $0x91] sm:$0xff]
      %v1596 = vld [vmem:[#allocation2 + $0x99] sm:$0xff]
      %v1597 = vld [vmem:[#allocation2 + $0xa1] sm:$0xff]
      %v1598 = vld [vmem:[#allocation2 + $0xa9] sm:$0xff]
      %v1599 = vld [vmem:[#allocation2 + $0xb1] sm:$0xff]
      %v1600 = vld [vmem:[#allocation2 + $0xb9] sm:$0xff]
      %v1601 = vld [vmem:[#allocation2 + $0xc1] sm:$0xff]
      %v1602 = vld [vmem:[#allocation2 + $0xc9] sm:$0xff]
      %v1603 = vld [vmem:[#allocation2 + $0xd1] sm:$0xff]
      %v1604 = vld [vmem:[#allocation2 + $0xd9] sm:$0xff]
      %v1605 = vld [vmem:[#allocation2 + $0xe1] sm:$0xff]
      %v1606 = vld [vmem:[#allocation2 + $0xe9] sm:$0xff]
      %v1607 = vld [vmem:[#allocation2 + $0xf1] sm:$0xff]
      %v1608 = vld [vmem:[#allocation2 + $0xf9] sm:$0xff]
      %v1609 = vld [vmem:[#allocation2 + $0x101] sm:$0xff]
      %v1610 = vld [vmem:[%s3 + $0x2] sm:$0x1]
      %v1611 = vlaneseq
      %v1612 = vshrl.u32 %v1611, 7
      %v1613 = vsub.s32 0, %v1612
      %v1614 = vrot.slane %v1610, %v1613
      %v1615 = vmul.f32 %v1578, %v1614
      %v1616 = vmul.f32 %v1579, %v1614
      %v1617 = vmul.f32 %v1580, %v1614
      %v1618 = vmul.f32 %v1581, %v1614
      %v1619 = vmul.f32 %v1582, %v1614
      %v1620 = vmul.f32 %v1583, %v1614
      %v1621 = vmul.f32 %v1584, %v1614
      %v1622 = vmul.f32 %v1585, %v1614
      %v1623 = vmul.f32 %v1586, %v1614
      %v1624 = vmul.f32 %v1587, %v1614
      %v1625 = vmul.f32 %v1588, %v1614
      %v1626 = vmul.f32 %v1589, %v1614
      %v1627 = vmul.f32 %v1590, %v1614
      %v1628 = vmul.f32 %v1591, %v1614
      %v1629 = vmul.f32 %v1592, %v1614
      %v1630 = vmul.f32 %v1593, %v1614
      %v1631 = vmul.f32 %v1594, %v1614
      %v1632 = vmul.f32 %v1595, %v1614
      %v1633 = vmul.f32 %v1596, %v1614
      %v1634 = vmul.f32 %v1597, %v1614
      %v1635 = vmul.f32 %v1598, %v1614
      %v1636 = vmul.f32 %v1599, %v1614
      %v1637 = vmul.f32 %v1600, %v1614
      %v1638 = vmul.f32 %v1601, %v1614
      %v1639 = vmul.f32 %v1602, %v1614
      %v1640 = vmul.f32 %v1603, %v1614
      %v1641 = vmul.f32 %v1604, %v1614
      %v1642 = vmul.f32 %v1605, %v1614
      %v1643 = vmul.f32 %v1606, %v1614
      %v1644 = vmul.f32 %v1607, %v1614
      %v1645 = vmul.f32 %v1608, %v1614
      %v1646 = vmul.f32 %v1609, %v1614
      %vm1647 = vmand %vm1015, %vm983
      %vm1648 = vmand %vm1016, %vm984
      %vm1649 = vmand %vm1017, %vm985
      %vm1650 = vmand %vm1018, %vm986
      %vm1651 = vmand %vm1019, %vm987
      %vm1652 = vmand %vm1020, %vm988
      %vm1653 = vmand %vm1021, %vm989
      %vm1654 = vmand %vm1022, %vm990
      %vm1655 = vmand %vm1023, %vm991
      %vm1656 = vmand %vm1024, %vm992
      %vm1657 = vmand %vm1025, %vm993
      %vm1658 = vmand %vm1026, %vm994
      %vm1659 = vmand %vm1027, %vm995
      %vm1660 = vmand %vm1028, %vm996
      %vm1661 = vmand %vm1029, %vm997
      %vm1662 = vmand %vm1030, %vm998
      %vm1663 = vmand %vm1031, %vm999
      %vm1664 = vmand %vm1032, %vm1000
      %vm1665 = vmand %vm1033, %vm1001
      %vm1666 = vmand %vm1034, %vm1002
      %vm1667 = vmand %vm1035, %vm1003
      %vm1668 = vmand %vm1036, %vm1004
      %vm1669 = vmand %vm1037, %vm1005
      %vm1670 = vmand %vm1038, %vm1006
      %vm1671 = vmand %vm1039, %vm1007
      %vm1672 = vmand %vm1040, %vm1008
      %vm1673 = vmand %vm1041, %vm1009
      %vm1674 = vmand %vm1042, %vm1010
      %vm1675 = vmand %vm1043, %vm1011
      %vm1676 = vmand %vm1044, %vm1012
      %vm1677 = vmand %vm1045, %vm1013
      %vm1678 = vmand %vm1046, %vm1014
      %v1679 = vsel %vm1647, 1, 0
      %v1680 = vsel %vm1648, 1, 0
      %v1681 = vsel %vm1649, 1, 0
      %v1682 = vsel %vm1650, 1, 0
      %v1683 = vsel %vm1651, 1, 0
      %v1684 = vsel %vm1652, 1, 0
      %v1685 = vsel %vm1653, 1, 0
      %v1686 = vsel %vm1654, 1, 0
      %v1687 = vsel %vm1655, 1, 0
      %v1688 = vsel %vm1656, 1, 0
      %v1689 = vsel %vm1657, 1, 0
      %v1690 = vsel %vm1658, 1, 0
      %v1691 = vsel %vm1659, 1, 0
      %v1692 = vsel %vm1660, 1, 0
      %v1693 = vsel %vm1661, 1, 0
      %v1694 = vsel %vm1662, 1, 0
      %v1695 = vsel %vm1663, 1, 0
      %v1696 = vsel %vm1664, 1, 0
      %v1697 = vsel %vm1665, 1, 0
      %v1698 = vsel %vm1666, 1, 0
      %v1699 = vsel %vm1667, 1, 0
      %v1700 = vsel %vm1668, 1, 0
      %v1701 = vsel %vm1669, 1, 0
      %v1702 = vsel %vm1670, 1, 0
      %v1703 = vsel %vm1671, 1, 0
      %v1704 = vsel %vm1672, 1, 0
      %v1705 = vsel %vm1673, 1, 0
      %v1706 = vsel %vm1674, 1, 0
      %v1707 = vsel %vm1675, 1, 0
      %v1708 = vsel %vm1676, 1, 0
      %v1709 = vsel %vm1677, 1, 0
      %v1710 = vsel %vm1678, 1, 0
      %vm1711 = vcmp.eq.s32.totalorder %v1679, 1
      %vm1712 = vcmp.eq.s32.totalorder %v1680, 1
      %vm1713 = vcmp.eq.s32.totalorder %v1681, 1
      %vm1714 = vcmp.eq.s32.totalorder %v1682, 1
      %vm1715 = vcmp.eq.s32.totalorder %v1683, 1
      %vm1716 = vcmp.eq.s32.totalorder %v1684, 1
      %vm1717 = vcmp.eq.s32.totalorder %v1685, 1
      %vm1718 = vcmp.eq.s32.totalorder %v1686, 1
      %vm1719 = vcmp.eq.s32.totalorder %v1687, 1
      %vm1720 = vcmp.eq.s32.totalorder %v1688, 1
      %vm1721 = vcmp.eq.s32.totalorder %v1689, 1
      %vm1722 = vcmp.eq.s32.totalorder %v1690, 1
      %vm1723 = vcmp.eq.s32.totalorder %v1691, 1
      %vm1724 = vcmp.eq.s32.totalorder %v1692, 1
      %vm1725 = vcmp.eq.s32.totalorder %v1693, 1
      %vm1726 = vcmp.eq.s32.totalorder %v1694, 1
      %vm1727 = vcmp.eq.s32.totalorder %v1695, 1
      %vm1728 = vcmp.eq.s32.totalorder %v1696, 1
      %vm1729 = vcmp.eq.s32.totalorder %v1697, 1
      %vm1730 = vcmp.eq.s32.totalorder %v1698, 1
      %vm1731 = vcmp.eq.s32.totalorder %v1699, 1
      %vm1732 = vcmp.eq.s32.totalorder %v1700, 1
      %vm1733 = vcmp.eq.s32.totalorder %v1701, 1
      %vm1734 = vcmp.eq.s32.totalorder %v1702, 1
      %vm1735 = vcmp.eq.s32.totalorder %v1703, 1
      %vm1736 = vcmp.eq.s32.totalorder %v1704, 1
      %vm1737 = vcmp.eq.s32.totalorder %v1705, 1
      %vm1738 = vcmp.eq.s32.totalorder %v1706, 1
      %vm1739 = vcmp.eq.s32.totalorder %v1707, 1
      %vm1740 = vcmp.eq.s32.totalorder %v1708, 1
      %vm1741 = vcmp.eq.s32.totalorder %v1709, 1
      %vm1742 = vcmp.eq.s32.totalorder %v1710, 1
      %v1743 = vsel %vm1711, %v1615, 0.0
      %v1744 = vsel %vm1712, %v1616, 0.0
      %v1745 = vsel %vm1713, %v1617, 0.0
      %v1746 = vsel %vm1714, %v1618, 0.0
      %v1747 = vsel %vm1715, %v1619, 0.0
      %v1748 = vsel %vm1716, %v1620, 0.0
      %v1749 = vsel %vm1717, %v1621, 0.0
      %v1750 = vsel %vm1718, %v1622, 0.0
      %v1751 = vsel %vm1719, %v1623, 0.0
      %v1752 = vsel %vm1720, %v1624, 0.0
      %v1753 = vsel %vm1721, %v1625, 0.0
      %v1754 = vsel %vm1722, %v1626, 0.0
      %v1755 = vsel %vm1723, %v1627, 0.0
      %v1756 = vsel %vm1724, %v1628, 0.0
      %v1757 = vsel %vm1725, %v1629, 0.0
      %v1758 = vsel %vm1726, %v1630, 0.0
      %v1759 = vsel %vm1727, %v1631, 0.0
      %v1760 = vsel %vm1728, %v1632, 0.0
      %v1761 = vsel %vm1729, %v1633, 0.0
      %v1762 = vsel %vm1730, %v1634, 0.0
      %v1763 = vsel %vm1731, %v1635, 0.0
      %v1764 = vsel %vm1732, %v1636, 0.0
      %v1765 = vsel %vm1733, %v1637, 0.0
      %v1766 = vsel %vm1734, %v1638, 0.0
      %v1767 = vsel %vm1735, %v1639, 0.0
      %v1768 = vsel %vm1736, %v1640, 0.0
      %v1769 = vsel %vm1737, %v1641, 0.0
      %v1770 = vsel %vm1738, %v1642, 0.0
      %v1771 = vsel %vm1739, %v1643, 0.0
      %v1772 = vsel %vm1740, %v1644, 0.0
      %v1773 = vsel %vm1741, %v1645, 0.0
      %v1774 = vsel %vm1742, %v1646, 0.0
      %v1775 = vadd.f32 %v1546, %v1743
      %v1776 = vadd.f32 %v1547, %v1744
      %v1777 = vadd.f32 %v1548, %v1745
      %v1778 = vadd.f32 %v1549, %v1746
      %v1779 = vadd.f32 %v1550, %v1747
      %v1780 = vadd.f32 %v1551, %v1748
      %v1781 = vadd.f32 %v1552, %v1749
      %v1782 = vadd.f32 %v1553, %v1750
      %v1783 = vadd.f32 %v1554, %v1751
      %v1784 = vadd.f32 %v1555, %v1752
      %v1785 = vadd.f32 %v1556, %v1753
      %v1786 = vadd.f32 %v1557, %v1754
      %v1787 = vadd.f32 %v1558, %v1755
      %v1788 = vadd.f32 %v1559, %v1756
      %v1789 = vadd.f32 %v1560, %v1757
      %v1790 = vadd.f32 %v1561, %v1758
      %v1791 = vadd.f32 %v1562, %v1759
      %v1792 = vadd.f32 %v1563, %v1760
      %v1793 = vadd.f32 %v1564, %v1761
      %v1794 = vadd.f32 %v1565, %v1762
      %v1795 = vadd.f32 %v1566, %v1763
      %v1796 = vadd.f32 %v1567, %v1764
      %v1797 = vadd.f32 %v1568, %v1765
      %v1798 = vadd.f32 %v1569, %v1766
      %v1799 = vadd.f32 %v1570, %v1767
      %v1800 = vadd.f32 %v1571, %v1768
      %v1801 = vadd.f32 %v1572, %v1769
      %v1802 = vadd.f32 %v1573, %v1770
      %v1803 = vadd.f32 %v1574, %v1771
      %v1804 = vadd.f32 %v1575, %v1772
      %v1805 = vadd.f32 %v1576, %v1773
      %v1806 = vadd.f32 %v1577, %v1774
      %v1807 = vld [vmem:[#allocation2 + $0x107] sm:$0xff]
      %v1808 = vld [vmem:[#allocation2 + $0x10f] sm:$0xff]
      %v1809 = vld [vmem:[%s3 + $0x3] sm:$0x1]
      %v1810 = vlaneseq
      %v1811 = vshrl.u32 %v1810, 7
      %v1812 = vsub.s32 0, %v1811
      %v1813 = vrot.slane %v1809, %v1812
      %v1814 = vmul.f32 %v1154, %v1813
      %v1815 = vmul.f32 %v1155, %v1813
      %v1816 = vmul.f32 %v1156, %v1813
      %v1817 = vmul.f32 %v1157, %v1813
      %v1818 = vmul.f32 %v1158, %v1813
      %v1819 = vmul.f32 %v1159, %v1813
      %v1820 = vmul.f32 %v1160, %v1813
      %v1821 = vmul.f32 %v1161, %v1813
      %v1822 = vmul.f32 %v1162, %v1813
      %v1823 = vmul.f32 %v1163, %v1813
      %v1824 = vmul.f32 %v1164, %v1813
      %v1825 = vmul.f32 %v1165, %v1813
      %v1826 = vmul.f32 %v1166, %v1813
      %v1827 = vmul.f32 %v1167, %v1813
      %v1828 = vmul.f32 %v1168, %v1813
      %v1829 = vmul.f32 %v1169, %v1813
      %v1830 = vmul.f32 %v1170, %v1813
      %v1831 = vmul.f32 %v1171, %v1813
      %v1832 = vmul.f32 %v1172, %v1813
      %v1833 = vmul.f32 %v1173, %v1813
      %v1834 = vmul.f32 %v1174, %v1813
      %v1835 = vmul.f32 %v1175, %v1813
      %v1836 = vmul.f32 %v1176, %v1813
      %v1837 = vmul.f32 %v1177, %v1813
      %v1838 = vmul.f32 %v1178, %v1813
      %v1839 = vmul.f32 %v1179, %v1813
      %v1840 = vmul.f32 %v1180, %v1813
      %v1841 = vmul.f32 %v1181, %v1813
      %v1842 = vmul.f32 %v1182, %v1813
      %v1843 = vmul.f32 %v1183, %v1813
      %v1844 = vmul.f32 %v1807, %v1813
      %v1845 = vmul.f32 %v1808, %v1813
      %v1846 = vsel %vm951, 1, 0
      %v1847 = vsel %vm952, 1, 0
      %v1848 = vsel %vm953, 1, 0
      %v1849 = vsel %vm954, 1, 0
      %v1850 = vsel %vm955, 1, 0
      %v1851 = vsel %vm956, 1, 0
      %v1852 = vsel %vm957, 1, 0
      %v1853 = vsel %vm958, 1, 0
      %v1854 = vsel %vm959, 1, 0
      %v1855 = vsel %vm960, 1, 0
      %v1856 = vsel %vm961, 1, 0
      %v1857 = vsel %vm962, 1, 0
      %v1858 = vsel %vm963, 1, 0
      %v1859 = vsel %vm964, 1, 0
      %v1860 = vsel %vm965, 1, 0
      %v1861 = vsel %vm966, 1, 0
      %v1862 = vsel %vm967, 1, 0
      %v1863 = vsel %vm968, 1, 0
      %v1864 = vsel %vm969, 1, 0
      %v1865 = vsel %vm970, 1, 0
      %v1866 = vsel %vm971, 1, 0
      %v1867 = vsel %vm972, 1, 0
      %v1868 = vsel %vm973, 1, 0
      %v1869 = vsel %vm974, 1, 0
      %v1870 = vsel %vm975, 1, 0
      %v1871 = vsel %vm976, 1, 0
      %v1872 = vsel %vm977, 1, 0
      %v1873 = vsel %vm978, 1, 0
      %v1874 = vsel %vm979, 1, 0
      %v1875 = vsel %vm980, 1, 0
      %v1876 = vsel %vm981, 1, 0
      %v1877 = vsel %vm982, 1, 0
      %vm1878 = vcmp.eq.s32.totalorder %v1846, 1
      %vm1879 = vcmp.eq.s32.totalorder %v1847, 1
      %vm1880 = vcmp.eq.s32.totalorder %v1848, 1
      %vm1881 = vcmp.eq.s32.totalorder %v1849, 1
      %vm1882 = vcmp.eq.s32.totalorder %v1850, 1
      %vm1883 = vcmp.eq.s32.totalorder %v1851, 1
      %vm1884 = vcmp.eq.s32.totalorder %v1852, 1
      %vm1885 = vcmp.eq.s32.totalorder %v1853, 1
      %vm1886 = vcmp.eq.s32.totalorder %v1854, 1
      %vm1887 = vcmp.eq.s32.totalorder %v1855, 1
      %vm1888 = vcmp.eq.s32.totalorder %v1856, 1
      %vm1889 = vcmp.eq.s32.totalorder %v1857, 1
      %vm1890 = vcmp.eq.s32.totalorder %v1858, 1
      %vm1891 = vcmp.eq.s32.totalorder %v1859, 1
      %vm1892 = vcmp.eq.s32.totalorder %v1860, 1
      %vm1893 = vcmp.eq.s32.totalorder %v1861, 1
      %vm1894 = vcmp.eq.s32.totalorder %v1862, 1
      %vm1895 = vcmp.eq.s32.totalorder %v1863, 1
      %vm1896 = vcmp.eq.s32.totalorder %v1864, 1
      %vm1897 = vcmp.eq.s32.totalorder %v1865, 1
      %vm1898 = vcmp.eq.s32.totalorder %v1866, 1
      %vm1899 = vcmp.eq.s32.totalorder %v1867, 1
      %vm1900 = vcmp.eq.s32.totalorder %v1868, 1
      %vm1901 = vcmp.eq.s32.totalorder %v1869, 1
      %vm1902 = vcmp.eq.s32.totalorder %v1870, 1
      %vm1903 = vcmp.eq.s32.totalorder %v1871, 1
      %vm1904 = vcmp.eq.s32.totalorder %v1872, 1
      %vm1905 = vcmp.eq.s32.totalorder %v1873, 1
      %vm1906 = vcmp.eq.s32.totalorder %v1874, 1
      %vm1907 = vcmp.eq.s32.totalorder %v1875, 1
      %vm1908 = vcmp.eq.s32.totalorder %v1876, 1
      %vm1909 = vcmp.eq.s32.totalorder %v1877, 1
      %v1910 = vsel %vm1878, %v1814, 0.0
      %v1911 = vsel %vm1879, %v1815, 0.0
      %v1912 = vsel %vm1880, %v1816, 0.0
      %v1913 = vsel %vm1881, %v1817, 0.0
      %v1914 = vsel %vm1882, %v1818, 0.0
      %v1915 = vsel %vm1883, %v1819, 0.0
      %v1916 = vsel %vm1884, %v1820, 0.0
      %v1917 = vsel %vm1885, %v1821, 0.0
      %v1918 = vsel %vm1886, %v1822, 0.0
      %v1919 = vsel %vm1887, %v1823, 0.0
      %v1920 = vsel %vm1888, %v1824, 0.0
      %v1921 = vsel %vm1889, %v1825, 0.0
      %v1922 = vsel %vm1890, %v1826, 0.0
      %v1923 = vsel %vm1891, %v1827, 0.0
      %v1924 = vsel %vm1892, %v1828, 0.0
      %v1925 = vsel %vm1893, %v1829, 0.0
      %v1926 = vsel %vm1894, %v1830, 0.0
      %v1927 = vsel %vm1895, %v1831, 0.0
      %v1928 = vsel %vm1896, %v1832, 0.0
      %v1929 = vsel %vm1897, %v1833, 0.0
      %v1930 = vsel %vm1898, %v1834, 0.0
      %v1931 = vsel %vm1899, %v1835, 0.0
      %v1932 = vsel %vm1900, %v1836, 0.0
      %v1933 = vsel %vm1901, %v1837, 0.0
      %v1934 = vsel %vm1902, %v1838, 0.0
      %v1935 = vsel %vm1903, %v1839, 0.0
      %v1936 = vsel %vm1904, %v1840, 0.0
      %v1937 = vsel %vm1905, %v1841, 0.0
      %v1938 = vsel %vm1906, %v1842, 0.0
      %v1939 = vsel %vm1907, %v1843, 0.0
      %v1940 = vsel %vm1908, %v1844, 0.0
      %v1941 = vsel %vm1909, %v1845, 0.0
      %v1942 = vadd.f32 %v1775, %v1910
      %v1943 = vadd.f32 %v1776, %v1911
      %v1944 = vadd.f32 %v1777, %v1912
      %v1945 = vadd.f32 %v1778, %v1913
      %v1946 = vadd.f32 %v1779, %v1914
      %v1947 = vadd.f32 %v1780, %v1915
      %v1948 = vadd.f32 %v1781, %v1916
      %v1949 = vadd.f32 %v1782, %v1917
      %v1950 = vadd.f32 %v1783, %v1918
      %v1951 = vadd.f32 %v1784, %v1919
      %v1952 = vadd.f32 %v1785, %v1920
      %v1953 = vadd.f32 %v1786, %v1921
      %v1954 = vadd.f32 %v1787, %v1922
      %v1955 = vadd.f32 %v1788, %v1923
      %v1956 = vadd.f32 %v1789, %v1924
      %v1957 = vadd.f32 %v1790, %v1925
      %v1958 = vadd.f32 %v1791, %v1926
      %v1959 = vadd.f32 %v1792, %v1927
      %v1960 = vadd.f32 %v1793, %v1928
      %v1961 = vadd.f32 %v1794, %v1929
      %v1962 = vadd.f32 %v1795, %v1930
      %v1963 = vadd.f32 %v1796, %v1931
      %v1964 = vadd.f32 %v1797, %v1932
      %v1965 = vadd.f32 %v1798, %v1933
      %v1966 = vadd.f32 %v1799, %v1934
      %v1967 = vadd.f32 %v1800, %v1935
      %v1968 = vadd.f32 %v1801, %v1936
      %v1969 = vadd.f32 %v1802, %v1937
      %v1970 = vadd.f32 %v1803, %v1938
      %v1971 = vadd.f32 %v1804, %v1939
      %v1972 = vadd.f32 %v1805, %v1940
      %v1973 = vadd.f32 %v1806, %v1941
      %v1974 = vld [vmem:[#allocation2 + $0x109] sm:$0xff]
      %v1975 = vld [vmem:[#allocation2 + $0x111] sm:$0xff]
      %v1976 = vld [vmem:[%s3 + $0x5] sm:$0x1]
      %v1977 = vlaneseq
      %v1978 = vshrl.u32 %v1977, 7
      %v1979 = vsub.s32 0, %v1978
      %v1980 = vrot.slane %v1976, %v1979
      %v1981 = vmul.f32 %v1580, %v1980
      %v1982 = vmul.f32 %v1581, %v1980
      %v1983 = vmul.f32 %v1582, %v1980
      %v1984 = vmul.f32 %v1583, %v1980
      %v1985 = vmul.f32 %v1584, %v1980
      %v1986 = vmul.f32 %v1585, %v1980
      %v1987 = vmul.f32 %v1586, %v1980
      %v1988 = vmul.f32 %v1587, %v1980
      %v1989 = vmul.f32 %v1588, %v1980
      %v1990 = vmul.f32 %v1589, %v1980
      %v1991 = vmul.f32 %v1590, %v1980
      %v1992 = vmul.f32 %v1591, %v1980
      %v1993 = vmul.f32 %v1592, %v1980
      %v1994 = vmul.f32 %v1593, %v1980
      %v1995 = vmul.f32 %v1594, %v1980
      %v1996 = vmul.f32 %v1595, %v1980
      %v1997 = vmul.f32 %v1596, %v1980
      %v1998 = vmul.f32 %v1597, %v1980
      %v1999 = vmul.f32 %v1598, %v1980
      %v2000 = vmul.f32 %v1599, %v1980
      %v2001 = vmul.f32 %v1600, %v1980
      %v2002 = vmul.f32 %v1601, %v1980
      %v2003 = vmul.f32 %v1602, %v1980
      %v2004 = vmul.f32 %v1603, %v1980
      %v2005 = vmul.f32 %v1604, %v1980
      %v2006 = vmul.f32 %v1605, %v1980
      %v2007 = vmul.f32 %v1606, %v1980
      %v2008 = vmul.f32 %v1607, %v1980
      %v2009 = vmul.f32 %v1608, %v1980
      %v2010 = vmul.f32 %v1609, %v1980
      %v2011 = vmul.f32 %v1974, %v1980
      %v2012 = vmul.f32 %v1975, %v1980
      %v2013 = vsel %vm983, 1, 0
      %v2014 = vsel %vm984, 1, 0
      %v2015 = vsel %vm985, 1, 0
      %v2016 = vsel %vm986, 1, 0
      %v2017 = vsel %vm987, 1, 0
      %v2018 = vsel %vm988, 1, 0
      %v2019 = vsel %vm989, 1, 0
      %v2020 = vsel %vm990, 1, 0
      %v2021 = vsel %vm991, 1, 0
      %v2022 = vsel %vm992, 1, 0
      %v2023 = vsel %vm993, 1, 0
      %v2024 = vsel %vm994, 1, 0
      %v2025 = vsel %vm995, 1, 0
      %v2026 = vsel %vm996, 1, 0
      %v2027 = vsel %vm997, 1, 0
      %v2028 = vsel %vm998, 1, 0
      %v2029 = vsel %vm999, 1, 0
      %v2030 = vsel %vm1000, 1, 0
      %v2031 = vsel %vm1001, 1, 0
      %v2032 = vsel %vm1002, 1, 0
      %v2033 = vsel %vm1003, 1, 0
      %v2034 = vsel %vm1004, 1, 0
      %v2035 = vsel %vm1005, 1, 0
      %v2036 = vsel %vm1006, 1, 0
      %v2037 = vsel %vm1007, 1, 0
      %v2038 = vsel %vm1008, 1, 0
      %v2039 = vsel %vm1009, 1, 0
      %v2040 = vsel %vm1010, 1, 0
      %v2041 = vsel %vm1011, 1, 0
      %v2042 = vsel %vm1012, 1, 0
      %v2043 = vsel %vm1013, 1, 0
      %v2044 = vsel %vm1014, 1, 0
      %vm2045 = vcmp.eq.s32.totalorder %v2013, 1
      %vm2046 = vcmp.eq.s32.totalorder %v2014, 1
      %vm2047 = vcmp.eq.s32.totalorder %v2015, 1
      %vm2048 = vcmp.eq.s32.totalorder %v2016, 1
      %vm2049 = vcmp.eq.s32.totalorder %v2017, 1
      %vm2050 = vcmp.eq.s32.totalorder %v2018, 1
      %vm2051 = vcmp.eq.s32.totalorder %v2019, 1
      %vm2052 = vcmp.eq.s32.totalorder %v2020, 1
      %vm2053 = vcmp.eq.s32.totalorder %v2021, 1
      %vm2054 = vcmp.eq.s32.totalorder %v2022, 1
      %vm2055 = vcmp.eq.s32.totalorder %v2023, 1
      %vm2056 = vcmp.eq.s32.totalorder %v2024, 1
      %vm2057 = vcmp.eq.s32.totalorder %v2025, 1
      %vm2058 = vcmp.eq.s32.totalorder %v2026, 1
      %vm2059 = vcmp.eq.s32.totalorder %v2027, 1
      %vm2060 = vcmp.eq.s32.totalorder %v2028, 1
      %vm2061 = vcmp.eq.s32.totalorder %v2029, 1
      %vm2062 = vcmp.eq.s32.totalorder %v2030, 1
      %vm2063 = vcmp.eq.s32.totalorder %v2031, 1
      %vm2064 = vcmp.eq.s32.totalorder %v2032, 1
      %vm2065 = vcmp.eq.s32.totalorder %v2033, 1
      %vm2066 = vcmp.eq.s32.totalorder %v2034, 1
      %vm2067 = vcmp.eq.s32.totalorder %v2035, 1
      %vm2068 = vcmp.eq.s32.totalorder %v2036, 1
      %vm2069 = vcmp.eq.s32.totalorder %v2037, 1
      %vm2070 = vcmp.eq.s32.totalorder %v2038, 1
      %vm2071 = vcmp.eq.s32.totalorder %v2039, 1
      %vm2072 = vcmp.eq.s32.totalorder %v2040, 1
      %vm2073 = vcmp.eq.s32.totalorder %v2041, 1
      %vm2074 = vcmp.eq.s32.totalorder %v2042, 1
      %vm2075 = vcmp.eq.s32.totalorder %v2043, 1
      %vm2076 = vcmp.eq.s32.totalorder %v2044, 1
      %v2077 = vsel %vm2045, %v1981, 0.0
      %v2078 = vsel %vm2046, %v1982, 0.0
      %v2079 = vsel %vm2047, %v1983, 0.0
      %v2080 = vsel %vm2048, %v1984, 0.0
      %v2081 = vsel %vm2049, %v1985, 0.0
      %v2082 = vsel %vm2050, %v1986, 0.0
      %v2083 = vsel %vm2051, %v1987, 0.0
      %v2084 = vsel %vm2052, %v1988, 0.0
      %v2085 = vsel %vm2053, %v1989, 0.0
      %v2086 = vsel %vm2054, %v1990, 0.0
      %v2087 = vsel %vm2055, %v1991, 0.0
      %v2088 = vsel %vm2056, %v1992, 0.0
      %v2089 = vsel %vm2057, %v1993, 0.0
      %v2090 = vsel %vm2058, %v1994, 0.0
      %v2091 = vsel %vm2059, %v1995, 0.0
      %v2092 = vsel %vm2060, %v1996, 0.0
      %v2093 = vsel %vm2061, %v1997, 0.0
      %v2094 = vsel %vm2062, %v1998, 0.0
      %v2095 = vsel %vm2063, %v1999, 0.0
      %v2096 = vsel %vm2064, %v2000, 0.0
      %v2097 = vsel %vm2065, %v2001, 0.0
      %v2098 = vsel %vm2066, %v2002, 0.0
      %v2099 = vsel %vm2067, %v2003, 0.0
      %v2100 = vsel %vm2068, %v2004, 0.0
      %v2101 = vsel %vm2069, %v2005, 0.0
      %v2102 = vsel %vm2070, %v2006, 0.0
      %v2103 = vsel %vm2071, %v2007, 0.0
      %v2104 = vsel %vm2072, %v2008, 0.0
      %v2105 = vsel %vm2073, %v2009, 0.0
      %v2106 = vsel %vm2074, %v2010, 0.0
      %v2107 = vsel %vm2075, %v2011, 0.0
      %v2108 = vsel %vm2076, %v2012, 0.0
      %v2109 = vadd.f32 %v1942, %v2077
      %v2110 = vadd.f32 %v1943, %v2078
      %v2111 = vadd.f32 %v1944, %v2079
      %v2112 = vadd.f32 %v1945, %v2080
      %v2113 = vadd.f32 %v1946, %v2081
      %v2114 = vadd.f32 %v1947, %v2082
      %v2115 = vadd.f32 %v1948, %v2083
      %v2116 = vadd.f32 %v1949, %v2084
      %v2117 = vadd.f32 %v1950, %v2085
      %v2118 = vadd.f32 %v1951, %v2086
      %v2119 = vadd.f32 %v1952, %v2087
      %v2120 = vadd.f32 %v1953, %v2088
      %v2121 = vadd.f32 %v1954, %v2089
      %v2122 = vadd.f32 %v1955, %v2090
      %v2123 = vadd.f32 %v1956, %v2091
      %v2124 = vadd.f32 %v1957, %v2092
      %v2125 = vadd.f32 %v1958, %v2093
      %v2126 = vadd.f32 %v1959, %v2094
      %v2127 = vadd.f32 %v1960, %v2095
      %v2128 = vadd.f32 %v1961, %v2096
      %v2129 = vadd.f32 %v1962, %v2097
      %v2130 = vadd.f32 %v1963, %v2098
      %v2131 = vadd.f32 %v1964, %v2099
      %v2132 = vadd.f32 %v1965, %v2100
      %v2133 = vadd.f32 %v1966, %v2101
      %v2134 = vadd.f32 %v1967, %v2102
      %v2135 = vadd.f32 %v1968, %v2103
      %v2136 = vadd.f32 %v1969, %v2104
      %v2137 = vadd.f32 %v1970, %v2105
      %v2138 = vadd.f32 %v1971, %v2106
      %v2139 = vadd.f32 %v1972, %v2107
      %v2140 = vadd.f32 %v1973, %v2108
      %v2141 = vld [vmem:[#allocation2 + $0x117] sm:$0xff]
      %v2142 = vld [vmem:[#allocation2 + $0x11f] sm:$0xff]
      %v2143 = vld [vmem:[%s3 + $0x6] sm:$0x1]
      %v2144 = vlaneseq
      %v2145 = vshrl.u32 %v2144, 7
      %v2146 = vsub.s32 0, %v2145
      %v2147 = vrot.slane %v2143, %v2146
      %v2148 = vmul.f32 %v1156, %v2147
      %v2149 = vmul.f32 %v1157, %v2147
      %v2150 = vmul.f32 %v1158, %v2147
      %v2151 = vmul.f32 %v1159, %v2147
      %v2152 = vmul.f32 %v1160, %v2147
      %v2153 = vmul.f32 %v1161, %v2147
      %v2154 = vmul.f32 %v1162, %v2147
      %v2155 = vmul.f32 %v1163, %v2147
      %v2156 = vmul.f32 %v1164, %v2147
      %v2157 = vmul.f32 %v1165, %v2147
      %v2158 = vmul.f32 %v1166, %v2147
      %v2159 = vmul.f32 %v1167, %v2147
      %v2160 = vmul.f32 %v1168, %v2147
      %v2161 = vmul.f32 %v1169, %v2147
      %v2162 = vmul.f32 %v1170, %v2147
      %v2163 = vmul.f32 %v1171, %v2147
      %v2164 = vmul.f32 %v1172, %v2147
      %v2165 = vmul.f32 %v1173, %v2147
      %v2166 = vmul.f32 %v1174, %v2147
      %v2167 = vmul.f32 %v1175, %v2147
      %v2168 = vmul.f32 %v1176, %v2147
      %v2169 = vmul.f32 %v1177, %v2147
      %v2170 = vmul.f32 %v1178, %v2147
      %v2171 = vmul.f32 %v1179, %v2147
      %v2172 = vmul.f32 %v1180, %v2147
      %v2173 = vmul.f32 %v1181, %v2147
      %v2174 = vmul.f32 %v1182, %v2147
      %v2175 = vmul.f32 %v1183, %v2147
      %v2176 = vmul.f32 %v1807, %v2147
      %v2177 = vmul.f32 %v1808, %v2147
      %v2178 = vmul.f32 %v2141, %v2147
      %v2179 = vmul.f32 %v2142, %v2147
      %vm2180 = vmand %vm1047, %vm951
      %vm2181 = vmand %vm1048, %vm952
      %vm2182 = vmand %vm1049, %vm953
      %vm2183 = vmand %vm1050, %vm954
      %vm2184 = vmand %vm1051, %vm955
      %vm2185 = vmand %vm1052, %vm956
      %vm2186 = vmand %vm1053, %vm957
      %vm2187 = vmand %vm1054, %vm958
      %vm2188 = vmand %vm1055, %vm959
      %vm2189 = vmand %vm1056, %vm960
      %vm2190 = vmand %vm1057, %vm961
      %vm2191 = vmand %vm1058, %vm962
      %vm2192 = vmand %vm1059, %vm963
      %vm2193 = vmand %vm1060, %vm964
      %vm2194 = vmand %vm1061, %vm965
      %vm2195 = vmand %vm1062, %vm966
      %vm2196 = vmand %vm1063, %vm967
      %vm2197 = vmand %vm1064, %vm968
      %vm2198 = vmand %vm1065, %vm969
      %vm2199 = vmand %vm1066, %vm970
      %vm2200 = vmand %vm1067, %vm971
      %vm2201 = vmand %vm1068, %vm972
      %vm2202 = vmand %vm1069, %vm973
      %vm2203 = vmand %vm1070, %vm974
      %vm2204 = vmand %vm1071, %vm975
      %vm2205 = vmand %vm1072, %vm976
      %vm2206 = vmand %vm1073, %vm977
      %vm2207 = vmand %vm1074, %vm978
      %vm2208 = vmand %vm1075, %vm979
      %vm2209 = vmand %vm1076, %vm980
      %vm2210 = vmand %vm1077, %vm981
      %vm2211 = vmand %vm1078, %vm982
      %v2212 = vsel %vm2180, 1, 0
      %v2213 = vsel %vm2181, 1, 0
      %v2214 = vsel %vm2182, 1, 0
      %v2215 = vsel %vm2183, 1, 0
      %v2216 = vsel %vm2184, 1, 0
      %v2217 = vsel %vm2185, 1, 0
      %v2218 = vsel %vm2186, 1, 0
      %v2219 = vsel %vm2187, 1, 0
      %v2220 = vsel %vm2188, 1, 0
      %v2221 = vsel %vm2189, 1, 0
      %v2222 = vsel %vm2190, 1, 0
      %v2223 = vsel %vm2191, 1, 0
      %v2224 = vsel %vm2192, 1, 0
      %v2225 = vsel %vm2193, 1, 0
      %v2226 = vsel %vm2194, 1, 0
      %v2227 = vsel %vm2195, 1, 0
      %v2228 = vsel %vm2196, 1, 0
      %v2229 = vsel %vm2197, 1, 0
      %v2230 = vsel %vm2198, 1, 0
      %v2231 = vsel %vm2199, 1, 0
      %v2232 = vsel %vm2200, 1, 0
      %v2233 = vsel %vm2201, 1, 0
      %v2234 = vsel %vm2202, 1, 0
      %v2235 = vsel %vm2203, 1, 0
      %v2236 = vsel %vm2204, 1, 0
      %v2237 = vsel %vm2205, 1, 0
      %v2238 = vsel %vm2206, 1, 0
      %v2239 = vsel %vm2207, 1, 0
      %v2240 = vsel %vm2208, 1, 0
      %v2241 = vsel %vm2209, 1, 0
      %v2242 = vsel %vm2210, 1, 0
      %v2243 = vsel %vm2211, 1, 0
      %vm2244 = vcmp.eq.s32.totalorder %v2212, 1
      %vm2245 = vcmp.eq.s32.totalorder %v2213, 1
      %vm2246 = vcmp.eq.s32.totalorder %v2214, 1
      %vm2247 = vcmp.eq.s32.totalorder %v2215, 1
      %vm2248 = vcmp.eq.s32.totalorder %v2216, 1
      %vm2249 = vcmp.eq.s32.totalorder %v2217, 1
      %vm2250 = vcmp.eq.s32.totalorder %v2218, 1
      %vm2251 = vcmp.eq.s32.totalorder %v2219, 1
      %vm2252 = vcmp.eq.s32.totalorder %v2220, 1
      %vm2253 = vcmp.eq.s32.totalorder %v2221, 1
      %vm2254 = vcmp.eq.s32.totalorder %v2222, 1
      %vm2255 = vcmp.eq.s32.totalorder %v2223, 1
      %vm2256 = vcmp.eq.s32.totalorder %v2224, 1
      %vm2257 = vcmp.eq.s32.totalorder %v2225, 1
      %vm2258 = vcmp.eq.s32.totalorder %v2226, 1
      %vm2259 = vcmp.eq.s32.totalorder %v2227, 1
      %vm2260 = vcmp.eq.s32.totalorder %v2228, 1
      %vm2261 = vcmp.eq.s32.totalorder %v2229, 1
      %vm2262 = vcmp.eq.s32.totalorder %v2230, 1
      %vm2263 = vcmp.eq.s32.totalorder %v2231, 1
      %vm2264 = vcmp.eq.s32.totalorder %v2232, 1
      %vm2265 = vcmp.eq.s32.totalorder %v2233, 1
      %vm2266 = vcmp.eq.s32.totalorder %v2234, 1
      %vm2267 = vcmp.eq.s32.totalorder %v2235, 1
      %vm2268 = vcmp.eq.s32.totalorder %v2236, 1
      %vm2269 = vcmp.eq.s32.totalorder %v2237, 1
      %vm2270 = vcmp.eq.s32.totalorder %v2238, 1
      %vm2271 = vcmp.eq.s32.totalorder %v2239, 1
      %vm2272 = vcmp.eq.s32.totalorder %v2240, 1
      %vm2273 = vcmp.eq.s32.totalorder %v2241, 1
      %vm2274 = vcmp.eq.s32.totalorder %v2242, 1
      %vm2275 = vcmp.eq.s32.totalorder %v2243, 1
      %v2276 = vsel %vm2244, %v2148, 0.0
      %v2277 = vsel %vm2245, %v2149, 0.0
      %v2278 = vsel %vm2246, %v2150, 0.0
      %v2279 = vsel %vm2247, %v2151, 0.0
      %v2280 = vsel %vm2248, %v2152, 0.0
      %v2281 = vsel %vm2249, %v2153, 0.0
      %v2282 = vsel %vm2250, %v2154, 0.0
      %v2283 = vsel %vm2251, %v2155, 0.0
      %v2284 = vsel %vm2252, %v2156, 0.0
      %v2285 = vsel %vm2253, %v2157, 0.0
      %v2286 = vsel %vm2254, %v2158, 0.0
      %v2287 = vsel %vm2255, %v2159, 0.0
      %v2288 = vsel %vm2256, %v2160, 0.0
      %v2289 = vsel %vm2257, %v2161, 0.0
      %v2290 = vsel %vm2258, %v2162, 0.0
      %v2291 = vsel %vm2259, %v2163, 0.0
      %v2292 = vsel %vm2260, %v2164, 0.0
      %v2293 = vsel %vm2261, %v2165, 0.0
      %v2294 = vsel %vm2262, %v2166, 0.0
      %v2295 = vsel %vm2263, %v2167, 0.0
      %v2296 = vsel %vm2264, %v2168, 0.0
      %v2297 = vsel %vm2265, %v2169, 0.0
      %v2298 = vsel %vm2266, %v2170, 0.0
      %v2299 = vsel %vm2267, %v2171, 0.0
      %v2300 = vsel %vm2268, %v2172, 0.0
      %v2301 = vsel %vm2269, %v2173, 0.0
      %v2302 = vsel %vm2270, %v2174, 0.0
      %v2303 = vsel %vm2271, %v2175, 0.0
      %v2304 = vsel %vm2272, %v2176, 0.0
      %v2305 = vsel %vm2273, %v2177, 0.0
      %v2306 = vsel %vm2274, %v2178, 0.0
      %v2307 = vsel %vm2275, %v2179, 0.0
      %v2308 = vadd.f32 %v2109, %v2276
      %v2309 = vadd.f32 %v2110, %v2277
      %v2310 = vadd.f32 %v2111, %v2278
      %v2311 = vadd.f32 %v2112, %v2279
      %v2312 = vadd.f32 %v2113, %v2280
      %v2313 = vadd.f32 %v2114, %v2281
      %v2314 = vadd.f32 %v2115, %v2282
      %v2315 = vadd.f32 %v2116, %v2283
      %v2316 = vadd.f32 %v2117, %v2284
      %v2317 = vadd.f32 %v2118, %v2285
      %v2318 = vadd.f32 %v2119, %v2286
      %v2319 = vadd.f32 %v2120, %v2287
      %v2320 = vadd.f32 %v2121, %v2288
      %v2321 = vadd.f32 %v2122, %v2289
      %v2322 = vadd.f32 %v2123, %v2290
      %v2323 = vadd.f32 %v2124, %v2291
      %v2324 = vadd.f32 %v2125, %v2292
      %v2325 = vadd.f32 %v2126, %v2293
      %v2326 = vadd.f32 %v2127, %v2294
      %v2327 = vadd.f32 %v2128, %v2295
      %v2328 = vadd.f32 %v2129, %v2296
      %v2329 = vadd.f32 %v2130, %v2297
      %v2330 = vadd.f32 %v2131, %v2298
      %v2331 = vadd.f32 %v2132, %v2299
      %v2332 = vadd.f32 %v2133, %v2300
      %v2333 = vadd.f32 %v2134, %v2301
      %v2334 = vadd.f32 %v2135, %v2302
      %v2335 = vadd.f32 %v2136, %v2303
      %v2336 = vadd.f32 %v2137, %v2304
      %v2337 = vadd.f32 %v2138, %v2305
      %v2338 = vadd.f32 %v2139, %v2306
      %v2339 = vadd.f32 %v2140, %v2307
      %v2340 = vld [vmem:[#allocation2 + $0x108] sm:$0xff]
      %v2341 = vld [vmem:[#allocation2 + $0x110] sm:$0xff]
      %v2342 = vld [vmem:[#allocation2 + $0x118] sm:$0xff]
      %v2343 = vld [vmem:[#allocation2 + $0x120] sm:$0xff]
      %v2344 = vld [vmem:[%s3 + $0x7] sm:$0x1]
      %v2345 = vlaneseq
      %v2346 = vshrl.u32 %v2345, 7
      %v2347 = vsub.s32 0, %v2346
      %v2348 = vrot.slane %v2344, %v2347
      %v2349 = vmul.f32 %v1385, %v2348
      %v2350 = vmul.f32 %v1386, %v2348
      %v2351 = vmul.f32 %v1387, %v2348
      %v2352 = vmul.f32 %v1388, %v2348
      %v2353 = vmul.f32 %v1389, %v2348
      %v2354 = vmul.f32 %v1390, %v2348
      %v2355 = vmul.f32 %v1391, %v2348
      %v2356 = vmul.f32 %v1392, %v2348
      %v2357 = vmul.f32 %v1393, %v2348
      %v2358 = vmul.f32 %v1394, %v2348
      %v2359 = vmul.f32 %v1395, %v2348
      %v2360 = vmul.f32 %v1396, %v2348
      %v2361 = vmul.f32 %v1397, %v2348
      %v2362 = vmul.f32 %v1398, %v2348
      %v2363 = vmul.f32 %v1399, %v2348
      %v2364 = vmul.f32 %v1400, %v2348
      %v2365 = vmul.f32 %v1401, %v2348
      %v2366 = vmul.f32 %v1402, %v2348
      %v2367 = vmul.f32 %v1403, %v2348
      %v2368 = vmul.f32 %v1404, %v2348
      %v2369 = vmul.f32 %v1405, %v2348
      %v2370 = vmul.f32 %v1406, %v2348
      %v2371 = vmul.f32 %v1407, %v2348
      %v2372 = vmul.f32 %v1408, %v2348
      %v2373 = vmul.f32 %v1409, %v2348
      %v2374 = vmul.f32 %v1410, %v2348
      %v2375 = vmul.f32 %v1411, %v2348
      %v2376 = vmul.f32 %v1412, %v2348
      %v2377 = vmul.f32 %v2340, %v2348
      %v2378 = vmul.f32 %v2341, %v2348
      %v2379 = vmul.f32 %v2342, %v2348
      %v2380 = vmul.f32 %v2343, %v2348
      %v2381 = vsel %vm1047, 1, 0
      %v2382 = vsel %vm1048, 1, 0
      %v2383 = vsel %vm1049, 1, 0
      %v2384 = vsel %vm1050, 1, 0
      %v2385 = vsel %vm1051, 1, 0
      %v2386 = vsel %vm1052, 1, 0
      %v2387 = vsel %vm1053, 1, 0
      %v2388 = vsel %vm1054, 1, 0
      %v2389 = vsel %vm1055, 1, 0
      %v2390 = vsel %vm1056, 1, 0
      %v2391 = vsel %vm1057, 1, 0
      %v2392 = vsel %vm1058, 1, 0
      %v2393 = vsel %vm1059, 1, 0
      %v2394 = vsel %vm1060, 1, 0
      %v2395 = vsel %vm1061, 1, 0
      %v2396 = vsel %vm1062, 1, 0
      %v2397 = vsel %vm1063, 1, 0
      %v2398 = vsel %vm1064, 1, 0
      %v2399 = vsel %vm1065, 1, 0
      %v2400 = vsel %vm1066, 1, 0
      %v2401 = vsel %vm1067, 1, 0
      %v2402 = vsel %vm1068, 1, 0
      %v2403 = vsel %vm1069, 1, 0
      %v2404 = vsel %vm1070, 1, 0
      %v2405 = vsel %vm1071, 1, 0
      %v2406 = vsel %vm1072, 1, 0
      %v2407 = vsel %vm1073, 1, 0
      %v2408 = vsel %vm1074, 1, 0
      %v2409 = vsel %vm1075, 1, 0
      %v2410 = vsel %vm1076, 1, 0
      %v2411 = vsel %vm1077, 1, 0
      %v2412 = vsel %vm1078, 1, 0
      %vm2413 = vcmp.eq.s32.totalorder %v2381, 1
      %vm2414 = vcmp.eq.s32.totalorder %v2382, 1
      %vm2415 = vcmp.eq.s32.totalorder %v2383, 1
      %vm2416 = vcmp.eq.s32.totalorder %v2384, 1
      %vm2417 = vcmp.eq.s32.totalorder %v2385, 1
      %vm2418 = vcmp.eq.s32.totalorder %v2386, 1
      %vm2419 = vcmp.eq.s32.totalorder %v2387, 1
      %vm2420 = vcmp.eq.s32.totalorder %v2388, 1
      %vm2421 = vcmp.eq.s32.totalorder %v2389, 1
      %vm2422 = vcmp.eq.s32.totalorder %v2390, 1
      %vm2423 = vcmp.eq.s32.totalorder %v2391, 1
      %vm2424 = vcmp.eq.s32.totalorder %v2392, 1
      %vm2425 = vcmp.eq.s32.totalorder %v2393, 1
      %vm2426 = vcmp.eq.s32.totalorder %v2394, 1
      %vm2427 = vcmp.eq.s32.totalorder %v2395, 1
      %vm2428 = vcmp.eq.s32.totalorder %v2396, 1
      %vm2429 = vcmp.eq.s32.totalorder %v2397, 1
      %vm2430 = vcmp.eq.s32.totalorder %v2398, 1
      %vm2431 = vcmp.eq.s32.totalorder %v2399, 1
      %vm2432 = vcmp.eq.s32.totalorder %v2400, 1
      %vm2433 = vcmp.eq.s32.totalorder %v2401, 1
      %vm2434 = vcmp.eq.s32.totalorder %v2402, 1
      %vm2435 = vcmp.eq.s32.totalorder %v2403, 1
      %vm2436 = vcmp.eq.s32.totalorder %v2404, 1
      %vm2437 = vcmp.eq.s32.totalorder %v2405, 1
      %vm2438 = vcmp.eq.s32.totalorder %v2406, 1
      %vm2439 = vcmp.eq.s32.totalorder %v2407, 1
      %vm2440 = vcmp.eq.s32.totalorder %v2408, 1
      %vm2441 = vcmp.eq.s32.totalorder %v2409, 1
      %vm2442 = vcmp.eq.s32.totalorder %v2410, 1
      %vm2443 = vcmp.eq.s32.totalorder %v2411, 1
      %vm2444 = vcmp.eq.s32.totalorder %v2412, 1
      %v2445 = vsel %vm2413, %v2349, 0.0
      %v2446 = vsel %vm2414, %v2350, 0.0
      %v2447 = vsel %vm2415, %v2351, 0.0
      %v2448 = vsel %vm2416, %v2352, 0.0
      %v2449 = vsel %vm2417, %v2353, 0.0
      %v2450 = vsel %vm2418, %v2354, 0.0
      %v2451 = vsel %vm2419, %v2355, 0.0
      %v2452 = vsel %vm2420, %v2356, 0.0
      %v2453 = vsel %vm2421, %v2357, 0.0
      %v2454 = vsel %vm2422, %v2358, 0.0
      %v2455 = vsel %vm2423, %v2359, 0.0
      %v2456 = vsel %vm2424, %v2360, 0.0
      %v2457 = vsel %vm2425, %v2361, 0.0
      %v2458 = vsel %vm2426, %v2362, 0.0
      %v2459 = vsel %vm2427, %v2363, 0.0
      %v2460 = vsel %vm2428, %v2364, 0.0
      %v2461 = vsel %vm2429, %v2365, 0.0
      %v2462 = vsel %vm2430, %v2366, 0.0
      %v2463 = vsel %vm2431, %v2367, 0.0
      %v2464 = vsel %vm2432, %v2368, 0.0
      %v2465 = vsel %vm2433, %v2369, 0.0
      %v2466 = vsel %vm2434, %v2370, 0.0
      %v2467 = vsel %vm2435, %v2371, 0.0
      %v2468 = vsel %vm2436, %v2372, 0.0
      %v2469 = vsel %vm2437, %v2373, 0.0
      %v2470 = vsel %vm2438, %v2374, 0.0
      %v2471 = vsel %vm2439, %v2375, 0.0
      %v2472 = vsel %vm2440, %v2376, 0.0
      %v2473 = vsel %vm2441, %v2377, 0.0
      %v2474 = vsel %vm2442, %v2378, 0.0
      %v2475 = vsel %vm2443, %v2379, 0.0
      %v2476 = vsel %vm2444, %v2380, 0.0
      %v2477 = vadd.f32 %v2308, %v2445
      %v2478 = vadd.f32 %v2309, %v2446
      %v2479 = vadd.f32 %v2310, %v2447
      %v2480 = vadd.f32 %v2311, %v2448
      %v2481 = vadd.f32 %v2312, %v2449
      %v2482 = vadd.f32 %v2313, %v2450
      %v2483 = vadd.f32 %v2314, %v2451
      %v2484 = vadd.f32 %v2315, %v2452
      %v2485 = vadd.f32 %v2316, %v2453
      %v2486 = vadd.f32 %v2317, %v2454
      %v2487 = vadd.f32 %v2318, %v2455
      %v2488 = vadd.f32 %v2319, %v2456
      %v2489 = vadd.f32 %v2320, %v2457
      %v2490 = vadd.f32 %v2321, %v2458
      %v2491 = vadd.f32 %v2322, %v2459
      %v2492 = vadd.f32 %v2323, %v2460
      %v2493 = vadd.f32 %v2324, %v2461
      %v2494 = vadd.f32 %v2325, %v2462
      %v2495 = vadd.f32 %v2326, %v2463
      %v2496 = vadd.f32 %v2327, %v2464
      %v2497 = vadd.f32 %v2328, %v2465
      %v2498 = vadd.f32 %v2329, %v2466
      %v2499 = vadd.f32 %v2330, %v2467
      %v2500 = vadd.f32 %v2331, %v2468
      %v2501 = vadd.f32 %v2332, %v2469
      %v2502 = vadd.f32 %v2333, %v2470
      %v2503 = vadd.f32 %v2334, %v2471
      %v2504 = vadd.f32 %v2335, %v2472
      %v2505 = vadd.f32 %v2336, %v2473
      %v2506 = vadd.f32 %v2337, %v2474
      %v2507 = vadd.f32 %v2338, %v2475
      %v2508 = vadd.f32 %v2339, %v2476
      %v2509 = vld [vmem:[#allocation2 + $0x119] sm:$0xff]
      %v2510 = vld [vmem:[#allocation2 + $0x121] sm:$0xff]
      %v2511 = vld [vmem:[%s3 + $0x8] sm:$0x1]
      %v2512 = vlaneseq
      %v2513 = vshrl.u32 %v2512, 7
      %v2514 = vsub.s32 0, %v2513
      %v2515 = vrot.slane %v2511, %v2514
      %v2516 = vmul.f32 %v1582, %v2515
      %v2517 = vmul.f32 %v1583, %v2515
      %v2518 = vmul.f32 %v1584, %v2515
      %v2519 = vmul.f32 %v1585, %v2515
      %v2520 = vmul.f32 %v1586, %v2515
      %v2521 = vmul.f32 %v1587, %v2515
      %v2522 = vmul.f32 %v1588, %v2515
      %v2523 = vmul.f32 %v1589, %v2515
      %v2524 = vmul.f32 %v1590, %v2515
      %v2525 = vmul.f32 %v1591, %v2515
      %v2526 = vmul.f32 %v1592, %v2515
      %v2527 = vmul.f32 %v1593, %v2515
      %v2528 = vmul.f32 %v1594, %v2515
      %v2529 = vmul.f32 %v1595, %v2515
      %v2530 = vmul.f32 %v1596, %v2515
      %v2531 = vmul.f32 %v1597, %v2515
      %v2532 = vmul.f32 %v1598, %v2515
      %v2533 = vmul.f32 %v1599, %v2515
      %v2534 = vmul.f32 %v1600, %v2515
      %v2535 = vmul.f32 %v1601, %v2515
      %v2536 = vmul.f32 %v1602, %v2515
      %v2537 = vmul.f32 %v1603, %v2515
      %v2538 = vmul.f32 %v1604, %v2515
      %v2539 = vmul.f32 %v1605, %v2515
      %v2540 = vmul.f32 %v1606, %v2515
      %v2541 = vmul.f32 %v1607, %v2515
      %v2542 = vmul.f32 %v1608, %v2515
      %v2543 = vmul.f32 %v1609, %v2515
      %v2544 = vmul.f32 %v1974, %v2515
      %v2545 = vmul.f32 %v1975, %v2515
      %v2546 = vmul.f32 %v2509, %v2515
      %v2547 = vmul.f32 %v2510, %v2515
      %vm2548 = vmand %vm1047, %vm983
      %vm2549 = vmand %vm1048, %vm984
      %vm2550 = vmand %vm1049, %vm985
      %vm2551 = vmand %vm1050, %vm986
      %vm2552 = vmand %vm1051, %vm987
      %vm2553 = vmand %vm1052, %vm988
      %vm2554 = vmand %vm1053, %vm989
      %vm2555 = vmand %vm1054, %vm990
      %vm2556 = vmand %vm1055, %vm991
      %vm2557 = vmand %vm1056, %vm992
      %vm2558 = vmand %vm1057, %vm993
      %vm2559 = vmand %vm1058, %vm994
      %vm2560 = vmand %vm1059, %vm995
      %vm2561 = vmand %vm1060, %vm996
      %vm2562 = vmand %vm1061, %vm997
      %vm2563 = vmand %vm1062, %vm998
      %vm2564 = vmand %vm1063, %vm999
      %vm2565 = vmand %vm1064, %vm1000
      %vm2566 = vmand %vm1065, %vm1001
      %vm2567 = vmand %vm1066, %vm1002
      %vm2568 = vmand %vm1067, %vm1003
      %vm2569 = vmand %vm1068, %vm1004
      %vm2570 = vmand %vm1069, %vm1005
      %vm2571 = vmand %vm1070, %vm1006
      %vm2572 = vmand %vm1071, %vm1007
      %vm2573 = vmand %vm1072, %vm1008
      %vm2574 = vmand %vm1073, %vm1009
      %vm2575 = vmand %vm1074, %vm1010
      %vm2576 = vmand %vm1075, %vm1011
      %vm2577 = vmand %vm1076, %vm1012
      %vm2578 = vmand %vm1077, %vm1013
      %vm2579 = vmand %vm1078, %vm1014
      %v2580 = vsel %vm2548, 1, 0
      %v2581 = vsel %vm2549, 1, 0
      %v2582 = vsel %vm2550, 1, 0
      %v2583 = vsel %vm2551, 1, 0
      %v2584 = vsel %vm2552, 1, 0
      %v2585 = vsel %vm2553, 1, 0
      %v2586 = vsel %vm2554, 1, 0
      %v2587 = vsel %vm2555, 1, 0
      %v2588 = vsel %vm2556, 1, 0
      %v2589 = vsel %vm2557, 1, 0
      %v2590 = vsel %vm2558, 1, 0
      %v2591 = vsel %vm2559, 1, 0
      %v2592 = vsel %vm2560, 1, 0
      %v2593 = vsel %vm2561, 1, 0
      %v2594 = vsel %vm2562, 1, 0
      %v2595 = vsel %vm2563, 1, 0
      %v2596 = vsel %vm2564, 1, 0
      %v2597 = vsel %vm2565, 1, 0
      %v2598 = vsel %vm2566, 1, 0
      %v2599 = vsel %vm2567, 1, 0
      %v2600 = vsel %vm2568, 1, 0
      %v2601 = vsel %vm2569, 1, 0
      %v2602 = vsel %vm2570, 1, 0
      %v2603 = vsel %vm2571, 1, 0
      %v2604 = vsel %vm2572, 1, 0
      %v2605 = vsel %vm2573, 1, 0
      %v2606 = vsel %vm2574, 1, 0
      %v2607 = vsel %vm2575, 1, 0
      %v2608 = vsel %vm2576, 1, 0
      %v2609 = vsel %vm2577, 1, 0
      %v2610 = vsel %vm2578, 1, 0
      %v2611 = vsel %vm2579, 1, 0
      %vm2612 = vcmp.eq.s32.totalorder %v2580, 1
      %vm2613 = vcmp.eq.s32.totalorder %v2581, 1
      %vm2614 = vcmp.eq.s32.totalorder %v2582, 1
      %vm2615 = vcmp.eq.s32.totalorder %v2583, 1
      %vm2616 = vcmp.eq.s32.totalorder %v2584, 1
      %vm2617 = vcmp.eq.s32.totalorder %v2585, 1
      %vm2618 = vcmp.eq.s32.totalorder %v2586, 1
      %vm2619 = vcmp.eq.s32.totalorder %v2587, 1
      %vm2620 = vcmp.eq.s32.totalorder %v2588, 1
      %vm2621 = vcmp.eq.s32.totalorder %v2589, 1
      %vm2622 = vcmp.eq.s32.totalorder %v2590, 1
      %vm2623 = vcmp.eq.s32.totalorder %v2591, 1
      %vm2624 = vcmp.eq.s32.totalorder %v2592, 1
      %vm2625 = vcmp.eq.s32.totalorder %v2593, 1
      %vm2626 = vcmp.eq.s32.totalorder %v2594, 1
      %vm2627 = vcmp.eq.s32.totalorder %v2595, 1
      %vm2628 = vcmp.eq.s32.totalorder %v2596, 1
      %vm2629 = vcmp.eq.s32.totalorder %v2597, 1
      %vm2630 = vcmp.eq.s32.totalorder %v2598, 1
      %vm2631 = vcmp.eq.s32.totalorder %v2599, 1
      %vm2632 = vcmp.eq.s32.totalorder %v2600, 1
      %vm2633 = vcmp.eq.s32.totalorder %v2601, 1
      %vm2634 = vcmp.eq.s32.totalorder %v2602, 1
      %vm2635 = vcmp.eq.s32.totalorder %v2603, 1
      %vm2636 = vcmp.eq.s32.totalorder %v2604, 1
      %vm2637 = vcmp.eq.s32.totalorder %v2605, 1
      %vm2638 = vcmp.eq.s32.totalorder %v2606, 1
      %vm2639 = vcmp.eq.s32.totalorder %v2607, 1
      %vm2640 = vcmp.eq.s32.totalorder %v2608, 1
      %vm2641 = vcmp.eq.s32.totalorder %v2609, 1
      %vm2642 = vcmp.eq.s32.totalorder %v2610, 1
      %vm2643 = vcmp.eq.s32.totalorder %v2611, 1
      %v2644 = vsel %vm2612, %v2516, 0.0
      %v2645 = vsel %vm2613, %v2517, 0.0
      %v2646 = vsel %vm2614, %v2518, 0.0
      %v2647 = vsel %vm2615, %v2519, 0.0
      %v2648 = vsel %vm2616, %v2520, 0.0
      %v2649 = vsel %vm2617, %v2521, 0.0
      %v2650 = vsel %vm2618, %v2522, 0.0
      %v2651 = vsel %vm2619, %v2523, 0.0
      %v2652 = vsel %vm2620, %v2524, 0.0
      %v2653 = vsel %vm2621, %v2525, 0.0
      %v2654 = vsel %vm2622, %v2526, 0.0
      %v2655 = vsel %vm2623, %v2527, 0.0
      %v2656 = vsel %vm2624, %v2528, 0.0
      %v2657 = vsel %vm2625, %v2529, 0.0
      %v2658 = vsel %vm2626, %v2530, 0.0
      %v2659 = vsel %vm2627, %v2531, 0.0
      %v2660 = vsel %vm2628, %v2532, 0.0
      %v2661 = vsel %vm2629, %v2533, 0.0
      %v2662 = vsel %vm2630, %v2534, 0.0
      %v2663 = vsel %vm2631, %v2535, 0.0
      %v2664 = vsel %vm2632, %v2536, 0.0
      %v2665 = vsel %vm2633, %v2537, 0.0
      %v2666 = vsel %vm2634, %v2538, 0.0
      %v2667 = vsel %vm2635, %v2539, 0.0
      %v2668 = vsel %vm2636, %v2540, 0.0
      %v2669 = vsel %vm2637, %v2541, 0.0
      %v2670 = vsel %vm2638, %v2542, 0.0
      %v2671 = vsel %vm2639, %v2543, 0.0
      %v2672 = vsel %vm2640, %v2544, 0.0
      %v2673 = vsel %vm2641, %v2545, 0.0
      %v2674 = vsel %vm2642, %v2546, 0.0
      %v2675 = vsel %vm2643, %v2547, 0.0
      %v2676 = vadd.f32 %v2477, %v2644
      %v2677 = vadd.f32 %v2478, %v2645
      %v2678 = vadd.f32 %v2479, %v2646
      %v2679 = vadd.f32 %v2480, %v2647
      %v2680 = vadd.f32 %v2481, %v2648
      %v2681 = vadd.f32 %v2482, %v2649
      %v2682 = vadd.f32 %v2483, %v2650
      %v2683 = vadd.f32 %v2484, %v2651
      %v2684 = vadd.f32 %v2485, %v2652
      %v2685 = vadd.f32 %v2486, %v2653
      %v2686 = vadd.f32 %v2487, %v2654
      %v2687 = vadd.f32 %v2488, %v2655
      %v2688 = vadd.f32 %v2489, %v2656
      %v2689 = vadd.f32 %v2490, %v2657
      %v2690 = vadd.f32 %v2491, %v2658
      %v2691 = vadd.f32 %v2492, %v2659
      %v2692 = vadd.f32 %v2493, %v2660
      %v2693 = vadd.f32 %v2494, %v2661
      %v2694 = vadd.f32 %v2495, %v2662
      %v2695 = vadd.f32 %v2496, %v2663
      %v2696 = vadd.f32 %v2497, %v2664
      %v2697 = vadd.f32 %v2498, %v2665
      %v2698 = vadd.f32 %v2499, %v2666
      %v2699 = vadd.f32 %v2500, %v2667
      %v2700 = vadd.f32 %v2501, %v2668
      %v2701 = vadd.f32 %v2502, %v2669
      %v2702 = vadd.f32 %v2503, %v2670
      %v2703 = vadd.f32 %v2504, %v2671
      %v2704 = vadd.f32 %v2505, %v2672
      %v2705 = vadd.f32 %v2506, %v2673
      %v2706 = vadd.f32 %v2507, %v2674
      %v2707 = vadd.f32 %v2508, %v2675
      %v2708 = vadd.f32 %v2676, %v375
      %v2709 = vadd.f32 %v2677, %v378
      %v2710 = vadd.f32 %v2678, %v383
      %v2711 = vadd.f32 %v2679, %v386
      %v2712 = vadd.f32 %v2680, %v391
      %v2713 = vadd.f32 %v2681, %v394
      %v2714 = vadd.f32 %v2682, %v399
      %v2715 = vadd.f32 %v2683, %v402
      %v2716 = vadd.f32 %v2684, %v407
      %v2717 = vadd.f32 %v2685, %v410
      %v2718 = vadd.f32 %v2686, %v415
      %v2719 = vadd.f32 %v2687, %v418
      %v2720 = vadd.f32 %v2688, %v423
      %v2721 = vadd.f32 %v2689, %v426
      %v2722 = vadd.f32 %v2690, %v431
      %v2723 = vadd.f32 %v2691, %v434
      %v2724 = vadd.f32 %v2692, %v439
      %v2725 = vadd.f32 %v2693, %v442
      %v2726 = vadd.f32 %v2694, %v447
      %v2727 = vadd.f32 %v2695, %v450
      %v2728 = vadd.f32 %v2696, %v455
      %v2729 = vadd.f32 %v2697, %v458
      %v2730 = vadd.f32 %v2698, %v463
      %v2731 = vadd.f32 %v2699, %v466
      %v2732 = vadd.f32 %v2700, %v471
      %v2733 = vadd.f32 %v2701, %v474
      %v2734 = vadd.f32 %v2702, %v479
      %v2735 = vadd.f32 %v2703, %v482
      %v2736 = vadd.f32 %v2704, %v487
      %v2737 = vadd.f32 %v2705, %v490
      %v2738 = vadd.f32 %v2706, %v495
      %v2739 = vadd.f32 %v2707, %v498
      %v2740 = vsel %vm501, %v2708, 0.0
      %2741 = vadd.xlane.f32.xlu0 %v2740
      %v2742 = vpop.xlane.xlu0 %2741
      %v2743 = vsel %vm501, %v2709, 0.0
      %2744 = vadd.xlane.f32.xlu0 %v2743
      %v2745 = vpop.xlane.xlu0 %2744
      %v2746 = vsel %vm501, %v2710, 0.0
      %2747 = vadd.xlane.f32.xlu0 %v2746
      %v2748 = vpop.xlane.xlu0 %2747
      %v2749 = vsel %vm501, %v2711, 0.0
      %2750 = vadd.xlane.f32.xlu0 %v2749
      %v2751 = vpop.xlane.xlu0 %2750
      %v2752 = vsel %vm501, %v2712, 0.0
      %2753 = vadd.xlane.f32.xlu0 %v2752
      %v2754 = vpop.xlane.xlu0 %2753
      %v2755 = vsel %vm501, %v2713, 0.0
      %2756 = vadd.xlane.f32.xlu0 %v2755
      %v2757 = vpop.xlane.xlu0 %2756
      %v2758 = vsel %vm501, %v2714, 0.0
      %2759 = vadd.xlane.f32.xlu0 %v2758
      %v2760 = vpop.xlane.xlu0 %2759
      %v2761 = vsel %vm501, %v2715, 0.0
      %2762 = vadd.xlane.f32.xlu0 %v2761
      %v2763 = vpop.xlane.xlu0 %2762
      %v2764 = vsel %vm501, %v2716, 0.0
      %2765 = vadd.xlane.f32.xlu0 %v2764
      %v2766 = vpop.xlane.xlu0 %2765
      %v2767 = vsel %vm501, %v2717, 0.0
      %2768 = vadd.xlane.f32.xlu0 %v2767
      %v2769 = vpop.xlane.xlu0 %2768
      %v2770 = vsel %vm501, %v2718, 0.0
      %2771 = vadd.xlane.f32.xlu0 %v2770
      %v2772 = vpop.xlane.xlu0 %2771
      %v2773 = vsel %vm501, %v2719, 0.0
      %2774 = vadd.xlane.f32.xlu0 %v2773
      %v2775 = vpop.xlane.xlu0 %2774
      %v2776 = vsel %vm501, %v2720, 0.0
      %2777 = vadd.xlane.f32.xlu0 %v2776
      %v2778 = vpop.xlane.xlu0 %2777
      %v2779 = vsel %vm501, %v2721, 0.0
      %2780 = vadd.xlane.f32.xlu0 %v2779
      %v2781 = vpop.xlane.xlu0 %2780
      %v2782 = vsel %vm501, %v2722, 0.0
      %2783 = vadd.xlane.f32.xlu0 %v2782
      %v2784 = vpop.xlane.xlu0 %2783
      %v2785 = vsel %vm501, %v2723, 0.0
      %2786 = vadd.xlane.f32.xlu0 %v2785
      %v2787 = vpop.xlane.xlu0 %2786
      %v2788 = vsel %vm501, %v2724, 0.0
      %2789 = vadd.xlane.f32.xlu0 %v2788
      %v2790 = vpop.xlane.xlu0 %2789
      %v2791 = vsel %vm501, %v2725, 0.0
      %2792 = vadd.xlane.f32.xlu0 %v2791
      %v2793 = vpop.xlane.xlu0 %2792
      %v2794 = vsel %vm501, %v2726, 0.0
      %2795 = vadd.xlane.f32.xlu0 %v2794
      %v2796 = vpop.xlane.xlu0 %2795
      %v2797 = vsel %vm501, %v2727, 0.0
      %2798 = vadd.xlane.f32.xlu0 %v2797
      %v2799 = vpop.xlane.xlu0 %2798
      %v2800 = vsel %vm501, %v2728, 0.0
      %2801 = vadd.xlane.f32.xlu0 %v2800
      %v2802 = vpop.xlane.xlu0 %2801
      %v2803 = vsel %vm501, %v2729, 0.0
      %2804 = vadd.xlane.f32.xlu0 %v2803
      %v2805 = vpop.xlane.xlu0 %2804
      %v2806 = vsel %vm501, %v2730, 0.0
      %2807 = vadd.xlane.f32.xlu0 %v2806
      %v2808 = vpop.xlane.xlu0 %2807
      %v2809 = vsel %vm501, %v2731, 0.0
      %2810 = vadd.xlane.f32.xlu0 %v2809
      %v2811 = vpop.xlane.xlu0 %2810
      %v2812 = vsel %vm501, %v2732, 0.0
      %2813 = vadd.xlane.f32.xlu0 %v2812
      %v2814 = vpop.xlane.xlu0 %2813
      %v2815 = vsel %vm501, %v2733, 0.0
      %2816 = vadd.xlane.f32.xlu0 %v2815
      %v2817 = vpop.xlane.xlu0 %2816
      %v2818 = vsel %vm501, %v2734, 0.0
      %2819 = vadd.xlane.f32.xlu0 %v2818
      %v2820 = vpop.xlane.xlu0 %2819
      %v2821 = vsel %vm501, %v2735, 0.0
      %2822 = vadd.xlane.f32.xlu0 %v2821
      %v2823 = vpop.xlane.xlu0 %2822
      %v2824 = vsel %vm501, %v2736, 0.0
      %2825 = vadd.xlane.f32.xlu0 %v2824
      %v2826 = vpop.xlane.xlu0 %2825
      %v2827 = vsel %vm501, %v2737, 0.0
      %2828 = vadd.xlane.f32.xlu0 %v2827
      %v2829 = vpop.xlane.xlu0 %2828
      %v2830 = vsel %vm501, %v2738, 0.0
      %2831 = vadd.xlane.f32.xlu0 %v2830
      %v2832 = vpop.xlane.xlu0 %2831
      %v2833 = vsel %vm501, %v2739, 0.0
      %2834 = vadd.xlane.f32.xlu0 %v2833
      %v2835 = vpop.xlane.xlu0 %2834
      %v2836 = vrcp.pop 16.0
      %v2837 = vmul.f32 %v2742, %v2836
      %v2838 = vmul.f32 %v2745, %v2836
      %v2839 = vmul.f32 %v2748, %v2836
      %v2840 = vmul.f32 %v2751, %v2836
      %v2841 = vmul.f32 %v2754, %v2836
      %v2842 = vmul.f32 %v2757, %v2836
      %v2843 = vmul.f32 %v2760, %v2836
      %v2844 = vmul.f32 %v2763, %v2836
      %v2845 = vmul.f32 %v2766, %v2836
      %v2846 = vmul.f32 %v2769, %v2836
      %v2847 = vmul.f32 %v2772, %v2836
      %v2848 = vmul.f32 %v2775, %v2836
      %v2849 = vmul.f32 %v2778, %v2836
      %v2850 = vmul.f32 %v2781, %v2836
      %v2851 = vmul.f32 %v2784, %v2836
      %v2852 = vmul.f32 %v2787, %v2836
      %v2853 = vmul.f32 %v2790, %v2836
      %v2854 = vmul.f32 %v2793, %v2836
      %v2855 = vmul.f32 %v2796, %v2836
      %v2856 = vmul.f32 %v2799, %v2836
      %v2857 = vmul.f32 %v2802, %v2836
      %v2858 = vmul.f32 %v2805, %v2836
      %v2859 = vmul.f32 %v2808, %v2836
      %v2860 = vmul.f32 %v2811, %v2836
      %v2861 = vmul.f32 %v2814, %v2836
      %v2862 = vmul.f32 %v2817, %v2836
      %v2863 = vmul.f32 %v2820, %v2836
      %v2864 = vmul.f32 %v2823, %v2836
      %v2865 = vmul.f32 %v2826, %v2836
      %v2866 = vmul.f32 %v2829, %v2836
      %v2867 = vmul.f32 %v2832, %v2836
      %v2868 = vmul.f32 %v2835, %v2836
      %v2869 = vsub.f32 %v2708, %v2837
      %v2870 = vsub.f32 %v2709, %v2838
      %v2871 = vsub.f32 %v2710, %v2839
      %v2872 = vsub.f32 %v2711, %v2840
      %v2873 = vsub.f32 %v2712, %v2841
      %v2874 = vsub.f32 %v2713, %v2842
      %v2875 = vsub.f32 %v2714, %v2843
      %v2876 = vsub.f32 %v2715, %v2844
      %v2877 = vsub.f32 %v2716, %v2845
      %v2878 = vsub.f32 %v2717, %v2846
      %v2879 = vsub.f32 %v2718, %v2847
      %v2880 = vsub.f32 %v2719, %v2848
      %v2881 = vsub.f32 %v2720, %v2849
      %v2882 = vsub.f32 %v2721, %v2850
      %v2883 = vsub.f32 %v2722, %v2851
      %v2884 = vsub.f32 %v2723, %v2852
      %v2885 = vsub.f32 %v2724, %v2853
      %v2886 = vsub.f32 %v2725, %v2854
      %v2887 = vsub.f32 %v2726, %v2855
      %v2888 = vsub.f32 %v2727, %v2856
      %v2889 = vsub.f32 %v2728, %v2857
      %v2890 = vsub.f32 %v2729, %v2858
      %v2891 = vsub.f32 %v2730, %v2859
      %v2892 = vsub.f32 %v2731, %v2860
      %v2893 = vsub.f32 %v2732, %v2861
      %v2894 = vsub.f32 %v2733, %v2862
      %v2895 = vsub.f32 %v2734, %v2863
      %v2896 = vsub.f32 %v2735, %v2864
      %v2897 = vsub.f32 %v2736, %v2865
      %v2898 = vsub.f32 %v2737, %v2866
      %v2899 = vsub.f32 %v2738, %v2867
      %v2900 = vsub.f32 %v2739, %v2868
      %v2901 = vmul.f32 %v2869, %v2869
      %v2902 = vmul.f32 %v2870, %v2870
      %v2903 = vmul.f32 %v2871, %v2871
      %v2904 = vmul.f32 %v2872, %v2872
      %v2905 = vmul.f32 %v2873, %v2873
      %v2906 = vmul.f32 %v2874, %v2874
      %v2907 = vmul.f32 %v2875, %v2875
      %v2908 = vmul.f32 %v2876, %v2876
      %v2909 = vmul.f32 %v2877, %v2877
      %v2910 = vmul.f32 %v2878, %v2878
      %v2911 = vmul.f32 %v2879, %v2879
      %v2912 = vmul.f32 %v2880, %v2880
      %v2913 = vmul.f32 %v2881, %v2881
      %v2914 = vmul.f32 %v2882, %v2882
      %v2915 = vmul.f32 %v2883, %v2883
      %v2916 = vmul.f32 %v2884, %v2884
      %v2917 = vmul.f32 %v2885, %v2885
      %v2918 = vmul.f32 %v2886, %v2886
      %v2919 = vmul.f32 %v2887, %v2887
      %v2920 = vmul.f32 %v2888, %v2888
      %v2921 = vmul.f32 %v2889, %v2889
      %v2922 = vmul.f32 %v2890, %v2890
      %v2923 = vmul.f32 %v2891, %v2891
      %v2924 = vmul.f32 %v2892, %v2892
      %v2925 = vmul.f32 %v2893, %v2893
      %v2926 = vmul.f32 %v2894, %v2894
      %v2927 = vmul.f32 %v2895, %v2895
      %v2928 = vmul.f32 %v2896, %v2896
      %v2929 = vmul.f32 %v2897, %v2897
      %v2930 = vmul.f32 %v2898, %v2898
      %v2931 = vmul.f32 %v2899, %v2899
      %v2932 = vmul.f32 %v2900, %v2900
      %v2933 = vsel %vm501, %v2901, 0.0
      %2934 = vadd.xlane.f32.xlu0 %v2933
      %v2935 = vpop.xlane.xlu0 %2934
      %v2936 = vsel %vm501, %v2902, 0.0
      %2937 = vadd.xlane.f32.xlu0 %v2936
      %v2938 = vpop.xlane.xlu0 %2937
      %v2939 = vsel %vm501, %v2903, 0.0
      %2940 = vadd.xlane.f32.xlu0 %v2939
      %v2941 = vpop.xlane.xlu0 %2940
      %v2942 = vsel %vm501, %v2904, 0.0
      %2943 = vadd.xlane.f32.xlu0 %v2942
      %v2944 = vpop.xlane.xlu0 %2943
      %v2945 = vsel %vm501, %v2905, 0.0
      %2946 = vadd.xlane.f32.xlu0 %v2945
      %v2947 = vpop.xlane.xlu0 %2946
      %v2948 = vsel %vm501, %v2906, 0.0
      %2949 = vadd.xlane.f32.xlu0 %v2948
      %v2950 = vpop.xlane.xlu0 %2949
      %v2951 = vsel %vm501, %v2907, 0.0
      %2952 = vadd.xlane.f32.xlu0 %v2951
      %v2953 = vpop.xlane.xlu0 %2952
      %v2954 = vsel %vm501, %v2908, 0.0
      %2955 = vadd.xlane.f32.xlu0 %v2954
      %v2956 = vpop.xlane.xlu0 %2955
      %v2957 = vsel %vm501, %v2909, 0.0
      %2958 = vadd.xlane.f32.xlu0 %v2957
      %v2959 = vpop.xlane.xlu0 %2958
      %v2960 = vsel %vm501, %v2910, 0.0
      %2961 = vadd.xlane.f32.xlu0 %v2960
      %v2962 = vpop.xlane.xlu0 %2961
      %v2963 = vsel %vm501, %v2911, 0.0
      %2964 = vadd.xlane.f32.xlu0 %v2963
      %v2965 = vpop.xlane.xlu0 %2964
      %v2966 = vsel %vm501, %v2912, 0.0
      %2967 = vadd.xlane.f32.xlu0 %v2966
      %v2968 = vpop.xlane.xlu0 %2967
      %v2969 = vsel %vm501, %v2913, 0.0
      %2970 = vadd.xlane.f32.xlu0 %v2969
      %v2971 = vpop.xlane.xlu0 %2970
      %v2972 = vsel %vm501, %v2914, 0.0
      %2973 = vadd.xlane.f32.xlu0 %v2972
      %v2974 = vpop.xlane.xlu0 %2973
      %v2975 = vsel %vm501, %v2915, 0.0
      %2976 = vadd.xlane.f32.xlu0 %v2975
      %v2977 = vpop.xlane.xlu0 %2976
      %v2978 = vsel %vm501, %v2916, 0.0
      %2979 = vadd.xlane.f32.xlu0 %v2978
      %v2980 = vpop.xlane.xlu0 %2979
      %v2981 = vsel %vm501, %v2917, 0.0
      %2982 = vadd.xlane.f32.xlu0 %v2981
      %v2983 = vpop.xlane.xlu0 %2982
      %v2984 = vsel %vm501, %v2918, 0.0
      %2985 = vadd.xlane.f32.xlu0 %v2984
      %v2986 = vpop.xlane.xlu0 %2985
      %v2987 = vsel %vm501, %v2919, 0.0
      %2988 = vadd.xlane.f32.xlu0 %v2987
      %v2989 = vpop.xlane.xlu0 %2988
      %v2990 = vsel %vm501, %v2920, 0.0
      %2991 = vadd.xlane.f32.xlu0 %v2990
      %v2992 = vpop.xlane.xlu0 %2991
      %v2993 = vsel %vm501, %v2921, 0.0
      %2994 = vadd.xlane.f32.xlu0 %v2993
      %v2995 = vpop.xlane.xlu0 %2994
      %v2996 = vsel %vm501, %v2922, 0.0
      %2997 = vadd.xlane.f32.xlu0 %v2996
      %v2998 = vpop.xlane.xlu0 %2997
      %v2999 = vsel %vm501, %v2923, 0.0
      %3000 = vadd.xlane.f32.xlu0 %v2999
      %v3001 = vpop.xlane.xlu0 %3000
      %v3002 = vsel %vm501, %v2924, 0.0
      %3003 = vadd.xlane.f32.xlu0 %v3002
      %v3004 = vpop.xlane.xlu0 %3003
      %v3005 = vsel %vm501, %v2925, 0.0
      %3006 = vadd.xlane.f32.xlu0 %v3005
      %v3007 = vpop.xlane.xlu0 %3006
      %v3008 = vsel %vm501, %v2926, 0.0
      %3009 = vadd.xlane.f32.xlu0 %v3008
      %v3010 = vpop.xlane.xlu0 %3009
      %v3011 = vsel %vm501, %v2927, 0.0
      %3012 = vadd.xlane.f32.xlu0 %v3011
      %v3013 = vpop.xlane.xlu0 %3012
      %v3014 = vsel %vm501, %v2928, 0.0
      %3015 = vadd.xlane.f32.xlu0 %v3014
      %v3016 = vpop.xlane.xlu0 %3015
      %v3017 = vsel %vm501, %v2929, 0.0
      %3018 = vadd.xlane.f32.xlu0 %v3017
      %v3019 = vpop.xlane.xlu0 %3018
      %v3020 = vsel %vm501, %v2930, 0.0
      %3021 = vadd.xlane.f32.xlu0 %v3020
      %v3022 = vpop.xlane.xlu0 %3021
      %v3023 = vsel %vm501, %v2931, 0.0
      %3024 = vadd.xlane.f32.xlu0 %v3023
      %v3025 = vpop.xlane.xlu0 %3024
      %v3026 = vsel %vm501, %v2932, 0.0
      %3027 = vadd.xlane.f32.xlu0 %v3026
      %v3028 = vpop.xlane.xlu0 %3027
      %v3029 = vmul.f32 %v2935, %v2836
      %v3030 = vmul.f32 %v2938, %v2836
      %v3031 = vmul.f32 %v2941, %v2836
      %v3032 = vmul.f32 %v2944, %v2836
      %v3033 = vmul.f32 %v2947, %v2836
      %v3034 = vmul.f32 %v2950, %v2836
      %v3035 = vmul.f32 %v2953, %v2836
      %v3036 = vmul.f32 %v2956, %v2836
      %v3037 = vmul.f32 %v2959, %v2836
      %v3038 = vmul.f32 %v2962, %v2836
      %v3039 = vmul.f32 %v2965, %v2836
      %v3040 = vmul.f32 %v2968, %v2836
      %v3041 = vmul.f32 %v2971, %v2836
      %v3042 = vmul.f32 %v2974, %v2836
      %v3043 = vmul.f32 %v2977, %v2836
      %v3044 = vmul.f32 %v2980, %v2836
      %v3045 = vmul.f32 %v2983, %v2836
      %v3046 = vmul.f32 %v2986, %v2836
      %v3047 = vmul.f32 %v2989, %v2836
      %v3048 = vmul.f32 %v2992, %v2836
      %v3049 = vmul.f32 %v2995, %v2836
      %v3050 = vmul.f32 %v2998, %v2836
      %v3051 = vmul.f32 %v3001, %v2836
      %v3052 = vmul.f32 %v3004, %v2836
      %v3053 = vmul.f32 %v3007, %v2836
      %v3054 = vmul.f32 %v3010, %v2836
      %v3055 = vmul.f32 %v3013, %v2836
      %v3056 = vmul.f32 %v3016, %v2836
      %v3057 = vmul.f32 %v3019, %v2836
      %v3058 = vmul.f32 %v3022, %v2836
      %v3059 = vmul.f32 %v3025, %v2836
      %v3060 = vmul.f32 %v3028, %v2836
      %v3061 = vadd.f32 %v3029, 1e-06
      %v3062 = vadd.f32 %v3030, 1e-06
      %v3063 = vadd.f32 %v3031, 1e-06
      %v3064 = vadd.f32 %v3032, 1e-06
      %v3065 = vadd.f32 %v3033, 1e-06
      %v3066 = vadd.f32 %v3034, 1e-06
      %v3067 = vadd.f32 %v3035, 1e-06
      %v3068 = vadd.f32 %v3036, 1e-06
      %v3069 = vadd.f32 %v3037, 1e-06
      %v3070 = vadd.f32 %v3038, 1e-06
      %v3071 = vadd.f32 %v3039, 1e-06
      %v3072 = vadd.f32 %v3040, 1e-06
      %v3073 = vadd.f32 %v3041, 1e-06
      %v3074 = vadd.f32 %v3042, 1e-06
      %v3075 = vadd.f32 %v3043, 1e-06
      %v3076 = vadd.f32 %v3044, 1e-06
      %v3077 = vadd.f32 %v3045, 1e-06
      %v3078 = vadd.f32 %v3046, 1e-06
      %v3079 = vadd.f32 %v3047, 1e-06
      %v3080 = vadd.f32 %v3048, 1e-06
      %v3081 = vadd.f32 %v3049, 1e-06
      %v3082 = vadd.f32 %v3050, 1e-06
      %v3083 = vadd.f32 %v3051, 1e-06
      %v3084 = vadd.f32 %v3052, 1e-06
      %v3085 = vadd.f32 %v3053, 1e-06
      %v3086 = vadd.f32 %v3054, 1e-06
      %v3087 = vadd.f32 %v3055, 1e-06
      %v3088 = vadd.f32 %v3056, 1e-06
      %v3089 = vadd.f32 %v3057, 1e-06
      %v3090 = vadd.f32 %v3058, 1e-06
      %v3091 = vadd.f32 %v3059, 1e-06
      %v3092 = vadd.f32 %v3060, 1e-06
      %v3093 = vrsqrt.pop %v3061
      %v3094 = vrsqrt.pop %v3062
      %v3095 = vrsqrt.pop %v3063
      %v3096 = vrsqrt.pop %v3064
      %v3097 = vrsqrt.pop %v3065
      %v3098 = vrsqrt.pop %v3066
      %v3099 = vrsqrt.pop %v3067
      %v3100 = vrsqrt.pop %v3068
      %v3101 = vrsqrt.pop %v3069
      %v3102 = vrsqrt.pop %v3070
      %v3103 = vrsqrt.pop %v3071
      %v3104 = vrsqrt.pop %v3072
      %v3105 = vrsqrt.pop %v3073
      %v3106 = vrsqrt.pop %v3074
      %v3107 = vrsqrt.pop %v3075
      %v3108 = vrsqrt.pop %v3076
      %v3109 = vrsqrt.pop %v3077
      %v3110 = vrsqrt.pop %v3078
      %v3111 = vrsqrt.pop %v3079
      %v3112 = vrsqrt.pop %v3080
      %v3113 = vrsqrt.pop %v3081
      %v3114 = vrsqrt.pop %v3082
      %v3115 = vrsqrt.pop %v3083
      %v3116 = vrsqrt.pop %v3084
      %v3117 = vrsqrt.pop %v3085
      %v3118 = vrsqrt.pop %v3086
      %v3119 = vrsqrt.pop %v3087
      %v3120 = vrsqrt.pop %v3088
      %v3121 = vrsqrt.pop %v3089
      %v3122 = vrsqrt.pop %v3090
      %v3123 = vrsqrt.pop %v3091
      %v3124 = vrsqrt.pop %v3092
      %v3125 = vmul.f32 %v2869, %v3093
      %v3126 = vmul.f32 %v2870, %v3094
      %v3127 = vmul.f32 %v2871, %v3095
      %v3128 = vmul.f32 %v2872, %v3096
      %v3129 = vmul.f32 %v2873, %v3097
      %v3130 = vmul.f32 %v2874, %v3098
      %v3131 = vmul.f32 %v2875, %v3099
      %v3132 = vmul.f32 %v2876, %v3100
      %v3133 = vmul.f32 %v2877, %v3101
      %v3134 = vmul.f32 %v2878, %v3102
      %v3135 = vmul.f32 %v2879, %v3103
      %v3136 = vmul.f32 %v2880, %v3104
      %v3137 = vmul.f32 %v2881, %v3105
      %v3138 = vmul.f32 %v2882, %v3106
      %v3139 = vmul.f32 %v2883, %v3107
      %v3140 = vmul.f32 %v2884, %v3108
      %v3141 = vmul.f32 %v2885, %v3109
      %v3142 = vmul.f32 %v2886, %v3110
      %v3143 = vmul.f32 %v2887, %v3111
      %v3144 = vmul.f32 %v2888, %v3112
      %v3145 = vmul.f32 %v2889, %v3113
      %v3146 = vmul.f32 %v2890, %v3114
      %v3147 = vmul.f32 %v2891, %v3115
      %v3148 = vmul.f32 %v2892, %v3116
      %v3149 = vmul.f32 %v2893, %v3117
      %v3150 = vmul.f32 %v2894, %v3118
      %v3151 = vmul.f32 %v2895, %v3119
      %v3152 = vmul.f32 %v2896, %v3120
      %v3153 = vmul.f32 %v2897, %v3121
      %v3154 = vmul.f32 %v2898, %v3122
      %v3155 = vmul.f32 %v2899, %v3123
      %v3156 = vmul.f32 %v2900, %v3124
      %v3157 = vlaneseq
      %v3158 = vshrl.u32 %v3157, 7
      %v3159 = vsub.s32 0, %v3158
      %v3160 = vrot.slane %v228, %v3159
      %v3161 = vmul.f32 %v3125, %v3160
      %v3162 = vmul.f32 %v3126, %v3160
      %v3163 = vmul.f32 %v3127, %v3160
      %v3164 = vmul.f32 %v3128, %v3160
      %v3165 = vmul.f32 %v3129, %v3160
      %v3166 = vmul.f32 %v3130, %v3160
      %v3167 = vmul.f32 %v3131, %v3160
      %v3168 = vmul.f32 %v3132, %v3160
      %v3169 = vmul.f32 %v3133, %v3160
      %v3170 = vmul.f32 %v3134, %v3160
      %v3171 = vmul.f32 %v3135, %v3160
      %v3172 = vmul.f32 %v3136, %v3160
      %v3173 = vmul.f32 %v3137, %v3160
      %v3174 = vmul.f32 %v3138, %v3160
      %v3175 = vmul.f32 %v3139, %v3160
      %v3176 = vmul.f32 %v3140, %v3160
      %v3177 = vmul.f32 %v3141, %v3160
      %v3178 = vmul.f32 %v3142, %v3160
      %v3179 = vmul.f32 %v3143, %v3160
      %v3180 = vmul.f32 %v3144, %v3160
      %v3181 = vmul.f32 %v3145, %v3160
      %v3182 = vmul.f32 %v3146, %v3160
      %v3183 = vmul.f32 %v3147, %v3160
      %v3184 = vmul.f32 %v3148, %v3160
      %v3185 = vmul.f32 %v3149, %v3160
      %v3186 = vmul.f32 %v3150, %v3160
      %v3187 = vmul.f32 %v3151, %v3160
      %v3188 = vmul.f32 %v3152, %v3160
      %v3189 = vmul.f32 %v3153, %v3160
      %v3190 = vmul.f32 %v3154, %v3160
      %v3191 = vmul.f32 %v3155, %v3160
      %v3192 = vmul.f32 %v3156, %v3160
      %v3193 = vlaneseq
      %v3194 = vshrl.u32 %v3193, 7
      %v3195 = vsub.s32 0, %v3194
      %v3196 = vrot.slane %v229, %v3195
      %v3197 = vadd.f32 %v3161, %v3196
      %v3198 = vadd.f32 %v3162, %v3196
      %v3199 = vadd.f32 %v3163, %v3196
      %v3200 = vadd.f32 %v3164, %v3196
      %v3201 = vadd.f32 %v3165, %v3196
      %v3202 = vadd.f32 %v3166, %v3196
      %v3203 = vadd.f32 %v3167, %v3196
      %v3204 = vadd.f32 %v3168, %v3196
      %v3205 = vadd.f32 %v3169, %v3196
      %v3206 = vadd.f32 %v3170, %v3196
      %v3207 = vadd.f32 %v3171, %v3196
      %v3208 = vadd.f32 %v3172, %v3196
      %v3209 = vadd.f32 %v3173, %v3196
      %v3210 = vadd.f32 %v3174, %v3196
      %v3211 = vadd.f32 %v3175, %v3196
      %v3212 = vadd.f32 %v3176, %v3196
      %v3213 = vadd.f32 %v3177, %v3196
      %v3214 = vadd.f32 %v3178, %v3196
      %v3215 = vadd.f32 %v3179, %v3196
      %v3216 = vadd.f32 %v3180, %v3196
      %v3217 = vadd.f32 %v3181, %v3196
      %v3218 = vadd.f32 %v3182, %v3196
      %v3219 = vadd.f32 %v3183, %v3196
      %v3220 = vadd.f32 %v3184, %v3196
      %v3221 = vadd.f32 %v3185, %v3196
      %v3222 = vadd.f32 %v3186, %v3196
      %v3223 = vadd.f32 %v3187, %v3196
      %v3224 = vadd.f32 %v3188, %v3196
      %v3225 = vadd.f32 %v3189, %v3196
      %v3226 = vadd.f32 %v3190, %v3196
      %v3227 = vadd.f32 %v3191, %v3196
      %v3228 = vadd.f32 %v3192, %v3196
      %v3229 = vadd.f32 %v3197, %v375
      %v3230 = vadd.f32 %v3198, %v378
      %v3231 = vadd.f32 %v3199, %v383
      %v3232 = vadd.f32 %v3200, %v386
      %v3233 = vadd.f32 %v3201, %v391
      %v3234 = vadd.f32 %v3202, %v394
      %v3235 = vadd.f32 %v3203, %v399
      %v3236 = vadd.f32 %v3204, %v402
      %v3237 = vadd.f32 %v3205, %v407
      %v3238 = vadd.f32 %v3206, %v410
      %v3239 = vadd.f32 %v3207, %v415
      %v3240 = vadd.f32 %v3208, %v418
      %v3241 = vadd.f32 %v3209, %v423
      %v3242 = vadd.f32 %v3210, %v426
      %v3243 = vadd.f32 %v3211, %v431
      %v3244 = vadd.f32 %v3212, %v434
      %v3245 = vadd.f32 %v3213, %v439
      %v3246 = vadd.f32 %v3214, %v442
      %v3247 = vadd.f32 %v3215, %v447
      %v3248 = vadd.f32 %v3216, %v450
      %v3249 = vadd.f32 %v3217, %v455
      %v3250 = vadd.f32 %v3218, %v458
      %v3251 = vadd.f32 %v3219, %v463
      %v3252 = vadd.f32 %v3220, %v466
      %v3253 = vadd.f32 %v3221, %v471
      %v3254 = vadd.f32 %v3222, %v474
      %v3255 = vadd.f32 %v3223, %v479
      %v3256 = vadd.f32 %v3224, %v482
      %v3257 = vadd.f32 %v3225, %v487
      %v3258 = vadd.f32 %v3226, %v490
      %v3259 = vadd.f32 %v3227, %v495
      %v3260 = vadd.f32 %v3228, %v498
      %v3261 = vsel %vm501, %v3229, 0.0
      %3262 = vadd.xlane.f32.xlu0 %v3261
      %v3263 = vpop.xlane.xlu0 %3262
      %v3264 = vsel %vm501, %v3230, 0.0
      %3265 = vadd.xlane.f32.xlu0 %v3264
      %v3266 = vpop.xlane.xlu0 %3265
      %v3267 = vsel %vm501, %v3231, 0.0
      %3268 = vadd.xlane.f32.xlu0 %v3267
      %v3269 = vpop.xlane.xlu0 %3268
      %v3270 = vsel %vm501, %v3232, 0.0
      %3271 = vadd.xlane.f32.xlu0 %v3270
      %v3272 = vpop.xlane.xlu0 %3271
      %v3273 = vsel %vm501, %v3233, 0.0
      %3274 = vadd.xlane.f32.xlu0 %v3273
      %v3275 = vpop.xlane.xlu0 %3274
      %v3276 = vsel %vm501, %v3234, 0.0
      %3277 = vadd.xlane.f32.xlu0 %v3276
      %v3278 = vpop.xlane.xlu0 %3277
      %v3279 = vsel %vm501, %v3235, 0.0
      %3280 = vadd.xlane.f32.xlu0 %v3279
      %v3281 = vpop.xlane.xlu0 %3280
      %v3282 = vsel %vm501, %v3236, 0.0
      %3283 = vadd.xlane.f32.xlu0 %v3282
      %v3284 = vpop.xlane.xlu0 %3283
      %v3285 = vsel %vm501, %v3237, 0.0
      %3286 = vadd.xlane.f32.xlu0 %v3285
      %v3287 = vpop.xlane.xlu0 %3286
      %v3288 = vsel %vm501, %v3238, 0.0
      %3289 = vadd.xlane.f32.xlu0 %v3288
      %v3290 = vpop.xlane.xlu0 %3289
      %v3291 = vsel %vm501, %v3239, 0.0
      %3292 = vadd.xlane.f32.xlu0 %v3291
      %v3293 = vpop.xlane.xlu0 %3292
      %v3294 = vsel %vm501, %v3240, 0.0
      %3295 = vadd.xlane.f32.xlu0 %v3294
      %v3296 = vpop.xlane.xlu0 %3295
      %v3297 = vsel %vm501, %v3241, 0.0
      %3298 = vadd.xlane.f32.xlu0 %v3297
      %v3299 = vpop.xlane.xlu0 %3298
      %v3300 = vsel %vm501, %v3242, 0.0
      %3301 = vadd.xlane.f32.xlu0 %v3300
      %v3302 = vpop.xlane.xlu0 %3301
      %v3303 = vsel %vm501, %v3243, 0.0
      %3304 = vadd.xlane.f32.xlu0 %v3303
      %v3305 = vpop.xlane.xlu0 %3304
      %v3306 = vsel %vm501, %v3244, 0.0
      %3307 = vadd.xlane.f32.xlu0 %v3306
      %v3308 = vpop.xlane.xlu0 %3307
      %v3309 = vsel %vm501, %v3245, 0.0
      %3310 = vadd.xlane.f32.xlu0 %v3309
      %v3311 = vpop.xlane.xlu0 %3310
      %v3312 = vsel %vm501, %v3246, 0.0
      %3313 = vadd.xlane.f32.xlu0 %v3312
      %v3314 = vpop.xlane.xlu0 %3313
      %v3315 = vsel %vm501, %v3247, 0.0
      %3316 = vadd.xlane.f32.xlu0 %v3315
      %v3317 = vpop.xlane.xlu0 %3316
      %v3318 = vsel %vm501, %v3248, 0.0
      %3319 = vadd.xlane.f32.xlu0 %v3318
      %v3320 = vpop.xlane.xlu0 %3319
      %v3321 = vsel %vm501, %v3249, 0.0
      %3322 = vadd.xlane.f32.xlu0 %v3321
      %v3323 = vpop.xlane.xlu0 %3322
      %v3324 = vsel %vm501, %v3250, 0.0
      %3325 = vadd.xlane.f32.xlu0 %v3324
      %v3326 = vpop.xlane.xlu0 %3325
      %v3327 = vsel %vm501, %v3251, 0.0
      %3328 = vadd.xlane.f32.xlu0 %v3327
      %v3329 = vpop.xlane.xlu0 %3328
      %v3330 = vsel %vm501, %v3252, 0.0
      %3331 = vadd.xlane.f32.xlu0 %v3330
      %v3332 = vpop.xlane.xlu0 %3331
      %v3333 = vsel %vm501, %v3253, 0.0
      %3334 = vadd.xlane.f32.xlu0 %v3333
      %v3335 = vpop.xlane.xlu0 %3334
      %v3336 = vsel %vm501, %v3254, 0.0
      %3337 = vadd.xlane.f32.xlu0 %v3336
      %v3338 = vpop.xlane.xlu0 %3337
      %v3339 = vsel %vm501, %v3255, 0.0
      %3340 = vadd.xlane.f32.xlu0 %v3339
      %v3341 = vpop.xlane.xlu0 %3340
      %v3342 = vsel %vm501, %v3256, 0.0
      %3343 = vadd.xlane.f32.xlu0 %v3342
      %v3344 = vpop.xlane.xlu0 %3343
      %v3345 = vsel %vm501, %v3257, 0.0
      %3346 = vadd.xlane.f32.xlu0 %v3345
      %v3347 = vpop.xlane.xlu0 %3346
      %v3348 = vsel %vm501, %v3258, 0.0
      %3349 = vadd.xlane.f32.xlu0 %v3348
      %v3350 = vpop.xlane.xlu0 %3349
      %v3351 = vsel %vm501, %v3259, 0.0
      %3352 = vadd.xlane.f32.xlu0 %v3351
      %v3353 = vpop.xlane.xlu0 %3352
      %v3354 = vsel %vm501, %v3260, 0.0
      %3355 = vadd.xlane.f32.xlu0 %v3354
      %v3356 = vpop.xlane.xlu0 %3355
      %v3357 = vmul.f32 %v3263, %v2836
      %v3358 = vmul.f32 %v3266, %v2836
      %v3359 = vmul.f32 %v3269, %v2836
      %v3360 = vmul.f32 %v3272, %v2836
      %v3361 = vmul.f32 %v3275, %v2836
      %v3362 = vmul.f32 %v3278, %v2836
      %v3363 = vmul.f32 %v3281, %v2836
      %v3364 = vmul.f32 %v3284, %v2836
      %v3365 = vmul.f32 %v3287, %v2836
      %v3366 = vmul.f32 %v3290, %v2836
      %v3367 = vmul.f32 %v3293, %v2836
      %v3368 = vmul.f32 %v3296, %v2836
      %v3369 = vmul.f32 %v3299, %v2836
      %v3370 = vmul.f32 %v3302, %v2836
      %v3371 = vmul.f32 %v3305, %v2836
      %v3372 = vmul.f32 %v3308, %v2836
      %v3373 = vmul.f32 %v3311, %v2836
      %v3374 = vmul.f32 %v3314, %v2836
      %v3375 = vmul.f32 %v3317, %v2836
      %v3376 = vmul.f32 %v3320, %v2836
      %v3377 = vmul.f32 %v3323, %v2836
      %v3378 = vmul.f32 %v3326, %v2836
      %v3379 = vmul.f32 %v3329, %v2836
      %v3380 = vmul.f32 %v3332, %v2836
      %v3381 = vmul.f32 %v3335, %v2836
      %v3382 = vmul.f32 %v3338, %v2836
      %v3383 = vmul.f32 %v3341, %v2836
      %v3384 = vmul.f32 %v3344, %v2836
      %v3385 = vmul.f32 %v3347, %v2836
      %v3386 = vmul.f32 %v3350, %v2836
      %v3387 = vmul.f32 %v3353, %v2836
      %v3388 = vmul.f32 %v3356, %v2836
      %v3389 = vsub.f32 %v3229, %v3357
      %v3390 = vsub.f32 %v3230, %v3358
      %v3391 = vsub.f32 %v3231, %v3359
      %v3392 = vsub.f32 %v3232, %v3360
      %v3393 = vsub.f32 %v3233, %v3361
      %v3394 = vsub.f32 %v3234, %v3362
      %v3395 = vsub.f32 %v3235, %v3363
      %v3396 = vsub.f32 %v3236, %v3364
      %v3397 = vsub.f32 %v3237, %v3365
      %v3398 = vsub.f32 %v3238, %v3366
      %v3399 = vsub.f32 %v3239, %v3367
      %v3400 = vsub.f32 %v3240, %v3368
      %v3401 = vsub.f32 %v3241, %v3369
      %v3402 = vsub.f32 %v3242, %v3370
      %v3403 = vsub.f32 %v3243, %v3371
      %v3404 = vsub.f32 %v3244, %v3372
      %v3405 = vsub.f32 %v3245, %v3373
      %v3406 = vsub.f32 %v3246, %v3374
      %v3407 = vsub.f32 %v3247, %v3375
      %v3408 = vsub.f32 %v3248, %v3376
      %v3409 = vsub.f32 %v3249, %v3377
      %v3410 = vsub.f32 %v3250, %v3378
      %v3411 = vsub.f32 %v3251, %v3379
      %v3412 = vsub.f32 %v3252, %v3380
      %v3413 = vsub.f32 %v3253, %v3381
      %v3414 = vsub.f32 %v3254, %v3382
      %v3415 = vsub.f32 %v3255, %v3383
      %v3416 = vsub.f32 %v3256, %v3384
      %v3417 = vsub.f32 %v3257, %v3385
      %v3418 = vsub.f32 %v3258, %v3386
      %v3419 = vsub.f32 %v3259, %v3387
      %v3420 = vsub.f32 %v3260, %v3388
      %v3421 = vmul.f32 %v3389, %v3389
      %v3422 = vmul.f32 %v3390, %v3390
      %v3423 = vmul.f32 %v3391, %v3391
      %v3424 = vmul.f32 %v3392, %v3392
      %v3425 = vmul.f32 %v3393, %v3393
      %v3426 = vmul.f32 %v3394, %v3394
      %v3427 = vmul.f32 %v3395, %v3395
      %v3428 = vmul.f32 %v3396, %v3396
      %v3429 = vmul.f32 %v3397, %v3397
      %v3430 = vmul.f32 %v3398, %v3398
      %v3431 = vmul.f32 %v3399, %v3399
      %v3432 = vmul.f32 %v3400, %v3400
      %v3433 = vmul.f32 %v3401, %v3401
      %v3434 = vmul.f32 %v3402, %v3402
      %v3435 = vmul.f32 %v3403, %v3403
      %v3436 = vmul.f32 %v3404, %v3404
      %v3437 = vmul.f32 %v3405, %v3405
      %v3438 = vmul.f32 %v3406, %v3406
      %v3439 = vmul.f32 %v3407, %v3407
      %v3440 = vmul.f32 %v3408, %v3408
      %v3441 = vmul.f32 %v3409, %v3409
      %v3442 = vmul.f32 %v3410, %v3410
      %v3443 = vmul.f32 %v3411, %v3411
      %v3444 = vmul.f32 %v3412, %v3412
      %v3445 = vmul.f32 %v3413, %v3413
      %v3446 = vmul.f32 %v3414, %v3414
      %v3447 = vmul.f32 %v3415, %v3415
      %v3448 = vmul.f32 %v3416, %v3416
      %v3449 = vmul.f32 %v3417, %v3417
      %v3450 = vmul.f32 %v3418, %v3418
      %v3451 = vmul.f32 %v3419, %v3419
      %v3452 = vmul.f32 %v3420, %v3420
      %v3453 = vsel %vm501, %v3421, 0.0
      %3454 = vadd.xlane.f32.xlu0 %v3453
      %v3455 = vpop.xlane.xlu0 %3454
      %v3456 = vsel %vm501, %v3422, 0.0
      %3457 = vadd.xlane.f32.xlu0 %v3456
      %v3458 = vpop.xlane.xlu0 %3457
      %v3459 = vsel %vm501, %v3423, 0.0
      %3460 = vadd.xlane.f32.xlu0 %v3459
      %v3461 = vpop.xlane.xlu0 %3460
      %v3462 = vsel %vm501, %v3424, 0.0
      %3463 = vadd.xlane.f32.xlu0 %v3462
      %v3464 = vpop.xlane.xlu0 %3463
      %v3465 = vsel %vm501, %v3425, 0.0
      %3466 = vadd.xlane.f32.xlu0 %v3465
      %v3467 = vpop.xlane.xlu0 %3466
      %v3468 = vsel %vm501, %v3426, 0.0
      %3469 = vadd.xlane.f32.xlu0 %v3468
      %v3470 = vpop.xlane.xlu0 %3469
      %v3471 = vsel %vm501, %v3427, 0.0
      %3472 = vadd.xlane.f32.xlu0 %v3471
      %v3473 = vpop.xlane.xlu0 %3472
      %v3474 = vsel %vm501, %v3428, 0.0
      %3475 = vadd.xlane.f32.xlu0 %v3474
      %v3476 = vpop.xlane.xlu0 %3475
      %v3477 = vsel %vm501, %v3429, 0.0
      %3478 = vadd.xlane.f32.xlu0 %v3477
      %v3479 = vpop.xlane.xlu0 %3478
      %v3480 = vsel %vm501, %v3430, 0.0
      %3481 = vadd.xlane.f32.xlu0 %v3480
      %v3482 = vpop.xlane.xlu0 %3481
      %v3483 = vsel %vm501, %v3431, 0.0
      %3484 = vadd.xlane.f32.xlu0 %v3483
      %v3485 = vpop.xlane.xlu0 %3484
      %v3486 = vsel %vm501, %v3432, 0.0
      %3487 = vadd.xlane.f32.xlu0 %v3486
      %v3488 = vpop.xlane.xlu0 %3487
      %v3489 = vsel %vm501, %v3433, 0.0
      %3490 = vadd.xlane.f32.xlu0 %v3489
      %v3491 = vpop.xlane.xlu0 %3490
      %v3492 = vsel %vm501, %v3434, 0.0
      %3493 = vadd.xlane.f32.xlu0 %v3492
      %v3494 = vpop.xlane.xlu0 %3493
      %v3495 = vsel %vm501, %v3435, 0.0
      %3496 = vadd.xlane.f32.xlu0 %v3495
      %v3497 = vpop.xlane.xlu0 %3496
      %v3498 = vsel %vm501, %v3436, 0.0
      %3499 = vadd.xlane.f32.xlu0 %v3498
      %v3500 = vpop.xlane.xlu0 %3499
      %v3501 = vsel %vm501, %v3437, 0.0
      %3502 = vadd.xlane.f32.xlu0 %v3501
      %v3503 = vpop.xlane.xlu0 %3502
      %v3504 = vsel %vm501, %v3438, 0.0
      %3505 = vadd.xlane.f32.xlu0 %v3504
      %v3506 = vpop.xlane.xlu0 %3505
      %v3507 = vsel %vm501, %v3439, 0.0
      %3508 = vadd.xlane.f32.xlu0 %v3507
      %v3509 = vpop.xlane.xlu0 %3508
      %v3510 = vsel %vm501, %v3440, 0.0
      %3511 = vadd.xlane.f32.xlu0 %v3510
      %v3512 = vpop.xlane.xlu0 %3511
      %v3513 = vsel %vm501, %v3441, 0.0
      %3514 = vadd.xlane.f32.xlu0 %v3513
      %v3515 = vpop.xlane.xlu0 %3514
      %v3516 = vsel %vm501, %v3442, 0.0
      %3517 = vadd.xlane.f32.xlu0 %v3516
      %v3518 = vpop.xlane.xlu0 %3517
      %v3519 = vsel %vm501, %v3443, 0.0
      %3520 = vadd.xlane.f32.xlu0 %v3519
      %v3521 = vpop.xlane.xlu0 %3520
      %v3522 = vsel %vm501, %v3444, 0.0
      %3523 = vadd.xlane.f32.xlu0 %v3522
      %v3524 = vpop.xlane.xlu0 %3523
      %v3525 = vsel %vm501, %v3445, 0.0
      %3526 = vadd.xlane.f32.xlu0 %v3525
      %v3527 = vpop.xlane.xlu0 %3526
      %v3528 = vsel %vm501, %v3446, 0.0
      %3529 = vadd.xlane.f32.xlu0 %v3528
      %v3530 = vpop.xlane.xlu0 %3529
      %v3531 = vsel %vm501, %v3447, 0.0
      %3532 = vadd.xlane.f32.xlu0 %v3531
      %v3533 = vpop.xlane.xlu0 %3532
      %v3534 = vsel %vm501, %v3448, 0.0
      %3535 = vadd.xlane.f32.xlu0 %v3534
      %v3536 = vpop.xlane.xlu0 %3535
      %v3537 = vsel %vm501, %v3449, 0.0
      %3538 = vadd.xlane.f32.xlu0 %v3537
      %v3539 = vpop.xlane.xlu0 %3538
      %v3540 = vsel %vm501, %v3450, 0.0
      %3541 = vadd.xlane.f32.xlu0 %v3540
      %v3542 = vpop.xlane.xlu0 %3541
      %v3543 = vsel %vm501, %v3451, 0.0
      %3544 = vadd.xlane.f32.xlu0 %v3543
      %v3545 = vpop.xlane.xlu0 %3544
      %v3546 = vsel %vm501, %v3452, 0.0
      %3547 = vadd.xlane.f32.xlu0 %v3546
      %v3548 = vpop.xlane.xlu0 %3547
      %v3549 = vmul.f32 %v3455, %v2836
      %v3550 = vmul.f32 %v3458, %v2836
      %v3551 = vmul.f32 %v3461, %v2836
      %v3552 = vmul.f32 %v3464, %v2836
      %v3553 = vmul.f32 %v3467, %v2836
      %v3554 = vmul.f32 %v3470, %v2836
      %v3555 = vmul.f32 %v3473, %v2836
      %v3556 = vmul.f32 %v3476, %v2836
      %v3557 = vmul.f32 %v3479, %v2836
      %v3558 = vmul.f32 %v3482, %v2836
      %v3559 = vmul.f32 %v3485, %v2836
      %v3560 = vmul.f32 %v3488, %v2836
      %v3561 = vmul.f32 %v3491, %v2836
      %v3562 = vmul.f32 %v3494, %v2836
      %v3563 = vmul.f32 %v3497, %v2836
      %v3564 = vmul.f32 %v3500, %v2836
      %v3565 = vmul.f32 %v3503, %v2836
      %v3566 = vmul.f32 %v3506, %v2836
      %v3567 = vmul.f32 %v3509, %v2836
      %v3568 = vmul.f32 %v3512, %v2836
      %v3569 = vmul.f32 %v3515, %v2836
      %v3570 = vmul.f32 %v3518, %v2836
      %v3571 = vmul.f32 %v3521, %v2836
      %v3572 = vmul.f32 %v3524, %v2836
      %v3573 = vmul.f32 %v3527, %v2836
      %v3574 = vmul.f32 %v3530, %v2836
      %v3575 = vmul.f32 %v3533, %v2836
      %v3576 = vmul.f32 %v3536, %v2836
      %v3577 = vmul.f32 %v3539, %v2836
      %v3578 = vmul.f32 %v3542, %v2836
      %v3579 = vmul.f32 %v3545, %v2836
      %v3580 = vmul.f32 %v3548, %v2836
      %v3581 = vadd.f32 %v3549, 1e-06
      %v3582 = vadd.f32 %v3550, 1e-06
      %v3583 = vadd.f32 %v3551, 1e-06
      %v3584 = vadd.f32 %v3552, 1e-06
      %v3585 = vadd.f32 %v3553, 1e-06
      %v3586 = vadd.f32 %v3554, 1e-06
      %v3587 = vadd.f32 %v3555, 1e-06
      %v3588 = vadd.f32 %v3556, 1e-06
      %v3589 = vadd.f32 %v3557, 1e-06
      %v3590 = vadd.f32 %v3558, 1e-06
      %v3591 = vadd.f32 %v3559, 1e-06
      %v3592 = vadd.f32 %v3560, 1e-06
      %v3593 = vadd.f32 %v3561, 1e-06
      %v3594 = vadd.f32 %v3562, 1e-06
      %v3595 = vadd.f32 %v3563, 1e-06
      %v3596 = vadd.f32 %v3564, 1e-06
      %v3597 = vadd.f32 %v3565, 1e-06
      %v3598 = vadd.f32 %v3566, 1e-06
      %v3599 = vadd.f32 %v3567, 1e-06
      %v3600 = vadd.f32 %v3568, 1e-06
      %v3601 = vadd.f32 %v3569, 1e-06
      %v3602 = vadd.f32 %v3570, 1e-06
      %v3603 = vadd.f32 %v3571, 1e-06
      %v3604 = vadd.f32 %v3572, 1e-06
      %v3605 = vadd.f32 %v3573, 1e-06
      %v3606 = vadd.f32 %v3574, 1e-06
      %v3607 = vadd.f32 %v3575, 1e-06
      %v3608 = vadd.f32 %v3576, 1e-06
      %v3609 = vadd.f32 %v3577, 1e-06
      %v3610 = vadd.f32 %v3578, 1e-06
      %v3611 = vadd.f32 %v3579, 1e-06
      %v3612 = vadd.f32 %v3580, 1e-06
      %v3613 = vrsqrt.pop %v3581
      %v3614 = vrsqrt.pop %v3582
      %v3615 = vrsqrt.pop %v3583
      %v3616 = vrsqrt.pop %v3584
      %v3617 = vrsqrt.pop %v3585
      %v3618 = vrsqrt.pop %v3586
      %v3619 = vrsqrt.pop %v3587
      %v3620 = vrsqrt.pop %v3588
      %v3621 = vrsqrt.pop %v3589
      %v3622 = vrsqrt.pop %v3590
      %v3623 = vrsqrt.pop %v3591
      %v3624 = vrsqrt.pop %v3592
      %v3625 = vrsqrt.pop %v3593
      %v3626 = vrsqrt.pop %v3594
      %v3627 = vrsqrt.pop %v3595
      %v3628 = vrsqrt.pop %v3596
      %v3629 = vrsqrt.pop %v3597
      %v3630 = vrsqrt.pop %v3598
      %v3631 = vrsqrt.pop %v3599
      %v3632 = vrsqrt.pop %v3600
      %v3633 = vrsqrt.pop %v3601
      %v3634 = vrsqrt.pop %v3602
      %v3635 = vrsqrt.pop %v3603
      %v3636 = vrsqrt.pop %v3604
      %v3637 = vrsqrt.pop %v3605
      %v3638 = vrsqrt.pop %v3606
      %v3639 = vrsqrt.pop %v3607
      %v3640 = vrsqrt.pop %v3608
      %v3641 = vrsqrt.pop %v3609
      %v3642 = vrsqrt.pop %v3610
      %v3643 = vrsqrt.pop %v3611
      %v3644 = vrsqrt.pop %v3612
      %v3645 = vmul.f32 %v3389, %v3613
      %v3646 = vmul.f32 %v3390, %v3614
      %v3647 = vmul.f32 %v3391, %v3615
      %v3648 = vmul.f32 %v3392, %v3616
      %v3649 = vmul.f32 %v3393, %v3617
      %v3650 = vmul.f32 %v3394, %v3618
      %v3651 = vmul.f32 %v3395, %v3619
      %v3652 = vmul.f32 %v3396, %v3620
      %v3653 = vmul.f32 %v3397, %v3621
      %v3654 = vmul.f32 %v3398, %v3622
      %v3655 = vmul.f32 %v3399, %v3623
      %v3656 = vmul.f32 %v3400, %v3624
      %v3657 = vmul.f32 %v3401, %v3625
      %v3658 = vmul.f32 %v3402, %v3626
      %v3659 = vmul.f32 %v3403, %v3627
      %v3660 = vmul.f32 %v3404, %v3628
      %v3661 = vmul.f32 %v3405, %v3629
      %v3662 = vmul.f32 %v3406, %v3630
      %v3663 = vmul.f32 %v3407, %v3631
      %v3664 = vmul.f32 %v3408, %v3632
      %v3665 = vmul.f32 %v3409, %v3633
      %v3666 = vmul.f32 %v3410, %v3634
      %v3667 = vmul.f32 %v3411, %v3635
      %v3668 = vmul.f32 %v3412, %v3636
      %v3669 = vmul.f32 %v3413, %v3637
      %v3670 = vmul.f32 %v3414, %v3638
      %v3671 = vmul.f32 %v3415, %v3639
      %v3672 = vmul.f32 %v3416, %v3640
      %v3673 = vmul.f32 %v3417, %v3641
      %v3674 = vmul.f32 %v3418, %v3642
      %v3675 = vmul.f32 %v3419, %v3643
      %v3676 = vmul.f32 %v3420, %v3644
      %v3677 = vlaneseq
      %v3678 = vshrl.u32 %v3677, 7
      %v3679 = vsub.s32 0, %v3678
      %v3680 = vrot.slane %v230, %v3679
      %v3681 = vmul.f32 %v3645, %v3680
      %v3682 = vmul.f32 %v3646, %v3680
      %v3683 = vmul.f32 %v3647, %v3680
      %v3684 = vmul.f32 %v3648, %v3680
      %v3685 = vmul.f32 %v3649, %v3680
      %v3686 = vmul.f32 %v3650, %v3680
      %v3687 = vmul.f32 %v3651, %v3680
      %v3688 = vmul.f32 %v3652, %v3680
      %v3689 = vmul.f32 %v3653, %v3680
      %v3690 = vmul.f32 %v3654, %v3680
      %v3691 = vmul.f32 %v3655, %v3680
      %v3692 = vmul.f32 %v3656, %v3680
      %v3693 = vmul.f32 %v3657, %v3680
      %v3694 = vmul.f32 %v3658, %v3680
      %v3695 = vmul.f32 %v3659, %v3680
      %v3696 = vmul.f32 %v3660, %v3680
      %v3697 = vmul.f32 %v3661, %v3680
      %v3698 = vmul.f32 %v3662, %v3680
      %v3699 = vmul.f32 %v3663, %v3680
      %v3700 = vmul.f32 %v3664, %v3680
      %v3701 = vmul.f32 %v3665, %v3680
      %v3702 = vmul.f32 %v3666, %v3680
      %v3703 = vmul.f32 %v3667, %v3680
      %v3704 = vmul.f32 %v3668, %v3680
      %v3705 = vmul.f32 %v3669, %v3680
      %v3706 = vmul.f32 %v3670, %v3680
      %v3707 = vmul.f32 %v3671, %v3680
      %v3708 = vmul.f32 %v3672, %v3680
      %v3709 = vmul.f32 %v3673, %v3680
      %v3710 = vmul.f32 %v3674, %v3680
      %v3711 = vmul.f32 %v3675, %v3680
      %v3712 = vmul.f32 %v3676, %v3680
      %v3713 = vlaneseq
      %v3714 = vshrl.u32 %v3713, 7
      %v3715 = vsub.s32 0, %v3714
      %v3716 = vrot.slane %v231, %v3715
      %v3717 = vadd.f32 %v3681, %v3716
      %v3718 = vadd.f32 %v3682, %v3716
      %v3719 = vadd.f32 %v3683, %v3716
      %v3720 = vadd.f32 %v3684, %v3716
      %v3721 = vadd.f32 %v3685, %v3716
      %v3722 = vadd.f32 %v3686, %v3716
      %v3723 = vadd.f32 %v3687, %v3716
      %v3724 = vadd.f32 %v3688, %v3716
      %v3725 = vadd.f32 %v3689, %v3716
      %v3726 = vadd.f32 %v3690, %v3716
      %v3727 = vadd.f32 %v3691, %v3716
      %v3728 = vadd.f32 %v3692, %v3716
      %v3729 = vadd.f32 %v3693, %v3716
      %v3730 = vadd.f32 %v3694, %v3716
      %v3731 = vadd.f32 %v3695, %v3716
      %v3732 = vadd.f32 %v3696, %v3716
      %v3733 = vadd.f32 %v3697, %v3716
      %v3734 = vadd.f32 %v3698, %v3716
      %v3735 = vadd.f32 %v3699, %v3716
      %v3736 = vadd.f32 %v3700, %v3716
      %v3737 = vadd.f32 %v3701, %v3716
      %v3738 = vadd.f32 %v3702, %v3716
      %v3739 = vadd.f32 %v3703, %v3716
      %v3740 = vadd.f32 %v3704, %v3716
      %v3741 = vadd.f32 %v3705, %v3716
      %v3742 = vadd.f32 %v3706, %v3716
      %v3743 = vadd.f32 %v3707, %v3716
      %v3744 = vadd.f32 %v3708, %v3716
      %v3745 = vadd.f32 %v3709, %v3716
      %v3746 = vadd.f32 %v3710, %v3716
      %v3747 = vadd.f32 %v3711, %v3716
      %v3748 = vadd.f32 %v3712, %v3716
      %v3749 = vadd.f32 %v3717, %v375
      %v3750 = vadd.f32 %v3718, %v378
      %v3751 = vadd.f32 %v3719, %v383
      %v3752 = vadd.f32 %v3720, %v386
      %v3753 = vadd.f32 %v3721, %v391
      %v3754 = vadd.f32 %v3722, %v394
      %v3755 = vadd.f32 %v3723, %v399
      %v3756 = vadd.f32 %v3724, %v402
      %v3757 = vadd.f32 %v3725, %v407
      %v3758 = vadd.f32 %v3726, %v410
      %v3759 = vadd.f32 %v3727, %v415
      %v3760 = vadd.f32 %v3728, %v418
      %v3761 = vadd.f32 %v3729, %v423
      %v3762 = vadd.f32 %v3730, %v426
      %v3763 = vadd.f32 %v3731, %v431
      %v3764 = vadd.f32 %v3732, %v434
      %v3765 = vadd.f32 %v3733, %v439
      %v3766 = vadd.f32 %v3734, %v442
      %v3767 = vadd.f32 %v3735, %v447
      %v3768 = vadd.f32 %v3736, %v450
      %v3769 = vadd.f32 %v3737, %v455
      %v3770 = vadd.f32 %v3738, %v458
      %v3771 = vadd.f32 %v3739, %v463
      %v3772 = vadd.f32 %v3740, %v466
      %v3773 = vadd.f32 %v3741, %v471
      %v3774 = vadd.f32 %v3742, %v474
      %v3775 = vadd.f32 %v3743, %v479
      %v3776 = vadd.f32 %v3744, %v482
      %v3777 = vadd.f32 %v3745, %v487
      %v3778 = vadd.f32 %v3746, %v490
      %v3779 = vadd.f32 %v3747, %v495
      %v3780 = vadd.f32 %v3748, %v498
      %v3781 = vsel %vm501, %v3749, 0.0
      %3782 = vadd.xlane.f32.xlu0 %v3781
      %v3783 = vpop.xlane.xlu0 %3782
      %v3784 = vsel %vm501, %v3750, 0.0
      %3785 = vadd.xlane.f32.xlu0 %v3784
      %v3786 = vpop.xlane.xlu0 %3785
      %v3787 = vsel %vm501, %v3751, 0.0
      %3788 = vadd.xlane.f32.xlu0 %v3787
      %v3789 = vpop.xlane.xlu0 %3788
      %v3790 = vsel %vm501, %v3752, 0.0
      %3791 = vadd.xlane.f32.xlu0 %v3790
      %v3792 = vpop.xlane.xlu0 %3791
      %v3793 = vsel %vm501, %v3753, 0.0
      %3794 = vadd.xlane.f32.xlu0 %v3793
      %v3795 = vpop.xlane.xlu0 %3794
      %v3796 = vsel %vm501, %v3754, 0.0
      %3797 = vadd.xlane.f32.xlu0 %v3796
      %v3798 = vpop.xlane.xlu0 %3797
      %v3799 = vsel %vm501, %v3755, 0.0
      %3800 = vadd.xlane.f32.xlu0 %v3799
      %v3801 = vpop.xlane.xlu0 %3800
      %v3802 = vsel %vm501, %v3756, 0.0
      %3803 = vadd.xlane.f32.xlu0 %v3802
      %v3804 = vpop.xlane.xlu0 %3803
      %v3805 = vsel %vm501, %v3757, 0.0
      %3806 = vadd.xlane.f32.xlu0 %v3805
      %v3807 = vpop.xlane.xlu0 %3806
      %v3808 = vsel %vm501, %v3758, 0.0
      %3809 = vadd.xlane.f32.xlu0 %v3808
      %v3810 = vpop.xlane.xlu0 %3809
      %v3811 = vsel %vm501, %v3759, 0.0
      %3812 = vadd.xlane.f32.xlu0 %v3811
      %v3813 = vpop.xlane.xlu0 %3812
      %v3814 = vsel %vm501, %v3760, 0.0
      %3815 = vadd.xlane.f32.xlu0 %v3814
      %v3816 = vpop.xlane.xlu0 %3815
      %v3817 = vsel %vm501, %v3761, 0.0
      %3818 = vadd.xlane.f32.xlu0 %v3817
      %v3819 = vpop.xlane.xlu0 %3818
      %v3820 = vsel %vm501, %v3762, 0.0
      %3821 = vadd.xlane.f32.xlu0 %v3820
      %v3822 = vpop.xlane.xlu0 %3821
      %v3823 = vsel %vm501, %v3763, 0.0
      %3824 = vadd.xlane.f32.xlu0 %v3823
      %v3825 = vpop.xlane.xlu0 %3824
      %v3826 = vsel %vm501, %v3764, 0.0
      %3827 = vadd.xlane.f32.xlu0 %v3826
      %v3828 = vpop.xlane.xlu0 %3827
      %v3829 = vsel %vm501, %v3765, 0.0
      %3830 = vadd.xlane.f32.xlu0 %v3829
      %v3831 = vpop.xlane.xlu0 %3830
      %v3832 = vsel %vm501, %v3766, 0.0
      %3833 = vadd.xlane.f32.xlu0 %v3832
      %v3834 = vpop.xlane.xlu0 %3833
      %v3835 = vsel %vm501, %v3767, 0.0
      %3836 = vadd.xlane.f32.xlu0 %v3835
      %v3837 = vpop.xlane.xlu0 %3836
      %v3838 = vsel %vm501, %v3768, 0.0
      %3839 = vadd.xlane.f32.xlu0 %v3838
      %v3840 = vpop.xlane.xlu0 %3839
      %v3841 = vsel %vm501, %v3769, 0.0
      %3842 = vadd.xlane.f32.xlu0 %v3841
      %v3843 = vpop.xlane.xlu0 %3842
      %v3844 = vsel %vm501, %v3770, 0.0
      %3845 = vadd.xlane.f32.xlu0 %v3844
      %v3846 = vpop.xlane.xlu0 %3845
      %v3847 = vsel %vm501, %v3771, 0.0
      %3848 = vadd.xlane.f32.xlu0 %v3847
      %v3849 = vpop.xlane.xlu0 %3848
      %v3850 = vsel %vm501, %v3772, 0.0
      %3851 = vadd.xlane.f32.xlu0 %v3850
      %v3852 = vpop.xlane.xlu0 %3851
      %v3853 = vsel %vm501, %v3773, 0.0
      %3854 = vadd.xlane.f32.xlu0 %v3853
      %v3855 = vpop.xlane.xlu0 %3854
      %v3856 = vsel %vm501, %v3774, 0.0
      %3857 = vadd.xlane.f32.xlu0 %v3856
      %v3858 = vpop.xlane.xlu0 %3857
      %v3859 = vsel %vm501, %v3775, 0.0
      %3860 = vadd.xlane.f32.xlu0 %v3859
      %v3861 = vpop.xlane.xlu0 %3860
      %v3862 = vsel %vm501, %v3776, 0.0
      %3863 = vadd.xlane.f32.xlu0 %v3862
      %v3864 = vpop.xlane.xlu0 %3863
      %v3865 = vsel %vm501, %v3777, 0.0
      %3866 = vadd.xlane.f32.xlu0 %v3865
      %v3867 = vpop.xlane.xlu0 %3866
      %v3868 = vsel %vm501, %v3778, 0.0
      %3869 = vadd.xlane.f32.xlu0 %v3868
      %v3870 = vpop.xlane.xlu0 %3869
      %v3871 = vsel %vm501, %v3779, 0.0
      %3872 = vadd.xlane.f32.xlu0 %v3871
      %v3873 = vpop.xlane.xlu0 %3872
      %v3874 = vsel %vm501, %v3780, 0.0
      %3875 = vadd.xlane.f32.xlu0 %v3874
      %v3876 = vpop.xlane.xlu0 %3875
      %v3877 = vmul.f32 %v3783, %v2836
      %v3878 = vmul.f32 %v3786, %v2836
      %v3879 = vmul.f32 %v3789, %v2836
      %v3880 = vmul.f32 %v3792, %v2836
      %v3881 = vmul.f32 %v3795, %v2836
      %v3882 = vmul.f32 %v3798, %v2836
      %v3883 = vmul.f32 %v3801, %v2836
      %v3884 = vmul.f32 %v3804, %v2836
      %v3885 = vmul.f32 %v3807, %v2836
      %v3886 = vmul.f32 %v3810, %v2836
      %v3887 = vmul.f32 %v3813, %v2836
      %v3888 = vmul.f32 %v3816, %v2836
      %v3889 = vmul.f32 %v3819, %v2836
      %v3890 = vmul.f32 %v3822, %v2836
      %v3891 = vmul.f32 %v3825, %v2836
      %v3892 = vmul.f32 %v3828, %v2836
      %v3893 = vmul.f32 %v3831, %v2836
      %v3894 = vmul.f32 %v3834, %v2836
      %v3895 = vmul.f32 %v3837, %v2836
      %v3896 = vmul.f32 %v3840, %v2836
      %v3897 = vmul.f32 %v3843, %v2836
      %v3898 = vmul.f32 %v3846, %v2836
      %v3899 = vmul.f32 %v3849, %v2836
      %v3900 = vmul.f32 %v3852, %v2836
      %v3901 = vmul.f32 %v3855, %v2836
      %v3902 = vmul.f32 %v3858, %v2836
      %v3903 = vmul.f32 %v3861, %v2836
      %v3904 = vmul.f32 %v3864, %v2836
      %v3905 = vmul.f32 %v3867, %v2836
      %v3906 = vmul.f32 %v3870, %v2836
      %v3907 = vmul.f32 %v3873, %v2836
      %v3908 = vmul.f32 %v3876, %v2836
      %v3909 = vsub.f32 %v3749, %v3877
      %v3910 = vsub.f32 %v3750, %v3878
      %v3911 = vsub.f32 %v3751, %v3879
      %v3912 = vsub.f32 %v3752, %v3880
      %v3913 = vsub.f32 %v3753, %v3881
      %v3914 = vsub.f32 %v3754, %v3882
      %v3915 = vsub.f32 %v3755, %v3883
      %v3916 = vsub.f32 %v3756, %v3884
      %v3917 = vsub.f32 %v3757, %v3885
      %v3918 = vsub.f32 %v3758, %v3886
      %v3919 = vsub.f32 %v3759, %v3887
      %v3920 = vsub.f32 %v3760, %v3888
      %v3921 = vsub.f32 %v3761, %v3889
      %v3922 = vsub.f32 %v3762, %v3890
      %v3923 = vsub.f32 %v3763, %v3891
      %v3924 = vsub.f32 %v3764, %v3892
      %v3925 = vsub.f32 %v3765, %v3893
      %v3926 = vsub.f32 %v3766, %v3894
      %v3927 = vsub.f32 %v3767, %v3895
      %v3928 = vsub.f32 %v3768, %v3896
      %v3929 = vsub.f32 %v3769, %v3897
      %v3930 = vsub.f32 %v3770, %v3898
      %v3931 = vsub.f32 %v3771, %v3899
      %v3932 = vsub.f32 %v3772, %v3900
      %v3933 = vsub.f32 %v3773, %v3901
      %v3934 = vsub.f32 %v3774, %v3902
      %v3935 = vsub.f32 %v3775, %v3903
      %v3936 = vsub.f32 %v3776, %v3904
      %v3937 = vsub.f32 %v3777, %v3905
      %v3938 = vsub.f32 %v3778, %v3906
      %v3939 = vsub.f32 %v3779, %v3907
      %v3940 = vsub.f32 %v3780, %v3908
      %v3941 = vmul.f32 %v3909, %v3909
      %v3942 = vmul.f32 %v3910, %v3910
      %v3943 = vmul.f32 %v3911, %v3911
      %v3944 = vmul.f32 %v3912, %v3912
      %v3945 = vmul.f32 %v3913, %v3913
      %v3946 = vmul.f32 %v3914, %v3914
      %v3947 = vmul.f32 %v3915, %v3915
      %v3948 = vmul.f32 %v3916, %v3916
      %v3949 = vmul.f32 %v3917, %v3917
      %v3950 = vmul.f32 %v3918, %v3918
      %v3951 = vmul.f32 %v3919, %v3919
      %v3952 = vmul.f32 %v3920, %v3920
      %v3953 = vmul.f32 %v3921, %v3921
      %v3954 = vmul.f32 %v3922, %v3922
      %v3955 = vmul.f32 %v3923, %v3923
      %v3956 = vmul.f32 %v3924, %v3924
      %v3957 = vmul.f32 %v3925, %v3925
      %v3958 = vmul.f32 %v3926, %v3926
      %v3959 = vmul.f32 %v3927, %v3927
      %v3960 = vmul.f32 %v3928, %v3928
      %v3961 = vmul.f32 %v3929, %v3929
      %v3962 = vmul.f32 %v3930, %v3930
      %v3963 = vmul.f32 %v3931, %v3931
      %v3964 = vmul.f32 %v3932, %v3932
      %v3965 = vmul.f32 %v3933, %v3933
      %v3966 = vmul.f32 %v3934, %v3934
      %v3967 = vmul.f32 %v3935, %v3935
      %v3968 = vmul.f32 %v3936, %v3936
      %v3969 = vmul.f32 %v3937, %v3937
      %v3970 = vmul.f32 %v3938, %v3938
      %v3971 = vmul.f32 %v3939, %v3939
      %v3972 = vmul.f32 %v3940, %v3940
      %v3973 = vsel %vm501, %v3941, 0.0
      %3974 = vadd.xlane.f32.xlu0 %v3973
      %v3975 = vpop.xlane.xlu0 %3974
      %v3976 = vsel %vm501, %v3942, 0.0
      %3977 = vadd.xlane.f32.xlu0 %v3976
      %v3978 = vpop.xlane.xlu0 %3977
      %v3979 = vsel %vm501, %v3943, 0.0
      %3980 = vadd.xlane.f32.xlu0 %v3979
      %v3981 = vpop.xlane.xlu0 %3980
      %v3982 = vsel %vm501, %v3944, 0.0
      %3983 = vadd.xlane.f32.xlu0 %v3982
      %v3984 = vpop.xlane.xlu0 %3983
      %v3985 = vsel %vm501, %v3945, 0.0
      %3986 = vadd.xlane.f32.xlu0 %v3985
      %v3987 = vpop.xlane.xlu0 %3986
      %v3988 = vsel %vm501, %v3946, 0.0
      %3989 = vadd.xlane.f32.xlu0 %v3988
      %v3990 = vpop.xlane.xlu0 %3989
      %v3991 = vsel %vm501, %v3947, 0.0
      %3992 = vadd.xlane.f32.xlu0 %v3991
      %v3993 = vpop.xlane.xlu0 %3992
      %v3994 = vsel %vm501, %v3948, 0.0
      %3995 = vadd.xlane.f32.xlu0 %v3994
      %v3996 = vpop.xlane.xlu0 %3995
      %v3997 = vsel %vm501, %v3949, 0.0
      %3998 = vadd.xlane.f32.xlu0 %v3997
      %v3999 = vpop.xlane.xlu0 %3998
      %v4000 = vsel %vm501, %v3950, 0.0
      %4001 = vadd.xlane.f32.xlu0 %v4000
      %v4002 = vpop.xlane.xlu0 %4001
      %v4003 = vsel %vm501, %v3951, 0.0
      %4004 = vadd.xlane.f32.xlu0 %v4003
      %v4005 = vpop.xlane.xlu0 %4004
      %v4006 = vsel %vm501, %v3952, 0.0
      %4007 = vadd.xlane.f32.xlu0 %v4006
      %v4008 = vpop.xlane.xlu0 %4007
      %v4009 = vsel %vm501, %v3953, 0.0
      %4010 = vadd.xlane.f32.xlu0 %v4009
      %v4011 = vpop.xlane.xlu0 %4010
      %v4012 = vsel %vm501, %v3954, 0.0
      %4013 = vadd.xlane.f32.xlu0 %v4012
      %v4014 = vpop.xlane.xlu0 %4013
      %v4015 = vsel %vm501, %v3955, 0.0
      %4016 = vadd.xlane.f32.xlu0 %v4015
      %v4017 = vpop.xlane.xlu0 %4016
      %v4018 = vsel %vm501, %v3956, 0.0
      %4019 = vadd.xlane.f32.xlu0 %v4018
      %v4020 = vpop.xlane.xlu0 %4019
      %v4021 = vsel %vm501, %v3957, 0.0
      %4022 = vadd.xlane.f32.xlu0 %v4021
      %v4023 = vpop.xlane.xlu0 %4022
      %v4024 = vsel %vm501, %v3958, 0.0
      %4025 = vadd.xlane.f32.xlu0 %v4024
      %v4026 = vpop.xlane.xlu0 %4025
      %v4027 = vsel %vm501, %v3959, 0.0
      %4028 = vadd.xlane.f32.xlu0 %v4027
      %v4029 = vpop.xlane.xlu0 %4028
      %v4030 = vsel %vm501, %v3960, 0.0
      %4031 = vadd.xlane.f32.xlu0 %v4030
      %v4032 = vpop.xlane.xlu0 %4031
      %v4033 = vsel %vm501, %v3961, 0.0
      %4034 = vadd.xlane.f32.xlu0 %v4033
      %v4035 = vpop.xlane.xlu0 %4034
      %v4036 = vsel %vm501, %v3962, 0.0
      %4037 = vadd.xlane.f32.xlu0 %v4036
      %v4038 = vpop.xlane.xlu0 %4037
      %v4039 = vsel %vm501, %v3963, 0.0
      %4040 = vadd.xlane.f32.xlu0 %v4039
      %v4041 = vpop.xlane.xlu0 %4040
      %v4042 = vsel %vm501, %v3964, 0.0
      %4043 = vadd.xlane.f32.xlu0 %v4042
      %v4044 = vpop.xlane.xlu0 %4043
      %v4045 = vsel %vm501, %v3965, 0.0
      %4046 = vadd.xlane.f32.xlu0 %v4045
      %v4047 = vpop.xlane.xlu0 %4046
      %v4048 = vsel %vm501, %v3966, 0.0
      %4049 = vadd.xlane.f32.xlu0 %v4048
      %v4050 = vpop.xlane.xlu0 %4049
      %v4051 = vsel %vm501, %v3967, 0.0
      %4052 = vadd.xlane.f32.xlu0 %v4051
      %v4053 = vpop.xlane.xlu0 %4052
      %v4054 = vsel %vm501, %v3968, 0.0
      %4055 = vadd.xlane.f32.xlu0 %v4054
      %v4056 = vpop.xlane.xlu0 %4055
      %v4057 = vsel %vm501, %v3969, 0.0
      %4058 = vadd.xlane.f32.xlu0 %v4057
      %v4059 = vpop.xlane.xlu0 %4058
      %v4060 = vsel %vm501, %v3970, 0.0
      %4061 = vadd.xlane.f32.xlu0 %v4060
      %v4062 = vpop.xlane.xlu0 %4061
      %v4063 = vsel %vm501, %v3971, 0.0
      %4064 = vadd.xlane.f32.xlu0 %v4063
      %v4065 = vpop.xlane.xlu0 %4064
      %v4066 = vsel %vm501, %v3972, 0.0
      %4067 = vadd.xlane.f32.xlu0 %v4066
      %v4068 = vpop.xlane.xlu0 %4067
      %v4069 = vmul.f32 %v3975, %v2836
      %v4070 = vmul.f32 %v3978, %v2836
      %v4071 = vmul.f32 %v3981, %v2836
      %v4072 = vmul.f32 %v3984, %v2836
      %v4073 = vmul.f32 %v3987, %v2836
      %v4074 = vmul.f32 %v3990, %v2836
      %v4075 = vmul.f32 %v3993, %v2836
      %v4076 = vmul.f32 %v3996, %v2836
      %v4077 = vmul.f32 %v3999, %v2836
      %v4078 = vmul.f32 %v4002, %v2836
      %v4079 = vmul.f32 %v4005, %v2836
      %v4080 = vmul.f32 %v4008, %v2836
      %v4081 = vmul.f32 %v4011, %v2836
      %v4082 = vmul.f32 %v4014, %v2836
      %v4083 = vmul.f32 %v4017, %v2836
      %v4084 = vmul.f32 %v4020, %v2836
      %v4085 = vmul.f32 %v4023, %v2836
      %v4086 = vmul.f32 %v4026, %v2836
      %v4087 = vmul.f32 %v4029, %v2836
      %v4088 = vmul.f32 %v4032, %v2836
      %v4089 = vmul.f32 %v4035, %v2836
      %v4090 = vmul.f32 %v4038, %v2836
      %v4091 = vmul.f32 %v4041, %v2836
      %v4092 = vmul.f32 %v4044, %v2836
      %v4093 = vmul.f32 %v4047, %v2836
      %v4094 = vmul.f32 %v4050, %v2836
      %v4095 = vmul.f32 %v4053, %v2836
      %v4096 = vmul.f32 %v4056, %v2836
      %v4097 = vmul.f32 %v4059, %v2836
      %v4098 = vmul.f32 %v4062, %v2836
      %v4099 = vmul.f32 %v4065, %v2836
      %v4100 = vmul.f32 %v4068, %v2836
      %v4101 = vadd.f32 %v4069, 1e-06
      %v4102 = vadd.f32 %v4070, 1e-06
      %v4103 = vadd.f32 %v4071, 1e-06
      %v4104 = vadd.f32 %v4072, 1e-06
      %v4105 = vadd.f32 %v4073, 1e-06
      %v4106 = vadd.f32 %v4074, 1e-06
      %v4107 = vadd.f32 %v4075, 1e-06
      %v4108 = vadd.f32 %v4076, 1e-06
      %v4109 = vadd.f32 %v4077, 1e-06
      %v4110 = vadd.f32 %v4078, 1e-06
      %v4111 = vadd.f32 %v4079, 1e-06
      %v4112 = vadd.f32 %v4080, 1e-06
      %v4113 = vadd.f32 %v4081, 1e-06
      %v4114 = vadd.f32 %v4082, 1e-06
      %v4115 = vadd.f32 %v4083, 1e-06
      %v4116 = vadd.f32 %v4084, 1e-06
      %v4117 = vadd.f32 %v4085, 1e-06
      %v4118 = vadd.f32 %v4086, 1e-06
      %v4119 = vadd.f32 %v4087, 1e-06
      %v4120 = vadd.f32 %v4088, 1e-06
      %v4121 = vadd.f32 %v4089, 1e-06
      %v4122 = vadd.f32 %v4090, 1e-06
      %v4123 = vadd.f32 %v4091, 1e-06
      %v4124 = vadd.f32 %v4092, 1e-06
      %v4125 = vadd.f32 %v4093, 1e-06
      %v4126 = vadd.f32 %v4094, 1e-06
      %v4127 = vadd.f32 %v4095, 1e-06
      %v4128 = vadd.f32 %v4096, 1e-06
      %v4129 = vadd.f32 %v4097, 1e-06
      %v4130 = vadd.f32 %v4098, 1e-06
      %v4131 = vadd.f32 %v4099, 1e-06
      %v4132 = vadd.f32 %v4100, 1e-06
      %v4133 = vrsqrt.pop %v4101
      %v4134 = vrsqrt.pop %v4102
      %v4135 = vrsqrt.pop %v4103
      %v4136 = vrsqrt.pop %v4104
      %v4137 = vrsqrt.pop %v4105
      %v4138 = vrsqrt.pop %v4106
      %v4139 = vrsqrt.pop %v4107
      %v4140 = vrsqrt.pop %v4108
      %v4141 = vrsqrt.pop %v4109
      %v4142 = vrsqrt.pop %v4110
      %v4143 = vrsqrt.pop %v4111
      %v4144 = vrsqrt.pop %v4112
      %v4145 = vrsqrt.pop %v4113
      %v4146 = vrsqrt.pop %v4114
      %v4147 = vrsqrt.pop %v4115
      %v4148 = vrsqrt.pop %v4116
      %v4149 = vrsqrt.pop %v4117
      %v4150 = vrsqrt.pop %v4118
      %v4151 = vrsqrt.pop %v4119
      %v4152 = vrsqrt.pop %v4120
      %v4153 = vrsqrt.pop %v4121
      %v4154 = vrsqrt.pop %v4122
      %v4155 = vrsqrt.pop %v4123
      %v4156 = vrsqrt.pop %v4124
      %v4157 = vrsqrt.pop %v4125
      %v4158 = vrsqrt.pop %v4126
      %v4159 = vrsqrt.pop %v4127
      %v4160 = vrsqrt.pop %v4128
      %v4161 = vrsqrt.pop %v4129
      %v4162 = vrsqrt.pop %v4130
      %v4163 = vrsqrt.pop %v4131
      %v4164 = vrsqrt.pop %v4132
      %v4165 = vmul.f32 %v3909, %v4133
      %v4166 = vmul.f32 %v3910, %v4134
      %v4167 = vmul.f32 %v3911, %v4135
      %v4168 = vmul.f32 %v3912, %v4136
      %v4169 = vmul.f32 %v3913, %v4137
      %v4170 = vmul.f32 %v3914, %v4138
      %v4171 = vmul.f32 %v3915, %v4139
      %v4172 = vmul.f32 %v3916, %v4140
      %v4173 = vmul.f32 %v3917, %v4141
      %v4174 = vmul.f32 %v3918, %v4142
      %v4175 = vmul.f32 %v3919, %v4143
      %v4176 = vmul.f32 %v3920, %v4144
      %v4177 = vmul.f32 %v3921, %v4145
      %v4178 = vmul.f32 %v3922, %v4146
      %v4179 = vmul.f32 %v3923, %v4147
      %v4180 = vmul.f32 %v3924, %v4148
      %v4181 = vmul.f32 %v3925, %v4149
      %v4182 = vmul.f32 %v3926, %v4150
      %v4183 = vmul.f32 %v3927, %v4151
      %v4184 = vmul.f32 %v3928, %v4152
      %v4185 = vmul.f32 %v3929, %v4153
      %v4186 = vmul.f32 %v3930, %v4154
      %v4187 = vmul.f32 %v3931, %v4155
      %v4188 = vmul.f32 %v3932, %v4156
      %v4189 = vmul.f32 %v3933, %v4157
      %v4190 = vmul.f32 %v3934, %v4158
      %v4191 = vmul.f32 %v3935, %v4159
      %v4192 = vmul.f32 %v3936, %v4160
      %v4193 = vmul.f32 %v3937, %v4161
      %v4194 = vmul.f32 %v3938, %v4162
      %v4195 = vmul.f32 %v3939, %v4163
      %v4196 = vmul.f32 %v3940, %v4164
      %v4197 = vlaneseq
      %v4198 = vshrl.u32 %v4197, 7
      %v4199 = vsub.s32 0, %v4198
      %v4200 = vrot.slane %v232, %v4199
      %v4201 = vmul.f32 %v4165, %v4200
      %v4202 = vmul.f32 %v4166, %v4200
      %v4203 = vmul.f32 %v4167, %v4200
      %v4204 = vmul.f32 %v4168, %v4200
      %v4205 = vmul.f32 %v4169, %v4200
      %v4206 = vmul.f32 %v4170, %v4200
      %v4207 = vmul.f32 %v4171, %v4200
      %v4208 = vmul.f32 %v4172, %v4200
      %v4209 = vmul.f32 %v4173, %v4200
      %v4210 = vmul.f32 %v4174, %v4200
      %v4211 = vmul.f32 %v4175, %v4200
      %v4212 = vmul.f32 %v4176, %v4200
      %v4213 = vmul.f32 %v4177, %v4200
      %v4214 = vmul.f32 %v4178, %v4200
      %v4215 = vmul.f32 %v4179, %v4200
      %v4216 = vmul.f32 %v4180, %v4200
      %v4217 = vmul.f32 %v4181, %v4200
      %v4218 = vmul.f32 %v4182, %v4200
      %v4219 = vmul.f32 %v4183, %v4200
      %v4220 = vmul.f32 %v4184, %v4200
      %v4221 = vmul.f32 %v4185, %v4200
      %v4222 = vmul.f32 %v4186, %v4200
      %v4223 = vmul.f32 %v4187, %v4200
      %v4224 = vmul.f32 %v4188, %v4200
      %v4225 = vmul.f32 %v4189, %v4200
      %v4226 = vmul.f32 %v4190, %v4200
      %v4227 = vmul.f32 %v4191, %v4200
      %v4228 = vmul.f32 %v4192, %v4200
      %v4229 = vmul.f32 %v4193, %v4200
      %v4230 = vmul.f32 %v4194, %v4200
      %v4231 = vmul.f32 %v4195, %v4200
      %v4232 = vmul.f32 %v4196, %v4200
      %v4233 = vlaneseq
      %v4234 = vshrl.u32 %v4233, 7
      %v4235 = vsub.s32 0, %v4234
      %v4236 = vrot.slane %v233, %v4235
      %v4237 = vadd.f32 %v4201, %v4236
      %v4238 = vadd.f32 %v4202, %v4236
      %v4239 = vadd.f32 %v4203, %v4236
      %v4240 = vadd.f32 %v4204, %v4236
      %v4241 = vadd.f32 %v4205, %v4236
      %v4242 = vadd.f32 %v4206, %v4236
      %v4243 = vadd.f32 %v4207, %v4236
      %v4244 = vadd.f32 %v4208, %v4236
      %v4245 = vadd.f32 %v4209, %v4236
      %v4246 = vadd.f32 %v4210, %v4236
      %v4247 = vadd.f32 %v4211, %v4236
      %v4248 = vadd.f32 %v4212, %v4236
      %v4249 = vadd.f32 %v4213, %v4236
      %v4250 = vadd.f32 %v4214, %v4236
      %v4251 = vadd.f32 %v4215, %v4236
      %v4252 = vadd.f32 %v4216, %v4236
      %v4253 = vadd.f32 %v4217, %v4236
      %v4254 = vadd.f32 %v4218, %v4236
      %v4255 = vadd.f32 %v4219, %v4236
      %v4256 = vadd.f32 %v4220, %v4236
      %v4257 = vadd.f32 %v4221, %v4236
      %v4258 = vadd.f32 %v4222, %v4236
      %v4259 = vadd.f32 %v4223, %v4236
      %v4260 = vadd.f32 %v4224, %v4236
      %v4261 = vadd.f32 %v4225, %v4236
      %v4262 = vadd.f32 %v4226, %v4236
      %v4263 = vadd.f32 %v4227, %v4236
      %v4264 = vadd.f32 %v4228, %v4236
      %v4265 = vadd.f32 %v4229, %v4236
      %v4266 = vadd.f32 %v4230, %v4236
      %v4267 = vadd.f32 %v4231, %v4236
      %v4268 = vadd.f32 %v4232, %v4236
      %v4269 = vmul.f32 %v4237, 0.5
      %v4270 = vmul.f32 %v4238, 0.5
      %v4271 = vmul.f32 %v4239, 0.5
      %v4272 = vmul.f32 %v4240, 0.5
      %v4273 = vmul.f32 %v4241, 0.5
      %v4274 = vmul.f32 %v4242, 0.5
      %v4275 = vmul.f32 %v4243, 0.5
      %v4276 = vmul.f32 %v4244, 0.5
      %v4277 = vmul.f32 %v4245, 0.5
      %v4278 = vmul.f32 %v4246, 0.5
      %v4279 = vmul.f32 %v4247, 0.5
      %v4280 = vmul.f32 %v4248, 0.5
      %v4281 = vmul.f32 %v4249, 0.5
      %v4282 = vmul.f32 %v4250, 0.5
      %v4283 = vmul.f32 %v4251, 0.5
      %v4284 = vmul.f32 %v4252, 0.5
      %v4285 = vmul.f32 %v4253, 0.5
      %v4286 = vmul.f32 %v4254, 0.5
      %v4287 = vmul.f32 %v4255, 0.5
      %v4288 = vmul.f32 %v4256, 0.5
      %v4289 = vmul.f32 %v4257, 0.5
      %v4290 = vmul.f32 %v4258, 0.5
      %v4291 = vmul.f32 %v4259, 0.5
      %v4292 = vmul.f32 %v4260, 0.5
      %v4293 = vmul.f32 %v4261, 0.5
      %v4294 = vmul.f32 %v4262, 0.5
      %v4295 = vmul.f32 %v4263, 0.5
      %v4296 = vmul.f32 %v4264, 0.5
      %v4297 = vmul.f32 %v4265, 0.5
      %v4298 = vmul.f32 %v4266, 0.5
      %v4299 = vmul.f32 %v4267, 0.5
      %v4300 = vmul.f32 %v4268, 0.5
      %v4301 = vmul.f32 %v4237, 0.70710677
      %v4302 = vmul.f32 %v4238, 0.70710677
      %v4303 = vmul.f32 %v4239, 0.70710677
      %v4304 = vmul.f32 %v4240, 0.70710677
      %v4305 = vmul.f32 %v4241, 0.70710677
      %v4306 = vmul.f32 %v4242, 0.70710677
      %v4307 = vmul.f32 %v4243, 0.70710677
      %v4308 = vmul.f32 %v4244, 0.70710677
      %v4309 = vmul.f32 %v4245, 0.70710677
      %v4310 = vmul.f32 %v4246, 0.70710677
      %v4311 = vmul.f32 %v4247, 0.70710677
      %v4312 = vmul.f32 %v4248, 0.70710677
      %v4313 = vmul.f32 %v4249, 0.70710677
      %v4314 = vmul.f32 %v4250, 0.70710677
      %v4315 = vmul.f32 %v4251, 0.70710677
      %v4316 = vmul.f32 %v4252, 0.70710677
      %v4317 = vmul.f32 %v4253, 0.70710677
      %v4318 = vmul.f32 %v4254, 0.70710677
      %v4319 = vmul.f32 %v4255, 0.70710677
      %v4320 = vmul.f32 %v4256, 0.70710677
      %v4321 = vmul.f32 %v4257, 0.70710677
      %v4322 = vmul.f32 %v4258, 0.70710677
      %v4323 = vmul.f32 %v4259, 0.70710677
      %v4324 = vmul.f32 %v4260, 0.70710677
      %v4325 = vmul.f32 %v4261, 0.70710677
      %v4326 = vmul.f32 %v4262, 0.70710677
      %v4327 = vmul.f32 %v4263, 0.70710677
      %v4328 = vmul.f32 %v4264, 0.70710677
      %v4329 = vmul.f32 %v4265, 0.70710677
      %v4330 = vmul.f32 %v4266, 0.70710677
      %v4331 = vmul.f32 %v4267, 0.70710677
      %v4332 = vmul.f32 %v4268, 0.70710677
      %v4333 = vand.u32 2147483647, %v4301
      %v4334 = vand.u32 2147483647, %v4302
      %v4335 = vand.u32 2147483647, %v4303
      %v4336 = vand.u32 2147483647, %v4304
      %v4337 = vand.u32 2147483647, %v4305
      %v4338 = vand.u32 2147483647, %v4306
      %v4339 = vand.u32 2147483647, %v4307
      %v4340 = vand.u32 2147483647, %v4308
      %v4341 = vand.u32 2147483647, %v4309
      %v4342 = vand.u32 2147483647, %v4310
      %v4343 = vand.u32 2147483647, %v4311
      %v4344 = vand.u32 2147483647, %v4312
      %v4345 = vand.u32 2147483647, %v4313
      %v4346 = vand.u32 2147483647, %v4314
      %v4347 = vand.u32 2147483647, %v4315
      %v4348 = vand.u32 2147483647, %v4316
      %v4349 = vand.u32 2147483647, %v4317
      %v4350 = vand.u32 2147483647, %v4318
      %v4351 = vand.u32 2147483647, %v4319
      %v4352 = vand.u32 2147483647, %v4320
      %v4353 = vand.u32 2147483647, %v4321
      %v4354 = vand.u32 2147483647, %v4322
      %v4355 = vand.u32 2147483647, %v4323
      %v4356 = vand.u32 2147483647, %v4324
      %v4357 = vand.u32 2147483647, %v4325
      %v4358 = vand.u32 2147483647, %v4326
      %v4359 = vand.u32 2147483647, %v4327
      %v4360 = vand.u32 2147483647, %v4328
      %v4361 = vand.u32 2147483647, %v4329
      %v4362 = vand.u32 2147483647, %v4330
      %v4363 = vand.u32 2147483647, %v4331
      %v4364 = vand.u32 2147483647, %v4332
      %v4365 = vmul.f32 %v4333, 0.3275911
      %v4366 = vmul.f32 %v4334, 0.3275911
      %v4367 = vmul.f32 %v4335, 0.3275911
      %v4368 = vmul.f32 %v4336, 0.3275911
      %v4369 = vmul.f32 %v4337, 0.3275911
      %v4370 = vmul.f32 %v4338, 0.3275911
      %v4371 = vmul.f32 %v4339, 0.3275911
      %v4372 = vmul.f32 %v4340, 0.3275911
      %v4373 = vmul.f32 %v4341, 0.3275911
      %v4374 = vmul.f32 %v4342, 0.3275911
      %v4375 = vmul.f32 %v4343, 0.3275911
      %v4376 = vmul.f32 %v4344, 0.3275911
      %v4377 = vmul.f32 %v4345, 0.3275911
      %v4378 = vmul.f32 %v4346, 0.3275911
      %v4379 = vmul.f32 %v4347, 0.3275911
      %v4380 = vmul.f32 %v4348, 0.3275911
      %v4381 = vmul.f32 %v4349, 0.3275911
      %v4382 = vmul.f32 %v4350, 0.3275911
      %v4383 = vmul.f32 %v4351, 0.3275911
      %v4384 = vmul.f32 %v4352, 0.3275911
      %v4385 = vmul.f32 %v4353, 0.3275911
      %v4386 = vmul.f32 %v4354, 0.3275911
      %v4387 = vmul.f32 %v4355, 0.3275911
      %v4388 = vmul.f32 %v4356, 0.3275911
      %v4389 = vmul.f32 %v4357, 0.3275911
      %v4390 = vmul.f32 %v4358, 0.3275911
      %v4391 = vmul.f32 %v4359, 0.3275911
      %v4392 = vmul.f32 %v4360, 0.3275911
      %v4393 = vmul.f32 %v4361, 0.3275911
      %v4394 = vmul.f32 %v4362, 0.3275911
      %v4395 = vmul.f32 %v4363, 0.3275911
      %v4396 = vmul.f32 %v4364, 0.3275911
      %v4397 = vadd.f32 %v4365, 1.0
      %v4398 = vadd.f32 %v4366, 1.0
      %v4399 = vadd.f32 %v4367, 1.0
      %v4400 = vadd.f32 %v4368, 1.0
      %v4401 = vadd.f32 %v4369, 1.0
      %v4402 = vadd.f32 %v4370, 1.0
      %v4403 = vadd.f32 %v4371, 1.0
      %v4404 = vadd.f32 %v4372, 1.0
      %v4405 = vadd.f32 %v4373, 1.0
      %v4406 = vadd.f32 %v4374, 1.0
      %v4407 = vadd.f32 %v4375, 1.0
      %v4408 = vadd.f32 %v4376, 1.0
      %v4409 = vadd.f32 %v4377, 1.0
      %v4410 = vadd.f32 %v4378, 1.0
      %v4411 = vadd.f32 %v4379, 1.0
      %v4412 = vadd.f32 %v4380, 1.0
      %v4413 = vadd.f32 %v4381, 1.0
      %v4414 = vadd.f32 %v4382, 1.0
      %v4415 = vadd.f32 %v4383, 1.0
      %v4416 = vadd.f32 %v4384, 1.0
      %v4417 = vadd.f32 %v4385, 1.0
      %v4418 = vadd.f32 %v4386, 1.0
      %v4419 = vadd.f32 %v4387, 1.0
      %v4420 = vadd.f32 %v4388, 1.0
      %v4421 = vadd.f32 %v4389, 1.0
      %v4422 = vadd.f32 %v4390, 1.0
      %v4423 = vadd.f32 %v4391, 1.0
      %v4424 = vadd.f32 %v4392, 1.0
      %v4425 = vadd.f32 %v4393, 1.0
      %v4426 = vadd.f32 %v4394, 1.0
      %v4427 = vadd.f32 %v4395, 1.0
      %v4428 = vadd.f32 %v4396, 1.0
      %v4429 = vrcp.pop %v4397
      %v4430 = vmul.f32 1.0, %v4429
      %v4431 = vrcp.pop %v4398
      %v4432 = vmul.f32 1.0, %v4431
      %v4433 = vrcp.pop %v4399
      %v4434 = vmul.f32 1.0, %v4433
      %v4435 = vrcp.pop %v4400
      %v4436 = vmul.f32 1.0, %v4435
      %v4437 = vrcp.pop %v4401
      %v4438 = vmul.f32 1.0, %v4437
      %v4439 = vrcp.pop %v4402
      %v4440 = vmul.f32 1.0, %v4439
      %v4441 = vrcp.pop %v4403
      %v4442 = vmul.f32 1.0, %v4441
      %v4443 = vrcp.pop %v4404
      %v4444 = vmul.f32 1.0, %v4443
      %v4445 = vrcp.pop %v4405
      %v4446 = vmul.f32 1.0, %v4445
      %v4447 = vrcp.pop %v4406
      %v4448 = vmul.f32 1.0, %v4447
      %v4449 = vrcp.pop %v4407
      %v4450 = vmul.f32 1.0, %v4449
      %v4451 = vrcp.pop %v4408
      %v4452 = vmul.f32 1.0, %v4451
      %v4453 = vrcp.pop %v4409
      %v4454 = vmul.f32 1.0, %v4453
      %v4455 = vrcp.pop %v4410
      %v4456 = vmul.f32 1.0, %v4455
      %v4457 = vrcp.pop %v4411
      %v4458 = vmul.f32 1.0, %v4457
      %v4459 = vrcp.pop %v4412
      %v4460 = vmul.f32 1.0, %v4459
      %v4461 = vrcp.pop %v4413
      %v4462 = vmul.f32 1.0, %v4461
      %v4463 = vrcp.pop %v4414
      %v4464 = vmul.f32 1.0, %v4463
      %v4465 = vrcp.pop %v4415
      %v4466 = vmul.f32 1.0, %v4465
      %v4467 = vrcp.pop %v4416
      %v4468 = vmul.f32 1.0, %v4467
      %v4469 = vrcp.pop %v4417
      %v4470 = vmul.f32 1.0, %v4469
      %v4471 = vrcp.pop %v4418
      %v4472 = vmul.f32 1.0, %v4471
      %v4473 = vrcp.pop %v4419
      %v4474 = vmul.f32 1.0, %v4473
      %v4475 = vrcp.pop %v4420
      %v4476 = vmul.f32 1.0, %v4475
      %v4477 = vrcp.pop %v4421
      %v4478 = vmul.f32 1.0, %v4477
      %v4479 = vrcp.pop %v4422
      %v4480 = vmul.f32 1.0, %v4479
      %v4481 = vrcp.pop %v4423
      %v4482 = vmul.f32 1.0, %v4481
      %v4483 = vrcp.pop %v4424
      %v4484 = vmul.f32 1.0, %v4483
      %v4485 = vrcp.pop %v4425
      %v4486 = vmul.f32 1.0, %v4485
      %v4487 = vrcp.pop %v4426
      %v4488 = vmul.f32 1.0, %v4487
      %v4489 = vrcp.pop %v4427
      %v4490 = vmul.f32 1.0, %v4489
      %v4491 = vrcp.pop %v4428
      %v4492 = vmul.f32 1.0, %v4491
      %v4493 = vmul.f32 %v4430, 1.0614054
      %v4494 = vmul.f32 %v4432, 1.0614054
      %v4495 = vmul.f32 %v4434, 1.0614054
      %v4496 = vmul.f32 %v4436, 1.0614054
      %v4497 = vmul.f32 %v4438, 1.0614054
      %v4498 = vmul.f32 %v4440, 1.0614054
      %v4499 = vmul.f32 %v4442, 1.0614054
      %v4500 = vmul.f32 %v4444, 1.0614054
      %v4501 = vmul.f32 %v4446, 1.0614054
      %v4502 = vmul.f32 %v4448, 1.0614054
      %v4503 = vmul.f32 %v4450, 1.0614054
      %v4504 = vmul.f32 %v4452, 1.0614054
      %v4505 = vmul.f32 %v4454, 1.0614054
      %v4506 = vmul.f32 %v4456, 1.0614054
      %v4507 = vmul.f32 %v4458, 1.0614054
      %v4508 = vmul.f32 %v4460, 1.0614054
      %v4509 = vmul.f32 %v4462, 1.0614054
      %v4510 = vmul.f32 %v4464, 1.0614054
      %v4511 = vmul.f32 %v4466, 1.0614054
      %v4512 = vmul.f32 %v4468, 1.0614054
      %v4513 = vmul.f32 %v4470, 1.0614054
      %v4514 = vmul.f32 %v4472, 1.0614054
      %v4515 = vmul.f32 %v4474, 1.0614054
      %v4516 = vmul.f32 %v4476, 1.0614054
      %v4517 = vmul.f32 %v4478, 1.0614054
      %v4518 = vmul.f32 %v4480, 1.0614054
      %v4519 = vmul.f32 %v4482, 1.0614054
      %v4520 = vmul.f32 %v4484, 1.0614054
      %v4521 = vmul.f32 %v4486, 1.0614054
      %v4522 = vmul.f32 %v4488, 1.0614054
      %v4523 = vmul.f32 %v4490, 1.0614054
      %v4524 = vmul.f32 %v4492, 1.0614054
      %v4525 = vadd.f32 %v4493, -1.4531521
      %v4526 = vadd.f32 %v4494, -1.4531521
      %v4527 = vadd.f32 %v4495, -1.4531521
      %v4528 = vadd.f32 %v4496, -1.4531521
      %v4529 = vadd.f32 %v4497, -1.4531521
      %v4530 = vadd.f32 %v4498, -1.4531521
      %v4531 = vadd.f32 %v4499, -1.4531521
      %v4532 = vadd.f32 %v4500, -1.4531521
      %v4533 = vadd.f32 %v4501, -1.4531521
      %v4534 = vadd.f32 %v4502, -1.4531521
      %v4535 = vadd.f32 %v4503, -1.4531521
      %v4536 = vadd.f32 %v4504, -1.4531521
      %v4537 = vadd.f32 %v4505, -1.4531521
      %v4538 = vadd.f32 %v4506, -1.4531521
      %v4539 = vadd.f32 %v4507, -1.4531521
      %v4540 = vadd.f32 %v4508, -1.4531521
      %v4541 = vadd.f32 %v4509, -1.4531521
      %v4542 = vadd.f32 %v4510, -1.4531521
      %v4543 = vadd.f32 %v4511, -1.4531521
      %v4544 = vadd.f32 %v4512, -1.4531521
      %v4545 = vadd.f32 %v4513, -1.4531521
      %v4546 = vadd.f32 %v4514, -1.4531521
      %v4547 = vadd.f32 %v4515, -1.4531521
      %v4548 = vadd.f32 %v4516, -1.4531521
      %v4549 = vadd.f32 %v4517, -1.4531521
      %v4550 = vadd.f32 %v4518, -1.4531521
      %v4551 = vadd.f32 %v4519, -1.4531521
      %v4552 = vadd.f32 %v4520, -1.4531521
      %v4553 = vadd.f32 %v4521, -1.4531521
      %v4554 = vadd.f32 %v4522, -1.4531521
      %v4555 = vadd.f32 %v4523, -1.4531521
      %v4556 = vadd.f32 %v4524, -1.4531521
      %v4557 = vmul.f32 %v4525, %v4430
      %v4558 = vmul.f32 %v4526, %v4432
      %v4559 = vmul.f32 %v4527, %v4434
      %v4560 = vmul.f32 %v4528, %v4436
      %v4561 = vmul.f32 %v4529, %v4438
      %v4562 = vmul.f32 %v4530, %v4440
      %v4563 = vmul.f32 %v4531, %v4442
      %v4564 = vmul.f32 %v4532, %v4444
      %v4565 = vmul.f32 %v4533, %v4446
      %v4566 = vmul.f32 %v4534, %v4448
      %v4567 = vmul.f32 %v4535, %v4450
      %v4568 = vmul.f32 %v4536, %v4452
      %v4569 = vmul.f32 %v4537, %v4454
      %v4570 = vmul.f32 %v4538, %v4456
      %v4571 = vmul.f32 %v4539, %v4458
      %v4572 = vmul.f32 %v4540, %v4460
      %v4573 = vmul.f32 %v4541, %v4462
      %v4574 = vmul.f32 %v4542, %v4464
      %v4575 = vmul.f32 %v4543, %v4466
      %v4576 = vmul.f32 %v4544, %v4468
      %v4577 = vmul.f32 %v4545, %v4470
      %v4578 = vmul.f32 %v4546, %v4472
      %v4579 = vmul.f32 %v4547, %v4474
      %v4580 = vmul.f32 %v4548, %v4476
      %v4581 = vmul.f32 %v4549, %v4478
      %v4582 = vmul.f32 %v4550, %v4480
      %v4583 = vmul.f32 %v4551, %v4482
      %v4584 = vmul.f32 %v4552, %v4484
      %v4585 = vmul.f32 %v4553, %v4486
      %v4586 = vmul.f32 %v4554, %v4488
      %v4587 = vmul.f32 %v4555, %v4490
      %v4588 = vmul.f32 %v4556, %v4492
      %v4589 = vadd.f32 %v4557, 1.4214138
      %v4590 = vadd.f32 %v4558, 1.4214138
      %v4591 = vadd.f32 %v4559, 1.4214138
      %v4592 = vadd.f32 %v4560, 1.4214138
      %v4593 = vadd.f32 %v4561, 1.4214138
      %v4594 = vadd.f32 %v4562, 1.4214138
      %v4595 = vadd.f32 %v4563, 1.4214138
      %v4596 = vadd.f32 %v4564, 1.4214138
      %v4597 = vadd.f32 %v4565, 1.4214138
      %v4598 = vadd.f32 %v4566, 1.4214138
      %v4599 = vadd.f32 %v4567, 1.4214138
      %v4600 = vadd.f32 %v4568, 1.4214138
      %v4601 = vadd.f32 %v4569, 1.4214138
      %v4602 = vadd.f32 %v4570, 1.4214138
      %v4603 = vadd.f32 %v4571, 1.4214138
      %v4604 = vadd.f32 %v4572, 1.4214138
      %v4605 = vadd.f32 %v4573, 1.4214138
      %v4606 = vadd.f32 %v4574, 1.4214138
      %v4607 = vadd.f32 %v4575, 1.4214138
      %v4608 = vadd.f32 %v4576, 1.4214138
      %v4609 = vadd.f32 %v4577, 1.4214138
      %v4610 = vadd.f32 %v4578, 1.4214138
      %v4611 = vadd.f32 %v4579, 1.4214138
      %v4612 = vadd.f32 %v4580, 1.4214138
      %v4613 = vadd.f32 %v4581, 1.4214138
      %v4614 = vadd.f32 %v4582, 1.4214138
      %v4615 = vadd.f32 %v4583, 1.4214138
      %v4616 = vadd.f32 %v4584, 1.4214138
      %v4617 = vadd.f32 %v4585, 1.4214138
      %v4618 = vadd.f32 %v4586, 1.4214138
      %v4619 = vadd.f32 %v4587, 1.4214138
      %v4620 = vadd.f32 %v4588, 1.4214138
      %v4621 = vmul.f32 %v4589, %v4430
      %v4622 = vmul.f32 %v4590, %v4432
      %v4623 = vmul.f32 %v4591, %v4434
      %v4624 = vmul.f32 %v4592, %v4436
      %v4625 = vmul.f32 %v4593, %v4438
      %v4626 = vmul.f32 %v4594, %v4440
      %v4627 = vmul.f32 %v4595, %v4442
      %v4628 = vmul.f32 %v4596, %v4444
      %v4629 = vmul.f32 %v4597, %v4446
      %v4630 = vmul.f32 %v4598, %v4448
      %v4631 = vmul.f32 %v4599, %v4450
      %v4632 = vmul.f32 %v4600, %v4452
      %v4633 = vmul.f32 %v4601, %v4454
      %v4634 = vmul.f32 %v4602, %v4456
      %v4635 = vmul.f32 %v4603, %v4458
      %v4636 = vmul.f32 %v4604, %v4460
      %v4637 = vmul.f32 %v4605, %v4462
      %v4638 = vmul.f32 %v4606, %v4464
      %v4639 = vmul.f32 %v4607, %v4466
      %v4640 = vmul.f32 %v4608, %v4468
      %v4641 = vmul.f32 %v4609, %v4470
      %v4642 = vmul.f32 %v4610, %v4472
      %v4643 = vmul.f32 %v4611, %v4474
      %v4644 = vmul.f32 %v4612, %v4476
      %v4645 = vmul.f32 %v4613, %v4478
      %v4646 = vmul.f32 %v4614, %v4480
      %v4647 = vmul.f32 %v4615, %v4482
      %v4648 = vmul.f32 %v4616, %v4484
      %v4649 = vmul.f32 %v4617, %v4486
      %v4650 = vmul.f32 %v4618, %v4488
      %v4651 = vmul.f32 %v4619, %v4490
      %v4652 = vmul.f32 %v4620, %v4492
      %v4653 = vadd.f32 %v4621, -0.28449672
      %v4654 = vadd.f32 %v4622, -0.28449672
      %v4655 = vadd.f32 %v4623, -0.28449672
      %v4656 = vadd.f32 %v4624, -0.28449672
      %v4657 = vadd.f32 %v4625, -0.28449672
      %v4658 = vadd.f32 %v4626, -0.28449672
      %v4659 = vadd.f32 %v4627, -0.28449672
      %v4660 = vadd.f32 %v4628, -0.28449672
      %v4661 = vadd.f32 %v4629, -0.28449672
      %v4662 = vadd.f32 %v4630, -0.28449672
      %v4663 = vadd.f32 %v4631, -0.28449672
      %v4664 = vadd.f32 %v4632, -0.28449672
      %v4665 = vadd.f32 %v4633, -0.28449672
      %v4666 = vadd.f32 %v4634, -0.28449672
      %v4667 = vadd.f32 %v4635, -0.28449672
      %v4668 = vadd.f32 %v4636, -0.28449672
      %v4669 = vadd.f32 %v4637, -0.28449672
      %v4670 = vadd.f32 %v4638, -0.28449672
      %v4671 = vadd.f32 %v4639, -0.28449672
      %v4672 = vadd.f32 %v4640, -0.28449672
      %v4673 = vadd.f32 %v4641, -0.28449672
      %v4674 = vadd.f32 %v4642, -0.28449672
      %v4675 = vadd.f32 %v4643, -0.28449672
      %v4676 = vadd.f32 %v4644, -0.28449672
      %v4677 = vadd.f32 %v4645, -0.28449672
      %v4678 = vadd.f32 %v4646, -0.28449672
      %v4679 = vadd.f32 %v4647, -0.28449672
      %v4680 = vadd.f32 %v4648, -0.28449672
      %v4681 = vadd.f32 %v4649, -0.28449672
      %v4682 = vadd.f32 %v4650, -0.28449672
      %v4683 = vadd.f32 %v4651, -0.28449672
      %v4684 = vadd.f32 %v4652, -0.28449672
      %v4685 = vmul.f32 %v4653, %v4430
      %v4686 = vmul.f32 %v4654, %v4432
      %v4687 = vmul.f32 %v4655, %v4434
      %v4688 = vmul.f32 %v4656, %v4436
      %v4689 = vmul.f32 %v4657, %v4438
      %v4690 = vmul.f32 %v4658, %v4440
      %v4691 = vmul.f32 %v4659, %v4442
      %v4692 = vmul.f32 %v4660, %v4444
      %v4693 = vmul.f32 %v4661, %v4446
      %v4694 = vmul.f32 %v4662, %v4448
      %v4695 = vmul.f32 %v4663, %v4450
      %v4696 = vmul.f32 %v4664, %v4452
      %v4697 = vmul.f32 %v4665, %v4454
      %v4698 = vmul.f32 %v4666, %v4456
      %v4699 = vmul.f32 %v4667, %v4458
      %v4700 = vmul.f32 %v4668, %v4460
      %v4701 = vmul.f32 %v4669, %v4462
      %v4702 = vmul.f32 %v4670, %v4464
      %v4703 = vmul.f32 %v4671, %v4466
      %v4704 = vmul.f32 %v4672, %v4468
      %v4705 = vmul.f32 %v4673, %v4470
      %v4706 = vmul.f32 %v4674, %v4472
      %v4707 = vmul.f32 %v4675, %v4474
      %v4708 = vmul.f32 %v4676, %v4476
      %v4709 = vmul.f32 %v4677, %v4478
      %v4710 = vmul.f32 %v4678, %v4480
      %v4711 = vmul.f32 %v4679, %v4482
      %v4712 = vmul.f32 %v4680, %v4484
      %v4713 = vmul.f32 %v4681, %v4486
      %v4714 = vmul.f32 %v4682, %v4488
      %v4715 = vmul.f32 %v4683, %v4490
      %v4716 = vmul.f32 %v4684, %v4492
      %v4717 = vadd.f32 %v4685, 0.2548296
      %v4718 = vadd.f32 %v4686, 0.2548296
      %v4719 = vadd.f32 %v4687, 0.2548296
      %v4720 = vadd.f32 %v4688, 0.2548296
      %v4721 = vadd.f32 %v4689, 0.2548296
      %v4722 = vadd.f32 %v4690, 0.2548296
      %v4723 = vadd.f32 %v4691, 0.2548296
      %v4724 = vadd.f32 %v4692, 0.2548296
      %v4725 = vadd.f32 %v4693, 0.2548296
      %v4726 = vadd.f32 %v4694, 0.2548296
      %v4727 = vadd.f32 %v4695, 0.2548296
      %v4728 = vadd.f32 %v4696, 0.2548296
      %v4729 = vadd.f32 %v4697, 0.2548296
      %v4730 = vadd.f32 %v4698, 0.2548296
      %v4731 = vadd.f32 %v4699, 0.2548296
      %v4732 = vadd.f32 %v4700, 0.2548296
      %v4733 = vadd.f32 %v4701, 0.2548296
      %v4734 = vadd.f32 %v4702, 0.2548296
      %v4735 = vadd.f32 %v4703, 0.2548296
      %v4736 = vadd.f32 %v4704, 0.2548296
      %v4737 = vadd.f32 %v4705, 0.2548296
      %v4738 = vadd.f32 %v4706, 0.2548296
      %v4739 = vadd.f32 %v4707, 0.2548296
      %v4740 = vadd.f32 %v4708, 0.2548296
      %v4741 = vadd.f32 %v4709, 0.2548296
      %v4742 = vadd.f32 %v4710, 0.2548296
      %v4743 = vadd.f32 %v4711, 0.2548296
      %v4744 = vadd.f32 %v4712, 0.2548296
      %v4745 = vadd.f32 %v4713, 0.2548296
      %v4746 = vadd.f32 %v4714, 0.2548296
      %v4747 = vadd.f32 %v4715, 0.2548296
      %v4748 = vadd.f32 %v4716, 0.2548296
      %v4749 = vmul.f32 %v4717, %v4430
      %v4750 = vmul.f32 %v4718, %v4432
      %v4751 = vmul.f32 %v4719, %v4434
      %v4752 = vmul.f32 %v4720, %v4436
      %v4753 = vmul.f32 %v4721, %v4438
      %v4754 = vmul.f32 %v4722, %v4440
      %v4755 = vmul.f32 %v4723, %v4442
      %v4756 = vmul.f32 %v4724, %v4444
      %v4757 = vmul.f32 %v4725, %v4446
      %v4758 = vmul.f32 %v4726, %v4448
      %v4759 = vmul.f32 %v4727, %v4450
      %v4760 = vmul.f32 %v4728, %v4452
      %v4761 = vmul.f32 %v4729, %v4454
      %v4762 = vmul.f32 %v4730, %v4456
      %v4763 = vmul.f32 %v4731, %v4458
      %v4764 = vmul.f32 %v4732, %v4460
      %v4765 = vmul.f32 %v4733, %v4462
      %v4766 = vmul.f32 %v4734, %v4464
      %v4767 = vmul.f32 %v4735, %v4466
      %v4768 = vmul.f32 %v4736, %v4468
      %v4769 = vmul.f32 %v4737, %v4470
      %v4770 = vmul.f32 %v4738, %v4472
      %v4771 = vmul.f32 %v4739, %v4474
      %v4772 = vmul.f32 %v4740, %v4476
      %v4773 = vmul.f32 %v4741, %v4478
      %v4774 = vmul.f32 %v4742, %v4480
      %v4775 = vmul.f32 %v4743, %v4482
      %v4776 = vmul.f32 %v4744, %v4484
      %v4777 = vmul.f32 %v4745, %v4486
      %v4778 = vmul.f32 %v4746, %v4488
      %v4779 = vmul.f32 %v4747, %v4490
      %v4780 = vmul.f32 %v4748, %v4492
      %v4781 = vsub.f32 0.0, %v4333
      %v4782 = vsub.f32 0.0, %v4334
      %v4783 = vsub.f32 0.0, %v4335
      %v4784 = vsub.f32 0.0, %v4336
      %v4785 = vsub.f32 0.0, %v4337
      %v4786 = vsub.f32 0.0, %v4338
      %v4787 = vsub.f32 0.0, %v4339
      %v4788 = vsub.f32 0.0, %v4340
      %v4789 = vsub.f32 0.0, %v4341
      %v4790 = vsub.f32 0.0, %v4342
      %v4791 = vsub.f32 0.0, %v4343
      %v4792 = vsub.f32 0.0, %v4344
      %v4793 = vsub.f32 0.0, %v4345
      %v4794 = vsub.f32 0.0, %v4346
      %v4795 = vsub.f32 0.0, %v4347
      %v4796 = vsub.f32 0.0, %v4348
      %v4797 = vsub.f32 0.0, %v4349
      %v4798 = vsub.f32 0.0, %v4350
      %v4799 = vsub.f32 0.0, %v4351
      %v4800 = vsub.f32 0.0, %v4352
      %v4801 = vsub.f32 0.0, %v4353
      %v4802 = vsub.f32 0.0, %v4354
      %v4803 = vsub.f32 0.0, %v4355
      %v4804 = vsub.f32 0.0, %v4356
      %v4805 = vsub.f32 0.0, %v4357
      %v4806 = vsub.f32 0.0, %v4358
      %v4807 = vsub.f32 0.0, %v4359
      %v4808 = vsub.f32 0.0, %v4360
      %v4809 = vsub.f32 0.0, %v4361
      %v4810 = vsub.f32 0.0, %v4362
      %v4811 = vsub.f32 0.0, %v4363
      %v4812 = vsub.f32 0.0, %v4364
      %v4813 = vmul.f32 %v4781, %v4333
      %v4814 = vmul.f32 %v4782, %v4334
      %v4815 = vmul.f32 %v4783, %v4335
      %v4816 = vmul.f32 %v4784, %v4336
      %v4817 = vmul.f32 %v4785, %v4337
      %v4818 = vmul.f32 %v4786, %v4338
      %v4819 = vmul.f32 %v4787, %v4339
      %v4820 = vmul.f32 %v4788, %v4340
      %v4821 = vmul.f32 %v4789, %v4341
      %v4822 = vmul.f32 %v4790, %v4342
      %v4823 = vmul.f32 %v4791, %v4343
      %v4824 = vmul.f32 %v4792, %v4344
      %v4825 = vmul.f32 %v4793, %v4345
      %v4826 = vmul.f32 %v4794, %v4346
      %v4827 = vmul.f32 %v4795, %v4347
      %v4828 = vmul.f32 %v4796, %v4348
      %v4829 = vmul.f32 %v4797, %v4349
      %v4830 = vmul.f32 %v4798, %v4350
      %v4831 = vmul.f32 %v4799, %v4351
      %v4832 = vmul.f32 %v4800, %v4352
      %v4833 = vmul.f32 %v4801, %v4353
      %v4834 = vmul.f32 %v4802, %v4354
      %v4835 = vmul.f32 %v4803, %v4355
      %v4836 = vmul.f32 %v4804, %v4356
      %v4837 = vmul.f32 %v4805, %v4357
      %v4838 = vmul.f32 %v4806, %v4358
      %v4839 = vmul.f32 %v4807, %v4359
      %v4840 = vmul.f32 %v4808, %v4360
      %v4841 = vmul.f32 %v4809, %v4361
      %v4842 = vmul.f32 %v4810, %v4362
      %v4843 = vmul.f32 %v4811, %v4363
      %v4844 = vmul.f32 %v4812, %v4364
      %v4845 = vmul.f32 %v4813, 1.442695
      %v4846 = vpow.pop %v4845
      %v4847 = vmul.f32 %v4814, 1.442695
      %v4848 = vpow.pop %v4847
      %v4849 = vmul.f32 %v4815, 1.442695
      %v4850 = vpow.pop %v4849
      %v4851 = vmul.f32 %v4816, 1.442695
      %v4852 = vpow.pop %v4851
      %v4853 = vmul.f32 %v4817, 1.442695
      %v4854 = vpow.pop %v4853
      %v4855 = vmul.f32 %v4818, 1.442695
      %v4856 = vpow.pop %v4855
      %v4857 = vmul.f32 %v4819, 1.442695
      %v4858 = vpow.pop %v4857
      %v4859 = vmul.f32 %v4820, 1.442695
      %v4860 = vpow.pop %v4859
      %v4861 = vmul.f32 %v4821, 1.442695
      %v4862 = vpow.pop %v4861
      %v4863 = vmul.f32 %v4822, 1.442695
      %v4864 = vpow.pop %v4863
      %v4865 = vmul.f32 %v4823, 1.442695
      %v4866 = vpow.pop %v4865
      %v4867 = vmul.f32 %v4824, 1.442695
      %v4868 = vpow.pop %v4867
      %v4869 = vmul.f32 %v4825, 1.442695
      %v4870 = vpow.pop %v4869
      %v4871 = vmul.f32 %v4826, 1.442695
      %v4872 = vpow.pop %v4871
      %v4873 = vmul.f32 %v4827, 1.442695
      %v4874 = vpow.pop %v4873
      %v4875 = vmul.f32 %v4828, 1.442695
      %v4876 = vpow.pop %v4875
      %v4877 = vmul.f32 %v4829, 1.442695
      %v4878 = vpow.pop %v4877
      %v4879 = vmul.f32 %v4830, 1.442695
      %v4880 = vpow.pop %v4879
      %v4881 = vmul.f32 %v4831, 1.442695
      %v4882 = vpow.pop %v4881
      %v4883 = vmul.f32 %v4832, 1.442695
      %v4884 = vpow.pop %v4883
      %v4885 = vmul.f32 %v4833, 1.442695
      %v4886 = vpow.pop %v4885
      %v4887 = vmul.f32 %v4834, 1.442695
      %v4888 = vpow.pop %v4887
      %v4889 = vmul.f32 %v4835, 1.442695
      %v4890 = vpow.pop %v4889
      %v4891 = vmul.f32 %v4836, 1.442695
      %v4892 = vpow.pop %v4891
      %v4893 = vmul.f32 %v4837, 1.442695
      %v4894 = vpow.pop %v4893
      %v4895 = vmul.f32 %v4838, 1.442695
      %v4896 = vpow.pop %v4895
      %v4897 = vmul.f32 %v4839, 1.442695
      %v4898 = vpow.pop %v4897
      %v4899 = vmul.f32 %v4840, 1.442695
      %v4900 = vpow.pop %v4899
      %v4901 = vmul.f32 %v4841, 1.442695
      %v4902 = vpow.pop %v4901
      %v4903 = vmul.f32 %v4842, 1.442695
      %v4904 = vpow.pop %v4903
      %v4905 = vmul.f32 %v4843, 1.442695
      %v4906 = vpow.pop %v4905
      %v4907 = vmul.f32 %v4844, 1.442695
      %v4908 = vpow.pop %v4907
      %v4909 = vmul.f32 %v4749, %v4846
      %v4910 = vmul.f32 %v4750, %v4848
      %v4911 = vmul.f32 %v4751, %v4850
      %v4912 = vmul.f32 %v4752, %v4852
      %v4913 = vmul.f32 %v4753, %v4854
      %v4914 = vmul.f32 %v4754, %v4856
      %v4915 = vmul.f32 %v4755, %v4858
      %v4916 = vmul.f32 %v4756, %v4860
      %v4917 = vmul.f32 %v4757, %v4862
      %v4918 = vmul.f32 %v4758, %v4864
      %v4919 = vmul.f32 %v4759, %v4866
      %v4920 = vmul.f32 %v4760, %v4868
      %v4921 = vmul.f32 %v4761, %v4870
      %v4922 = vmul.f32 %v4762, %v4872
      %v4923 = vmul.f32 %v4763, %v4874
      %v4924 = vmul.f32 %v4764, %v4876
      %v4925 = vmul.f32 %v4765, %v4878
      %v4926 = vmul.f32 %v4766, %v4880
      %v4927 = vmul.f32 %v4767, %v4882
      %v4928 = vmul.f32 %v4768, %v4884
      %v4929 = vmul.f32 %v4769, %v4886
      %v4930 = vmul.f32 %v4770, %v4888
      %v4931 = vmul.f32 %v4771, %v4890
      %v4932 = vmul.f32 %v4772, %v4892
      %v4933 = vmul.f32 %v4773, %v4894
      %v4934 = vmul.f32 %v4774, %v4896
      %v4935 = vmul.f32 %v4775, %v4898
      %v4936 = vmul.f32 %v4776, %v4900
      %v4937 = vmul.f32 %v4777, %v4902
      %v4938 = vmul.f32 %v4778, %v4904
      %v4939 = vmul.f32 %v4779, %v4906
      %v4940 = vmul.f32 %v4780, %v4908
      %v4941 = vsub.f32 1.0, %v4909
      %v4942 = vsub.f32 1.0, %v4910
      %v4943 = vsub.f32 1.0, %v4911
      %v4944 = vsub.f32 1.0, %v4912
      %v4945 = vsub.f32 1.0, %v4913
      %v4946 = vsub.f32 1.0, %v4914
      %v4947 = vsub.f32 1.0, %v4915
      %v4948 = vsub.f32 1.0, %v4916
      %v4949 = vsub.f32 1.0, %v4917
      %v4950 = vsub.f32 1.0, %v4918
      %v4951 = vsub.f32 1.0, %v4919
      %v4952 = vsub.f32 1.0, %v4920
      %v4953 = vsub.f32 1.0, %v4921
      %v4954 = vsub.f32 1.0, %v4922
      %v4955 = vsub.f32 1.0, %v4923
      %v4956 = vsub.f32 1.0, %v4924
      %v4957 = vsub.f32 1.0, %v4925
      %v4958 = vsub.f32 1.0, %v4926
      %v4959 = vsub.f32 1.0, %v4927
      %v4960 = vsub.f32 1.0, %v4928
      %v4961 = vsub.f32 1.0, %v4929
      %v4962 = vsub.f32 1.0, %v4930
      %v4963 = vsub.f32 1.0, %v4931
      %v4964 = vsub.f32 1.0, %v4932
      %v4965 = vsub.f32 1.0, %v4933
      %v4966 = vsub.f32 1.0, %v4934
      %v4967 = vsub.f32 1.0, %v4935
      %v4968 = vsub.f32 1.0, %v4936
      %v4969 = vsub.f32 1.0, %v4937
      %v4970 = vsub.f32 1.0, %v4938
      %v4971 = vsub.f32 1.0, %v4939
      %v4972 = vsub.f32 1.0, %v4940
      %vm4973 = vcmp.lt.f32.partialorder %v4301, 0.0
      %vm4974 = vcmp.lt.f32.partialorder %v4302, 0.0
      %vm4975 = vcmp.lt.f32.partialorder %v4303, 0.0
      %vm4976 = vcmp.lt.f32.partialorder %v4304, 0.0
      %vm4977 = vcmp.lt.f32.partialorder %v4305, 0.0
      %vm4978 = vcmp.lt.f32.partialorder %v4306, 0.0
      %vm4979 = vcmp.lt.f32.partialorder %v4307, 0.0
      %vm4980 = vcmp.lt.f32.partialorder %v4308, 0.0
      %vm4981 = vcmp.lt.f32.partialorder %v4309, 0.0
      %vm4982 = vcmp.lt.f32.partialorder %v4310, 0.0
      %vm4983 = vcmp.lt.f32.partialorder %v4311, 0.0
      %vm4984 = vcmp.lt.f32.partialorder %v4312, 0.0
      %vm4985 = vcmp.lt.f32.partialorder %v4313, 0.0
      %vm4986 = vcmp.lt.f32.partialorder %v4314, 0.0
      %vm4987 = vcmp.lt.f32.partialorder %v4315, 0.0
      %vm4988 = vcmp.lt.f32.partialorder %v4316, 0.0
      %vm4989 = vcmp.lt.f32.partialorder %v4317, 0.0
      %vm4990 = vcmp.lt.f32.partialorder %v4318, 0.0
      %vm4991 = vcmp.lt.f32.partialorder %v4319, 0.0
      %vm4992 = vcmp.lt.f32.partialorder %v4320, 0.0
      %vm4993 = vcmp.lt.f32.partialorder %v4321, 0.0
      %vm4994 = vcmp.lt.f32.partialorder %v4322, 0.0
      %vm4995 = vcmp.lt.f32.partialorder %v4323, 0.0
      %vm4996 = vcmp.lt.f32.partialorder %v4324, 0.0
      %vm4997 = vcmp.lt.f32.partialorder %v4325, 0.0
      %vm4998 = vcmp.lt.f32.partialorder %v4326, 0.0
      %vm4999 = vcmp.lt.f32.partialorder %v4327, 0.0
      %vm5000 = vcmp.lt.f32.partialorder %v4328, 0.0
      %vm5001 = vcmp.lt.f32.partialorder %v4329, 0.0
      %vm5002 = vcmp.lt.f32.partialorder %v4330, 0.0
      %vm5003 = vcmp.lt.f32.partialorder %v4331, 0.0
      %vm5004 = vcmp.lt.f32.partialorder %v4332, 0.0
      %v5005 = vsub.f32 0.0, %v4941
      %v5006 = vsub.f32 0.0, %v4942
      %v5007 = vsub.f32 0.0, %v4943
      %v5008 = vsub.f32 0.0, %v4944
      %v5009 = vsub.f32 0.0, %v4945
      %v5010 = vsub.f32 0.0, %v4946
      %v5011 = vsub.f32 0.0, %v4947
      %v5012 = vsub.f32 0.0, %v4948
      %v5013 = vsub.f32 0.0, %v4949
      %v5014 = vsub.f32 0.0, %v4950
      %v5015 = vsub.f32 0.0, %v4951
      %v5016 = vsub.f32 0.0, %v4952
      %v5017 = vsub.f32 0.0, %v4953
      %v5018 = vsub.f32 0.0, %v4954
      %v5019 = vsub.f32 0.0, %v4955
      %v5020 = vsub.f32 0.0, %v4956
      %v5021 = vsub.f32 0.0, %v4957
      %v5022 = vsub.f32 0.0, %v4958
      %v5023 = vsub.f32 0.0, %v4959
      %v5024 = vsub.f32 0.0, %v4960
      %v5025 = vsub.f32 0.0, %v4961
      %v5026 = vsub.f32 0.0, %v4962
      %v5027 = vsub.f32 0.0, %v4963
      %v5028 = vsub.f32 0.0, %v4964
      %v5029 = vsub.f32 0.0, %v4965
      %v5030 = vsub.f32 0.0, %v4966
      %v5031 = vsub.f32 0.0, %v4967
      %v5032 = vsub.f32 0.0, %v4968
      %v5033 = vsub.f32 0.0, %v4969
      %v5034 = vsub.f32 0.0, %v4970
      %v5035 = vsub.f32 0.0, %v4971
      %v5036 = vsub.f32 0.0, %v4972
      %v5037 = vsel %vm4973, %v5005, %v4941
      %v5038 = vsel %vm4974, %v5006, %v4942
      %v5039 = vsel %vm4975, %v5007, %v4943
      %v5040 = vsel %vm4976, %v5008, %v4944
      %v5041 = vsel %vm4977, %v5009, %v4945
      %v5042 = vsel %vm4978, %v5010, %v4946
      %v5043 = vsel %vm4979, %v5011, %v4947
      %v5044 = vsel %vm4980, %v5012, %v4948
      %v5045 = vsel %vm4981, %v5013, %v4949
      %v5046 = vsel %vm4982, %v5014, %v4950
      %v5047 = vsel %vm4983, %v5015, %v4951
      %v5048 = vsel %vm4984, %v5016, %v4952
      %v5049 = vsel %vm4985, %v5017, %v4953
      %v5050 = vsel %vm4986, %v5018, %v4954
      %v5051 = vsel %vm4987, %v5019, %v4955
      %v5052 = vsel %vm4988, %v5020, %v4956
      %v5053 = vsel %vm4989, %v5021, %v4957
      %v5054 = vsel %vm4990, %v5022, %v4958
      %v5055 = vsel %vm4991, %v5023, %v4959
      %v5056 = vsel %vm4992, %v5024, %v4960
      %v5057 = vsel %vm4993, %v5025, %v4961
      %v5058 = vsel %vm4994, %v5026, %v4962
      %v5059 = vsel %vm4995, %v5027, %v4963
      %v5060 = vsel %vm4996, %v5028, %v4964
      %v5061 = vsel %vm4997, %v5029, %v4965
      %v5062 = vsel %vm4998, %v5030, %v4966
      %v5063 = vsel %vm4999, %v5031, %v4967
      %v5064 = vsel %vm5000, %v5032, %v4968
      %v5065 = vsel %vm5001, %v5033, %v4969
      %v5066 = vsel %vm5002, %v5034, %v4970
      %v5067 = vsel %vm5003, %v5035, %v4971
      %v5068 = vsel %vm5004, %v5036, %v4972
      %v5069 = vadd.f32 %v5037, 1.0
      %v5070 = vadd.f32 %v5038, 1.0
      %v5071 = vadd.f32 %v5039, 1.0
      %v5072 = vadd.f32 %v5040, 1.0
      %v5073 = vadd.f32 %v5041, 1.0
      %v5074 = vadd.f32 %v5042, 1.0
      %v5075 = vadd.f32 %v5043, 1.0
      %v5076 = vadd.f32 %v5044, 1.0
      %v5077 = vadd.f32 %v5045, 1.0
      %v5078 = vadd.f32 %v5046, 1.0
      %v5079 = vadd.f32 %v5047, 1.0
      %v5080 = vadd.f32 %v5048, 1.0
      %v5081 = vadd.f32 %v5049, 1.0
      %v5082 = vadd.f32 %v5050, 1.0
      %v5083 = vadd.f32 %v5051, 1.0
      %v5084 = vadd.f32 %v5052, 1.0
      %v5085 = vadd.f32 %v5053, 1.0
      %v5086 = vadd.f32 %v5054, 1.0
      %v5087 = vadd.f32 %v5055, 1.0
      %v5088 = vadd.f32 %v5056, 1.0
      %v5089 = vadd.f32 %v5057, 1.0
      %v5090 = vadd.f32 %v5058, 1.0
      %v5091 = vadd.f32 %v5059, 1.0
      %v5092 = vadd.f32 %v5060, 1.0
      %v5093 = vadd.f32 %v5061, 1.0
      %v5094 = vadd.f32 %v5062, 1.0
      %v5095 = vadd.f32 %v5063, 1.0
      %v5096 = vadd.f32 %v5064, 1.0
      %v5097 = vadd.f32 %v5065, 1.0
      %v5098 = vadd.f32 %v5066, 1.0
      %v5099 = vadd.f32 %v5067, 1.0
      %v5100 = vadd.f32 %v5068, 1.0
      %v5101 = vmul.f32 %v4269, %v5069
      %v5102 = vmul.f32 %v4270, %v5070
      %v5103 = vmul.f32 %v4271, %v5071
      %v5104 = vmul.f32 %v4272, %v5072
      %v5105 = vmul.f32 %v4273, %v5073
      %v5106 = vmul.f32 %v4274, %v5074
      %v5107 = vmul.f32 %v4275, %v5075
      %v5108 = vmul.f32 %v4276, %v5076
      %v5109 = vmul.f32 %v4277, %v5077
      %v5110 = vmul.f32 %v4278, %v5078
      %v5111 = vmul.f32 %v4279, %v5079
      %v5112 = vmul.f32 %v4280, %v5080
      %v5113 = vmul.f32 %v4281, %v5081
      %v5114 = vmul.f32 %v4282, %v5082
      %v5115 = vmul.f32 %v4283, %v5083
      %v5116 = vmul.f32 %v4284, %v5084
      %v5117 = vmul.f32 %v4285, %v5085
      %v5118 = vmul.f32 %v4286, %v5086
      %v5119 = vmul.f32 %v4287, %v5087
      %v5120 = vmul.f32 %v4288, %v5088
      %v5121 = vmul.f32 %v4289, %v5089
      %v5122 = vmul.f32 %v4290, %v5090
      %v5123 = vmul.f32 %v4291, %v5091
      %v5124 = vmul.f32 %v4292, %v5092
      %v5125 = vmul.f32 %v4293, %v5093
      %v5126 = vmul.f32 %v4294, %v5094
      %v5127 = vmul.f32 %v4295, %v5095
      %v5128 = vmul.f32 %v4296, %v5096
      %v5129 = vmul.f32 %v4297, %v5097
      %v5130 = vmul.f32 %v4298, %v5098
      %v5131 = vmul.f32 %v4299, %v5099
      %v5132 = vmul.f32 %v4300, %v5100
      %v5133 = vpack.c.bf16 %v5102, %v5101
      %v5134 = vpack.c.bf16 %v5104, %v5103
      %v5135 = vpack.c.bf16 %v5106, %v5105
      %v5136 = vpack.c.bf16 %v5108, %v5107
      %v5137 = vpack.c.bf16 %v5110, %v5109
      %v5138 = vpack.c.bf16 %v5112, %v5111
      %v5139 = vpack.c.bf16 %v5114, %v5113
      %v5140 = vpack.c.bf16 %v5116, %v5115
      %v5141 = vpack.c.bf16 %v5118, %v5117
      %v5142 = vpack.c.bf16 %v5120, %v5119
      %v5143 = vpack.c.bf16 %v5122, %v5121
      %v5144 = vpack.c.bf16 %v5124, %v5123
      %v5145 = vpack.c.bf16 %v5126, %v5125
      %v5146 = vpack.c.bf16 %v5128, %v5127
      %v5147 = vpack.c.bf16 %v5130, %v5129
      %v5148 = vpack.c.bf16 %v5132, %v5131
      %v5149 = vld [vmem:[%s2] sm:$0xf]
      %v5150 = vld [vmem:[%s2 + $0x4] sm:$0xf]
      %v5151 = vld [vmem:[%s4] sm:$0x1]
      %v5153 = vlaneseq
      %v5154 = vshrl.u32 %v5153, 7
      %v5155 = vsub.s32 0, %v5154
      %v5156 = vrot.slane %v5151, %v5155
      %v5160 = vunpack.c.l.b16 %v5149
      %v5161 = vunpack.c.l.b16 %v5150
      %v5162 = vpack.c.b16 %v5161, %v5160
      %v5165 = vsel %vm501, %v5133, 0
      %v5168 = vsel %vm501, %v5134, 0
      %v5171 = vsel %vm501, %v5135, 0
      %v5174 = vsel %vm501, %v5136, 0
      %v5177 = vsel %vm501, %v5137, 0
      %v5180 = vsel %vm501, %v5138, 0
      %v5183 = vsel %vm501, %v5139, 0
      %v5186 = vsel %vm501, %v5140, 0
      %v5189 = vsel %vm501, %v5141, 0
      %v5192 = vsel %vm501, %v5142, 0
      %v5195 = vsel %vm501, %v5143, 0
      %v5198 = vsel %vm501, %v5144, 0
      %v5201 = vsel %vm501, %v5145, 0
      %v5204 = vsel %vm501, %v5146, 0
      %v5207 = vsel %vm501, %v5147, 0
      %v5210 = vsel %vm501, %v5148, 0
      %5212 = vmatprep.subr.bf16.mxu0 0
      %5213 = vmatpush1.bf16.msra.mxu0 0
      %5214 = vmatprep.subr.bf16.mxu0 0
      %5215 = vmatpush1.bf16.msra.mxu0 0
      %5216 = vmatprep.subr.bf16.mxu0 0
      %5217 = vmatpush1.bf16.msra.mxu0 0
      %5218 = vmatprep.subr.bf16.mxu0 0
      %5219 = vmatpush1.bf16.msra.mxu0 0
      %5220 = vmatprep.subr.bf16.mxu0 0
      %5221 = vmatpush1.bf16.msra.mxu0 0
      %5222 = vmatprep.subr.bf16.mxu0 0
      %5223 = vmatpush1.bf16.msra.mxu0 0
      %5224 = vmatprep.subr.bf16.mxu0 0
      %5225 = vmatpush1.bf16.msra.mxu0 0
      %5226 = vmatprep.subr.bf16.mxu0 0
      %5227 = vmatpush1.bf16.msra.mxu0 %v5162
      %5228 = vmatprep.subr.bf16.mxu0 0
      %5229 = vmatpush2.bf16.msra.mxu0 0
      %5230 = vmatprep.subr.bf16.mxu0 0
      %5231 = vmatpush2.bf16.msra.mxu0 0
      %5232 = vmatprep.subr.bf16.mxu0 0
      %5233 = vmatpush2.bf16.msra.mxu0 0
      %5234 = vmatprep.subr.bf16.mxu0 0
      %5235 = vmatpush2.bf16.msra.mxu0 0
      %5236 = vmatprep.subr.bf16.mxu0 0
      %5237 = vmatpush2.bf16.msra.mxu0 0
      %5238 = vmatprep.subr.bf16.mxu0 0
      %5239 = vmatpush2.bf16.msra.mxu0 0
      %5240 = vmatprep.subr.bf16.mxu0 0
      %5241 = vmatpush2.bf16.msra.mxu0 0
      %5242 = vmatprep.subr.bf16.mxu0 0
      %5243 = vmatpush2.bf16.msra.mxu0 0
      %5244 = vmatprep.mubr.bf16.mxu0 0
      %5245 = vmatmul.mubr.bf16.gmra.mxu0 %v5165
      %v5246 = vpop.f32.mrf.mxu0
      %v5247 = vadd.f32 %v5156, %v5246
      %v5248 = vpop.f32.mrf.mxu0
      %v5249 = vpop.f32.mrf.mxu0
      %v5250 = vadd.f32 %v5156, %v5249
      %v5251 = vpop.f32.mrf.mxu0
      %5252 = vmatprep.mubr.bf16.mxu0 0
      %5253 = vmatmul.mubr.bf16.gmra.mxu0 %v5168
      %v5254 = vpop.f32.mrf.mxu0
      %v5255 = vadd.f32 %v5156, %v5254
      %v5256 = vpop.f32.mrf.mxu0
      %v5257 = vpop.f32.mrf.mxu0
      %v5258 = vadd.f32 %v5156, %v5257
      %v5259 = vpop.f32.mrf.mxu0
      %5260 = vmatprep.mubr.bf16.mxu0 0
      %5261 = vmatmul.mubr.bf16.gmra.mxu0 %v5171
      %v5262 = vpop.f32.mrf.mxu0
      %v5263 = vadd.f32 %v5156, %v5262
      %v5264 = vpop.f32.mrf.mxu0
      %v5265 = vpop.f32.mrf.mxu0
      %v5266 = vadd.f32 %v5156, %v5265
      %v5267 = vpop.f32.mrf.mxu0
      %5268 = vmatprep.mubr.bf16.mxu0 0
      %5269 = vmatmul.mubr.bf16.gmra.mxu0 %v5174
      %v5270 = vpop.f32.mrf.mxu0
      %v5271 = vadd.f32 %v5156, %v5270
      %v5272 = vpop.f32.mrf.mxu0
      %v5273 = vpop.f32.mrf.mxu0
      %v5274 = vadd.f32 %v5156, %v5273
      %v5275 = vpop.f32.mrf.mxu0
      %5276 = vmatprep.mubr.bf16.mxu0 0
      %5277 = vmatmul.mubr.bf16.gmra.mxu0 %v5177
      %v5278 = vpop.f32.mrf.mxu0
      %v5279 = vadd.f32 %v5156, %v5278
      %v5280 = vpop.f32.mrf.mxu0
      %v5281 = vpop.f32.mrf.mxu0
      %v5282 = vadd.f32 %v5156, %v5281
      %v5283 = vpop.f32.mrf.mxu0
      %5284 = vmatprep.mubr.bf16.mxu0 0
      %5285 = vmatmul.mubr.bf16.gmra.mxu0 %v5180
      %v5286 = vpop.f32.mrf.mxu0
      %v5287 = vadd.f32 %v5156, %v5286
      %v5288 = vpop.f32.mrf.mxu0
      %v5289 = vpop.f32.mrf.mxu0
      %v5290 = vadd.f32 %v5156, %v5289
      %v5291 = vpop.f32.mrf.mxu0
      %5292 = vmatprep.mubr.bf16.mxu0 0
      %5293 = vmatmul.mubr.bf16.gmra.mxu0 %v5183
      %v5294 = vpop.f32.mrf.mxu0
      %v5295 = vadd.f32 %v5156, %v5294
      %v5296 = vpop.f32.mrf.mxu0
      %v5297 = vpop.f32.mrf.mxu0
      %v5298 = vadd.f32 %v5156, %v5297
      %v5299 = vpop.f32.mrf.mxu0
      %5300 = vmatprep.mubr.bf16.mxu0 0
      %5301 = vmatmul.mubr.bf16.gmra.mxu0 %v5186
      %v5302 = vpop.f32.mrf.mxu0
      %v5303 = vadd.f32 %v5156, %v5302
      %v5304 = vpop.f32.mrf.mxu0
      %v5305 = vpop.f32.mrf.mxu0
      %v5306 = vadd.f32 %v5156, %v5305
      %v5307 = vpop.f32.mrf.mxu0
      %5308 = vmatprep.mubr.bf16.mxu0 0
      %5309 = vmatmul.mubr.bf16.gmra.mxu0 %v5189
      %v5310 = vpop.f32.mrf.mxu0
      %v5311 = vadd.f32 %v5156, %v5310
      %v5312 = vpop.f32.mrf.mxu0
      %v5313 = vpop.f32.mrf.mxu0
      %v5314 = vadd.f32 %v5156, %v5313
      %v5315 = vpop.f32.mrf.mxu0
      %5316 = vmatprep.mubr.bf16.mxu0 0
      %5317 = vmatmul.mubr.bf16.gmra.mxu0 %v5192
      %v5318 = vpop.f32.mrf.mxu0
      %v5319 = vadd.f32 %v5156, %v5318
      %v5320 = vpop.f32.mrf.mxu0
      %v5321 = vpop.f32.mrf.mxu0
      %v5322 = vadd.f32 %v5156, %v5321
      %v5323 = vpop.f32.mrf.mxu0
      %5324 = vmatprep.mubr.bf16.mxu0 0
      %5325 = vmatmul.mubr.bf16.gmra.mxu0 %v5195
      %v5326 = vpop.f32.mrf.mxu0
      %v5327 = vadd.f32 %v5156, %v5326
      %v5328 = vpop.f32.mrf.mxu0
      %v5329 = vpop.f32.mrf.mxu0
      %v5330 = vadd.f32 %v5156, %v5329
      %v5331 = vpop.f32.mrf.mxu0
      %5332 = vmatprep.mubr.bf16.mxu0 0
      %5333 = vmatmul.mubr.bf16.gmra.mxu0 %v5198
      %v5334 = vpop.f32.mrf.mxu0
      %v5335 = vadd.f32 %v5156, %v5334
      %v5336 = vpop.f32.mrf.mxu0
      %v5337 = vpop.f32.mrf.mxu0
      %v5338 = vadd.f32 %v5156, %v5337
      %v5339 = vpop.f32.mrf.mxu0
      %5340 = vmatprep.mubr.bf16.mxu0 0
      %5341 = vmatmul.mubr.bf16.gmra.mxu0 %v5201
      %v5342 = vpop.f32.mrf.mxu0
      %v5343 = vadd.f32 %v5156, %v5342
      %v5344 = vpop.f32.mrf.mxu0
      %v5345 = vpop.f32.mrf.mxu0
      %v5346 = vadd.f32 %v5156, %v5345
      %v5347 = vpop.f32.mrf.mxu0
      %5348 = vmatprep.mubr.bf16.mxu0 0
      %5349 = vmatmul.mubr.bf16.gmra.mxu0 %v5204
      %v5350 = vpop.f32.mrf.mxu0
      %v5351 = vadd.f32 %v5156, %v5350
      %v5352 = vpop.f32.mrf.mxu0
      %v5353 = vpop.f32.mrf.mxu0
      %v5354 = vadd.f32 %v5156, %v5353
      %v5355 = vpop.f32.mrf.mxu0
      %5356 = vmatprep.mubr.bf16.mxu0 0
      %5357 = vmatmul.mubr.bf16.gmra.mxu0 %v5207
      %v5358 = vpop.f32.mrf.mxu0
      %v5359 = vadd.f32 %v5156, %v5358
      %v5360 = vpop.f32.mrf.mxu0
      %v5361 = vpop.f32.mrf.mxu0
      %v5362 = vadd.f32 %v5156, %v5361
      %v5363 = vpop.f32.mrf.mxu0
      %5364 = vmatprep.mubr.bf16.mxu0 0
      %5365 = vmatmul.mubr.bf16.gmra.mxu0 %v5210
      %v5366 = vpop.f32.mrf.mxu0
      %v5367 = vadd.f32 %v5156, %v5366
      %v5368 = vpop.f32.mrf.mxu0
      %v5369 = vpop.f32.mrf.mxu0
      %v5370 = vadd.f32 %v5156, %v5369
      %v5371 = vpop.f32.mrf.mxu0
      %5372 = vdwg.mxu0
      %5373 = vst.msk [vmem:[%s224] sm:$0xff] %vm287, %v5247
      %5374 = vst.msk [vmem:[%s224 + $0x8] sm:$0xff] %vm287, %v5250
      %5375 = vst.msk [vmem:[%s224 + $0x10] sm:$0xff] %vm287, %v5255
      %5376 = vst.msk [vmem:[%s224 + $0x18] sm:$0xff] %vm287, %v5258
      %5377 = vst.msk [vmem:[%s224 + $0x20] sm:$0xff] %vm287, %v5263
      %5378 = vst.msk [vmem:[%s224 + $0x28] sm:$0xff] %vm287, %v5266
      %5379 = vst.msk [vmem:[%s224 + $0x30] sm:$0xff] %vm287, %v5271
      %5380 = vst.msk [vmem:[%s224 + $0x38] sm:$0xff] %vm287, %v5274
      %5381 = vst.msk [vmem:[%s224 + $0x40] sm:$0xff] %vm287, %v5279
      %5382 = vst.msk [vmem:[%s224 + $0x48] sm:$0xff] %vm287, %v5282
      %5383 = vst.msk [vmem:[%s224 + $0x50] sm:$0xff] %vm287, %v5287
      %5384 = vst.msk [vmem:[%s224 + $0x58] sm:$0xff] %vm287, %v5290
      %5385 = vst.msk [vmem:[%s224 + $0x60] sm:$0xff] %vm287, %v5295
      %5386 = vst.msk [vmem:[%s224 + $0x68] sm:$0xff] %vm287, %v5298
      %5387 = vst.msk [vmem:[%s224 + $0x70] sm:$0xff] %vm287, %v5303
      %5388 = vst.msk [vmem:[%s224 + $0x78] sm:$0xff] %vm287, %v5306
      %5389 = vst.msk [vmem:[%s224 + $0x80] sm:$0xff] %vm287, %v5311
      %5390 = vst.msk [vmem:[%s224 + $0x88] sm:$0xff] %vm287, %v5314
      %5391 = vst.msk [vmem:[%s224 + $0x90] sm:$0xff] %vm287, %v5319
      %5392 = vst.msk [vmem:[%s224 + $0x98] sm:$0xff] %vm287, %v5322
      %5393 = vst.msk [vmem:[%s224 + $0xa0] sm:$0xff] %vm287, %v5327
      %5394 = vst.msk [vmem:[%s224 + $0xa8] sm:$0xff] %vm287, %v5330
      %5395 = vst.msk [vmem:[%s224 + $0xb0] sm:$0xff] %vm287, %v5335
      %5396 = vst.msk [vmem:[%s224 + $0xb8] sm:$0xff] %vm287, %v5338
      %5397 = vst.msk [vmem:[%s224 + $0xc0] sm:$0xff] %vm287, %v5343
      %5398 = vst.msk [vmem:[%s224 + $0xc8] sm:$0xff] %vm287, %v5346
      %5399 = vst.msk [vmem:[%s224 + $0xd0] sm:$0xff] %vm287, %v5351
      %5400 = vst.msk [vmem:[%s224 + $0xd8] sm:$0xff] %vm287, %v5354
      %5401 = vst.msk [vmem:[%s224 + $0xe0] sm:$0xff] %vm287, %v5359
      %5402 = vst.msk [vmem:[%s224 + $0xe8] sm:$0xff] %vm287, %v5362
      %5403 = vst.msk [vmem:[%s224 + $0xf0] sm:$0xff] %vm287, %v5367
      %5404 = vst.msk [vmem:[%s224 + $0xf8] sm:$0xff] %vm287, %v5370
      %p5405 = scmp.lt.s32.totalorder %s16, 1
      %s5406 = scalar_select %p5405, %s16, 1
      %s5407 = smul.addr %s5406, 32
      %s5408 = smul.addr %s5407, 8
      %s5409 = scalar_lea.vmem %s5, %s5408
      // Predicated region
      $region41: #{tpu_custom_call.1} parent=39 // pred_check
        %p5410 = pneg %p144
      $region42: #{tpu_custom_call.1} parent=39 // pred_check_branch
        %5412 = sbr.rel (%p5410) target = $region44
      $region43: #{tpu_custom_call.1} parent=39 // pred_region
        _
      $region44: #{tpu_custom_call.1} parent=39 // pred_fallthru
        _
    $region40: #{tpu_custom_call.1} parent=5 // pred_fallthru
      _
    %p5413 = scmp.le.s32.totalorder 2, %s11
    // Predicated region
    $region45: #{tpu_custom_call.1} parent=5 // pred_check
      %p5414 = pneg %p5413
    $region46: #{tpu_custom_call.1} parent=5 // pred_check_branch
      %5416 = sbr.rel (%p5414) target = $region48
    $region47: #{tpu_custom_call.1} parent=5 // pred_region
      %s5417 = ssub.s32 %s11, 2
      // Predicated region
      $region49: #{tpu_custom_call.1} parent=47 // pred_check
        %p5418 = pneg %p150
      $region50: #{tpu_custom_call.1} parent=47 // pred_check_branch
        %5420 = sbr.rel (%p5418) target = $region52
      $region51: #{tpu_custom_call.1} parent=47 // pred_region
        %p5421 = scmp.lt.s32.totalorder %s17, 1
        %s5422 = scalar_select %p5421, %s17, 1
        %s5423 = smul.addr %s5422, 32
        %s5424 = smul.addr %s5423, 8
        %s5425 = scalar_lea.vmem %s5, %s5424
      $region52: #{tpu_custom_call.1} parent=47 // pred_fallthru
        _
    $region48: #{tpu_custom_call.1} parent=5 // pred_fallthru
      _
  $region6: #{tpu_custom_call.1} parent=0 // loop_footer
    %s15 = sadd.s32 1, %s11
  $region7: #{tpu_custom_call.1} parent=0 // loop_footer_branch
    %10 = sbr.rel target = $region3
  $region8: #{tpu_custom_call.1} parent=0 // loop_exit
    _

</llo_original>
